<compile_context>
chip_gen: v5e
topology: v5e:2x2
jax: 0.10.0
libtpu: 0.0.40
codegen_flags: <defaults>
</compile_context>

<pallas_src>
import functools

import jax
import jax.numpy as jnp
from jax.experimental import pallas as pl
from jax.experimental.pallas import tpu as pltpu

_LANE = 128


# ----------------------------- Pallas kernel --------------------------------
def _conv_bn_relu_kernel(x_ref, w_ref, b_ref, o_ref, *, kh, kw, stride, ho, wo):
    """One (batch element, C_out tile) grid step.

    x_ref: (1, Hp, Wp, Cin)   bf16, spatially pre-padded NHWC image plane
    w_ref: (kh*kw, Cin, tco)  bf16, BN scale already folded in
    b_ref: (1, tco)           f32 , BN bias
    o_ref: (1, Ho*Wo, tco)    f32 , lane-dense output slab
    """
    cin = w_ref.shape[1]
    tco = w_ref.shape[2]

    acc = jnp.zeros((ho * wo, tco), jnp.float32)
    for ki in range(kh):                      # fused im2col: unrolled tap loop
        for kj in range(kw):
            if stride == 1:
                tap = x_ref[0, ki:ki + ho, kj:kj + wo, :]
            else:
                tap = x_ref[0, pl.ds(ki, ho, stride=stride),
                            pl.ds(kj, wo, stride=stride), :]
            acc = acc + jnp.dot(tap.reshape(ho * wo, cin),
                                w_ref[ki * kw + kj],
                                preferred_element_type=jnp.float32)

    y = acc + b_ref[...]                      # f32 epilogue (BN bias)
    o_ref[0] = jnp.maximum(y, 0.0).astype(o_ref.dtype)


# ------------------------------- wrapper -------------------------------------
@functools.partial(jax.jit, static_argnames=("stride", "pad", "matmul_dtype"))
def basic_conv2d(x, conv_weight, bn_gamma, bn_beta, bn_mean, bn_var,
                 *, stride=1, pad=1, eps=1e-3, matmul_dtype=jnp.bfloat16):
    """Forward of BasicConv2d.  x: (N, C_in, H, W) NCHW.  Returns NCHW f32."""
    N, Cin, H, W = x.shape
    Cout, _, kh, kw = conv_weight.shape
    Ho = (H + 2 * pad - kh) // stride + 1
    Wo = (W + 2 * pad - kw) // stride + 1
    Hp, Wp = H + 2 * pad, W + 2 * pad

    # ---- fold inference-mode BatchNorm: y = conv(x) * scale + bias ----------
    scale = bn_gamma / jnp.sqrt(bn_var + eps)            # (Cout,)
    bias = bn_beta - bn_mean * scale                     # (Cout,)

    # ---- lane-dense C_out: pad to a multiple of 128 --------------------------
    Cout_pad = ((Cout + _LANE - 1) // _LANE) * _LANE
    tco = min(Cout_pad, _LANE)
    n_co = Cout_pad // tco

    # weight: (Cout, Cin, kh, kw) -> (kh*kw, Cin, Cout_pad), BN scale folded in
    w = (conv_weight * scale[:, None, None, None]).astype(jnp.float32)
    w = jnp.transpose(w, (2, 3, 1, 0)).reshape(kh * kw, Cin, Cout)
    w = jnp.pad(w, ((0, 0), (0, 0), (0, Cout_pad - Cout))).astype(matmul_dtype)
    bias_p = jnp.pad(bias, (0, Cout_pad - Cout)).reshape(1, Cout_pad)
    bias_p = bias_p.astype(jnp.float32)

    # input: NCHW -> NHWC, spatial zero-pad once, bf16 for the MXU
    xh = jnp.transpose(x, (0, 2, 3, 1))
    xh = jnp.pad(xh, ((0, 0), (pad, pad), (pad, pad), (0, 0)))
    xh = xh.astype(matmul_dtype)

    kernel = functools.partial(_conv_bn_relu_kernel, kh=kh, kw=kw,
                               stride=stride, ho=Ho, wo=Wo)

    itemsize = jnp.dtype(matmul_dtype).itemsize
    cost = pl.CostEstimate(
        flops=2 * N * Ho * Wo * kh * kw * Cin * Cout_pad,
        transcendentals=0,
        bytes_accessed=(N * Hp * Wp * Cin * itemsize * n_co
                        + kh * kw * Cin * Cout_pad * itemsize
                        + N * Ho * Wo * Cout_pad * 4),
    )

    out_flat = pl.pallas_call(
        kernel,
        out_shape=jax.ShapeDtypeStruct((N, Ho * Wo, Cout_pad), jnp.float32),
        grid_spec=pltpu.PrefetchScalarGridSpec(
            num_scalar_prefetch=0,
            grid=(N, n_co),
            in_specs=[
                pl.BlockSpec((1, Hp, Wp, Cin), lambda n, c: (n, 0, 0, 0)),
                pl.BlockSpec((kh * kw, Cin, tco), lambda n, c: (0, 0, c)),
                pl.BlockSpec((1, tco), lambda n, c: (0, c)),
            ],
            out_specs=pl.BlockSpec((1, Ho * Wo, tco), lambda n, c: (n, 0, c)),
        ),
        compiler_params=pltpu.CompilerParams(
            dimension_semantics=("parallel", "parallel"),
            vmem_limit_bytes=32 * 1024 * 1024,
        ),
        cost_estimate=cost,
    )(xh, w, bias_p)

    # Slice off padded channels; back to NCHW to match the PyTorch module.
    # TODO(synk): real pipelines should stay NHWC downstream and skip this
    # transpose (it is an extra HBM round trip outside the kernel).
    out = out_flat[:, :, :Cout].reshape(N, Ho, Wo, Cout).transpose(0, 3, 1, 2)
    return out


# ----------------------------- pure-JAX reference ----------------------------
def _reference(x, conv_weight, bn_gamma, bn_beta, bn_mean, bn_var,
               stride=1, pad=1, eps=1e-3, matmul_dtype=jnp.bfloat16):
    scale = bn_gamma / jnp.sqrt(bn_var + eps)
    bias = bn_beta - bn_mean * scale
    # Mimic the kernel's bf16 MXU inputs: bf16-rounded operands are exactly
    # representable, so the f32 reference conv computes the same products and
    # only the summation order differs from the Pallas kernel.
    wq = (conv_weight * scale[:, None, None, None]).astype(matmul_dtype)
    wq = wq.astype(jnp.float32)
    xq = x.astype(matmul_dtype).astype(jnp.float32)
    y = jax.lax.conv_general_dilated(
        xq, wq, window_strides=(stride, stride),
        padding=[(pad, pad), (pad, pad)],
        dimension_numbers=("NCHW", "OIHW", "NCHW"),
        precision=jax.lax.Precision.HIGHEST)
    return jnp.maximum(y + bias.reshape(1, -1, 1, 1), 0.0)


if __name__ == "__main__":
    key = jax.random.PRNGKey(0)
    k_x, k_w, k_g, k_b, k_m, k_v = jax.random.split(key, 6)

    # Small shapes: batch=2, C_in=4, C_out=8, H=W=16, 3x3 conv, stride 1, pad 1
    N, Cin, Cout, H, W = 2, 4, 8, 16, 16
    kh = kw = 3

    x = jax.random.normal(k_x, (N, Cin, H, W), dtype=jnp.float32)
    conv_weight = 0.1 * jax.random.normal(k_w, (Cout, Cin, kh, kw), dtype=jnp.float32)
    bn_gamma = 1.0 + 0.1 * jax.random.normal(k_g, (Cout,), dtype=jnp.float32)
    bn_beta = 0.1 * jax.random.normal(k_b, (Cout,), dtype=jnp.float32)
    bn_mean = 0.1 * jax.random.normal(k_m, (Cout,), dtype=jnp.float32)
    bn_var = jax.random.uniform(k_v, (Cout,), minval=0.5, maxval=1.5, dtype=jnp.float32)

    out = basic_conv2d(x, conv_weight, bn_gamma, bn_beta, bn_mean, bn_var,
                       stride=1, pad=1)
    out = jax.block_until_ready(out)

    ref = _reference(x, conv_weight, bn_gamma, bn_beta, bn_mean, bn_var,
                     stride=1, pad=1)
    assert out.shape == (N, Cout, H, W), out.shape
    assert jnp.allclose(out, ref, atol=1e-3, rtol=1e-3), \
        float(jnp.max(jnp.abs(out - ref)))

    print("KERNEL_OK")
</pallas_src>

<mosaic_0001>
module attributes {stable_mosaic.version = 11 : i64} {
  func.func @_conv_bn_relu_kernel(%arg0: i32, %arg1: i32, %arg2: memref<1x18x18x4xbf16, #tpu.memory_space<vmem>>, %arg3: memref<9x4x128xbf16, #tpu.memory_space<vmem>>, %arg4: memref<1x128xf32, #tpu.memory_space<vmem>>, %arg5: memref<1x256x128xf32, #tpu.memory_space<vmem>>) attributes {dimension_semantics = [#tpu.dimension_semantics<parallel>, #tpu.dimension_semantics<parallel>], iteration_bounds = array<i64: 2, 1>, scalar_prefetch = 0 : i64, scratch_operands = 0 : i64, tpu.core_type = #tpu.core_type<tc>, window_params = [{transform_indices = @transform_0, window_bounds = array<i64: 1, 18, 18, 4>}, {transform_indices = @transform_1, window_bounds = array<i64: 9, 4, 128>}, {transform_indices = @transform_2, window_bounds = array<i64: 1, 128>}, {transform_indices = @transform_3, window_bounds = array<i64: 1, 256, 128>}]} {
    %cst = arith.constant 0.000000e+00 : f32
    %0 = vector.broadcast %cst : f32 to vector<256x128xf32>
    %c0 = arith.constant 0 : index
    %c0_0 = arith.constant 0 : index
    %c0_1 = arith.constant 0 : index
    %c0_2 = arith.constant 0 : index
    %1 = vector.load %arg2[%c0, %c0_0, %c0_1, %c0_2] : memref<1x18x18x4xbf16, #tpu.memory_space<vmem>>, vector<1x16x16x4xbf16>
    %2 = vector.shape_cast %1 : vector<1x16x16x4xbf16> to vector<16x16x4xbf16>
    %3 = vector.shape_cast %2 : vector<16x16x4xbf16> to vector<256x4xbf16>
    %c0_3 = arith.constant 0 : index
    %c0_4 = arith.constant 0 : index
    %c0_5 = arith.constant 0 : index
    %4 = vector.load %arg3[%c0_3, %c0_4, %c0_5] : memref<9x4x128xbf16, #tpu.memory_space<vmem>>, vector<1x4x128xbf16>
    %5 = vector.shape_cast %4 : vector<1x4x128xbf16> to vector<4x128xbf16>
    %cst_6 = arith.constant dense<0.000000e+00> : vector<256x128xf32>
    %6 = tpu.matmul %3, %5, %cst_6 {dimension_numbers = #tpu.dot_dimension_numbers<[1], [0], [0], [1], [0, 0, 1, 1], [], []>} : vector<256x4xbf16>, vector<4x128xbf16>, vector<256x128xf32> -> vector<256x128xf32>
    %7 = arith.addf %0, %6 : vector<256x128xf32>
    %c0_7 = arith.constant 0 : index
    %c0_8 = arith.constant 0 : index
    %c1 = arith.constant 1 : index
    %c0_9 = arith.constant 0 : index
    %8 = vector.load %arg2[%c0_7, %c0_8, %c1, %c0_9] : memref<1x18x18x4xbf16, #tpu.memory_space<vmem>>, vector<1x16x16x4xbf16>
    %9 = vector.shape_cast %8 : vector<1x16x16x4xbf16> to vector<16x16x4xbf16>
    %10 = vector.shape_cast %9 : vector<16x16x4xbf16> to vector<256x4xbf16>
    %c1_10 = arith.constant 1 : index
    %c0_11 = arith.constant 0 : index
    %c0_12 = arith.constant 0 : index
    %11 = vector.load %arg3[%c1_10, %c0_11, %c0_12] : memref<9x4x128xbf16, #tpu.memory_space<vmem>>, vector<1x4x128xbf16>
    %12 = vector.shape_cast %11 : vector<1x4x128xbf16> to vector<4x128xbf16>
    %cst_13 = arith.constant dense<0.000000e+00> : vector<256x128xf32>
    %13 = tpu.matmul %10, %12, %cst_13 {dimension_numbers = #tpu.dot_dimension_numbers<[1], [0], [0], [1], [0, 0, 1, 1], [], []>} : vector<256x4xbf16>, vector<4x128xbf16>, vector<256x128xf32> -> vector<256x128xf32>
    %14 = arith.addf %7, %13 : vector<256x128xf32>
    %c0_14 = arith.constant 0 : index
    %c0_15 = arith.constant 0 : index
    %c2 = arith.constant 2 : index
    %c0_16 = arith.constant 0 : index
    %15 = vector.load %arg2[%c0_14, %c0_15, %c2, %c0_16] : memref<1x18x18x4xbf16, #tpu.memory_space<vmem>>, vector<1x16x16x4xbf16>
    %16 = vector.shape_cast %15 : vector<1x16x16x4xbf16> to vector<16x16x4xbf16>
    %17 = vector.shape_cast %16 : vector<16x16x4xbf16> to vector<256x4xbf16>
    %c2_17 = arith.constant 2 : index
    %c0_18 = arith.constant 0 : index
    %c0_19 = arith.constant 0 : index
    %18 = vector.load %arg3[%c2_17, %c0_18, %c0_19] : memref<9x4x128xbf16, #tpu.memory_space<vmem>>, vector<1x4x128xbf16>
    %19 = vector.shape_cast %18 : vector<1x4x128xbf16> to vector<4x128xbf16>
    %cst_20 = arith.constant dense<0.000000e+00> : vector<256x128xf32>
    %20 = tpu.matmul %17, %19, %cst_20 {dimension_numbers = #tpu.dot_dimension_numbers<[1], [0], [0], [1], [0, 0, 1, 1], [], []>} : vector<256x4xbf16>, vector<4x128xbf16>, vector<256x128xf32> -> vector<256x128xf32>
    %21 = arith.addf %14, %20 : vector<256x128xf32>
    %c0_21 = arith.constant 0 : index
    %c1_22 = arith.constant 1 : index
    %c0_23 = arith.constant 0 : index
    %c0_24 = arith.constant 0 : index
    %22 = vector.load %arg2[%c0_21, %c1_22, %c0_23, %c0_24] : memref<1x18x18x4xbf16, #tpu.memory_space<vmem>>, vector<1x16x16x4xbf16>
    %23 = vector.shape_cast %22 : vector<1x16x16x4xbf16> to vector<16x16x4xbf16>
    %24 = vector.shape_cast %23 : vector<16x16x4xbf16> to vector<256x4xbf16>
    %c3 = arith.constant 3 : index
    %c0_25 = arith.constant 0 : index
    %c0_26 = arith.constant 0 : index
    %25 = vector.load %arg3[%c3, %c0_25, %c0_26] : memref<9x4x128xbf16, #tpu.memory_space<vmem>>, vector<1x4x128xbf16>
    %26 = vector.shape_cast %25 : vector<1x4x128xbf16> to vector<4x128xbf16>
    %cst_27 = arith.constant dense<0.000000e+00> : vector<256x128xf32>
    %27 = tpu.matmul %24, %26, %cst_27 {dimension_numbers = #tpu.dot_dimension_numbers<[1], [0], [0], [1], [0, 0, 1, 1], [], []>} : vector<256x4xbf16>, vector<4x128xbf16>, vector<256x128xf32> -> vector<256x128xf32>
    %28 = arith.addf %21, %27 : vector<256x128xf32>
    %c0_28 = arith.constant 0 : index
    %c1_29 = arith.constant 1 : index
    %c1_30 = arith.constant 1 : index
    %c0_31 = arith.constant 0 : index
    %29 = vector.load %arg2[%c0_28, %c1_29, %c1_30, %c0_31] : memref<1x18x18x4xbf16, #tpu.memory_space<vmem>>, vector<1x16x16x4xbf16>
    %30 = vector.shape_cast %29 : vector<1x16x16x4xbf16> to vector<16x16x4xbf16>
    %31 = vector.shape_cast %30 : vector<16x16x4xbf16> to vector<256x4xbf16>
    %c4 = arith.constant 4 : index
    %c0_32 = arith.constant 0 : index
    %c0_33 = arith.constant 0 : index
    %32 = vector.load %arg3[%c4, %c0_32, %c0_33] : memref<9x4x128xbf16, #tpu.memory_space<vmem>>, vector<1x4x128xbf16>
    %33 = vector.shape_cast %32 : vector<1x4x128xbf16> to vector<4x128xbf16>
    %cst_34 = arith.constant dense<0.000000e+00> : vector<256x128xf32>
    %34 = tpu.matmul %31, %33, %cst_34 {dimension_numbers = #tpu.dot_dimension_numbers<[1], [0], [0], [1], [0, 0, 1, 1], [], []>} : vector<256x4xbf16>, vector<4x128xbf16>, vector<256x128xf32> -> vector<256x128xf32>
    %35 = arith.addf %28, %34 : vector<256x128xf32>
    %c0_35 = arith.constant 0 : index
    %c1_36 = arith.constant 1 : index
    %c2_37 = arith.constant 2 : index
    %c0_38 = arith.constant 0 : index
    %36 = vector.load %arg2[%c0_35, %c1_36, %c2_37, %c0_38] : memref<1x18x18x4xbf16, #tpu.memory_space<vmem>>, vector<1x16x16x4xbf16>
    %37 = vector.shape_cast %36 : vector<1x16x16x4xbf16> to vector<16x16x4xbf16>
    %38 = vector.shape_cast %37 : vector<16x16x4xbf16> to vector<256x4xbf16>
    %c5 = arith.constant 5 : index
    %c0_39 = arith.constant 0 : index
    %c0_40 = arith.constant 0 : index
    %39 = vector.load %arg3[%c5, %c0_39, %c0_40] : memref<9x4x128xbf16, #tpu.memory_space<vmem>>, vector<1x4x128xbf16>
    %40 = vector.shape_cast %39 : vector<1x4x128xbf16> to vector<4x128xbf16>
    %cst_41 = arith.constant dense<0.000000e+00> : vector<256x128xf32>
    %41 = tpu.matmul %38, %40, %cst_41 {dimension_numbers = #tpu.dot_dimension_numbers<[1], [0], [0], [1], [0, 0, 1, 1], [], []>} : vector<256x4xbf16>, vector<4x128xbf16>, vector<256x128xf32> -> vector<256x128xf32>
    %42 = arith.addf %35, %41 : vector<256x128xf32>
    %c0_42 = arith.constant 0 : index
    %c2_43 = arith.constant 2 : index
    %c0_44 = arith.constant 0 : index
    %c0_45 = arith.constant 0 : index
    %43 = vector.load %arg2[%c0_42, %c2_43, %c0_44, %c0_45] : memref<1x18x18x4xbf16, #tpu.memory_space<vmem>>, vector<1x16x16x4xbf16>
    %44 = vector.shape_cast %43 : vector<1x16x16x4xbf16> to vector<16x16x4xbf16>
    %45 = vector.shape_cast %44 : vector<16x16x4xbf16> to vector<256x4xbf16>
    %c6 = arith.constant 6 : index
    %c0_46 = arith.constant 0 : index
    %c0_47 = arith.constant 0 : index
    %46 = vector.load %arg3[%c6, %c0_46, %c0_47] : memref<9x4x128xbf16, #tpu.memory_space<vmem>>, vector<1x4x128xbf16>
    %47 = vector.shape_cast %46 : vector<1x4x128xbf16> to vector<4x128xbf16>
    %cst_48 = arith.constant dense<0.000000e+00> : vector<256x128xf32>
    %48 = tpu.matmul %45, %47, %cst_48 {dimension_numbers = #tpu.dot_dimension_numbers<[1], [0], [0], [1], [0, 0, 1, 1], [], []>} : vector<256x4xbf16>, vector<4x128xbf16>, vector<256x128xf32> -> vector<256x128xf32>
    %49 = arith.addf %42, %48 : vector<256x128xf32>
    %c0_49 = arith.constant 0 : index
    %c2_50 = arith.constant 2 : index
    %c1_51 = arith.constant 1 : index
    %c0_52 = arith.constant 0 : index
    %50 = vector.load %arg2[%c0_49, %c2_50, %c1_51, %c0_52] : memref<1x18x18x4xbf16, #tpu.memory_space<vmem>>, vector<1x16x16x4xbf16>
    %51 = vector.shape_cast %50 : vector<1x16x16x4xbf16> to vector<16x16x4xbf16>
    %52 = vector.shape_cast %51 : vector<16x16x4xbf16> to vector<256x4xbf16>
    %c7 = arith.constant 7 : index
    %c0_53 = arith.constant 0 : index
    %c0_54 = arith.constant 0 : index
    %53 = vector.load %arg3[%c7, %c0_53, %c0_54] : memref<9x4x128xbf16, #tpu.memory_space<vmem>>, vector<1x4x128xbf16>
    %54 = vector.shape_cast %53 : vector<1x4x128xbf16> to vector<4x128xbf16>
    %cst_55 = arith.constant dense<0.000000e+00> : vector<256x128xf32>
    %55 = tpu.matmul %52, %54, %cst_55 {dimension_numbers = #tpu.dot_dimension_numbers<[1], [0], [0], [1], [0, 0, 1, 1], [], []>} : vector<256x4xbf16>, vector<4x128xbf16>, vector<256x128xf32> -> vector<256x128xf32>
    %56 = arith.addf %49, %55 : vector<256x128xf32>
    %c0_56 = arith.constant 0 : index
    %c2_57 = arith.constant 2 : index
    %c2_58 = arith.constant 2 : index
    %c0_59 = arith.constant 0 : index
    %57 = vector.load %arg2[%c0_56, %c2_57, %c2_58, %c0_59] : memref<1x18x18x4xbf16, #tpu.memory_space<vmem>>, vector<1x16x16x4xbf16>
    %58 = vector.shape_cast %57 : vector<1x16x16x4xbf16> to vector<16x16x4xbf16>
    %59 = vector.shape_cast %58 : vector<16x16x4xbf16> to vector<256x4xbf16>
    %c8 = arith.constant 8 : index
    %c0_60 = arith.constant 0 : index
    %c0_61 = arith.constant 0 : index
    %60 = vector.load %arg3[%c8, %c0_60, %c0_61] : memref<9x4x128xbf16, #tpu.memory_space<vmem>>, vector<1x4x128xbf16>
    %61 = vector.shape_cast %60 : vector<1x4x128xbf16> to vector<4x128xbf16>
    %cst_62 = arith.constant dense<0.000000e+00> : vector<256x128xf32>
    %62 = tpu.matmul %59, %61, %cst_62 {dimension_numbers = #tpu.dot_dimension_numbers<[1], [0], [0], [1], [0, 0, 1, 1], [], []>} : vector<256x4xbf16>, vector<4x128xbf16>, vector<256x128xf32> -> vector<256x128xf32>
    %63 = arith.addf %56, %62 : vector<256x128xf32>
    %c0_63 = arith.constant 0 : index
    %c0_64 = arith.constant 0 : index
    %64 = vector.load %arg4[%c0_63, %c0_64] : memref<1x128xf32, #tpu.memory_space<vmem>>, vector<1x128xf32>
    %65 = vector.broadcast %64 : vector<1x128xf32> to vector<256x128xf32>
    %66 = arith.addf %63, %65 : vector<256x128xf32>
    %cst_65 = arith.constant 0.000000e+00 : f32
    %67 = vector.broadcast %cst_65 : f32 to vector<256x128xf32>
    %68 = arith.maximumf %66, %67 : vector<256x128xf32>
    %c0_66 = arith.constant 0 : index
    %c0_67 = arith.constant 0 : index
    %c0_68 = arith.constant 0 : index
    %69 = vector.load %arg5[%c0_66, %c0_67, %c0_68] : memref<1x256x128xf32, #tpu.memory_space<vmem>>, vector<1x256x128xf32>
    %70 = vector.shape_cast %69 : vector<1x256x128xf32> to vector<256x128xf32>
    %71 = vector.shape_cast %68 : vector<256x128xf32> to vector<1x256x128xf32>
    tpu.vector_store %arg5[%c0_66, %c0_67, %c0_68], %71 {strides = array<i32>} : memref<1x256x128xf32, #tpu.memory_space<vmem>>, vector<1x256x128xf32>,
    return
  }
  func.func @transform_0(%arg0: i32, %arg1: i32) -> (i32, i32, i32, i32) {
    %c0_i32 = arith.constant 0 : i32
    %c0_i32_0 = arith.constant 0 : i32
    %c0_i32_1 = arith.constant 0 : i32
    %c0_i32_2 = arith.constant 0 : i32
    return %arg0, %c0_i32, %c0_i32_0, %c0_i32_1 : i32, i32, i32, i32
  }
  func.func @transform_1(%arg0: i32, %arg1: i32) -> (i32, i32, i32) {
    %c0_i32 = arith.constant 0 : i32
    %c0_i32_0 = arith.constant 0 : i32
    %c0_i32_1 = arith.constant 0 : i32
    return %c0_i32, %c0_i32_0, %arg1 : i32, i32, i32
  }
  func.func @transform_2(%arg0: i32, %arg1: i32) -> (i32, i32) {
    %c0_i32 = arith.constant 0 : i32
    %c0_i32_0 = arith.constant 0 : i32
    return %c0_i32, %arg1 : i32, i32
  }
  func.func @transform_3(%arg0: i32, %arg1: i32) -> (i32, i32, i32) {
    %c0_i32 = arith.constant 0 : i32
    %c0_i32_0 = arith.constant 0 : i32
    return %arg0, %c0_i32, %arg1 : i32, i32, i32
  }
}

</mosaic_0001>

<llo_original>
// kernel: basic_conv2d.1
$region0: #{basic_conv2d.1}
  #allocation0 [shape = 'u32[]', space=smem, size = 0x4, offset = 0x4, fixed_abs, tag = 'smem constant byte address 0x4 - core index']
  #allocation1 [shape = 'u32[72,128]{1,0:T(1,128)}', space=vmem, size = 0x9000, scoped, tag = 'internal scratch']
  %s0 = inlined_call_operand.vmem [shape: bf16[2,18,18,4], index: 0, kind: input, shape index: {}]
  %s1 = inlined_call_operand.vmem [shape: bf16[9,4,128], index: 1, kind: input, shape index: {}]
  %s2 = inlined_call_operand.vmem [shape: f32[1,128], index: 2, kind: input, shape index: {}]
  %s3 = inlined_call_operand.vmem [shape: f32[2,256,128], index: 3, kind: output, shape index: {}]
  %s4 = sld [smem:[#allocation0]]
  $region45: #{basic_conv2d.1} parent=0
    _
  %s6 = ssub.s32 1, %s4
  %s7 = scalar_select 0, %s6, %s4
  loop: start=0, step=1, limit=4
  $region2: #{basic_conv2d.1} parent=0 // loop_pre_header
    _
  $region3: #{basic_conv2d.1} parent=0 // loop_header
    %s9 = sphi 0, %s13
    %p10 = scmp.ge.s32.totalorder %s9, 4
    %s16 = sphi 0, %s28
    %s17 = sphi 0, %s24
    %s18 = sphi 0, %s16
    %s19 = sphi 0, %s17
    %s20 = sphi 0, %s18
    %s21 = sphi 0, %s19
    %s31 = sphi 0, %s33
    %s34 = sphi 0, %s31
    %s35 = sphi 0, %s34
    %s51 = sphi 0, %s35
    %s57 = sphi 0, %s59
    %s60 = sphi 0, %s57
    %s61 = sphi 0, %s60
    %s77 = sphi 0, %s61
    %s83 = sphi 0, %s85
    %s86 = sphi 0, %s83
    %s87 = sphi 0, %s86
    %s103 = sphi 0, %s87
    %s111 = sphi 0, %s113
    %s114 = sphi 0, %s111
    %s115 = sphi 0, %s114
    %s131 = sphi 0, %s115
  $region4: #{basic_conv2d.1} parent=0 // loop_header_branch
    %12 = sbr.rel (%p10) target = $region8
  $region5: #{basic_conv2d.1} parent=0 // loop_body
    %s14 = ssub.s32 %s9, 1
    %s15 = ssub.s32 %s9, 2
    %s22 = sadd.s32 1, %s17
    %p23 = scmp.ge.s32.totalorder %s22, 1
    %s24 = scalar_select %p23, 0, %s22
    %s25 = sadd.s32 1, %s16
    %s26 = scalar_select %p23, %s25, %s16
    %p27 = scmp.ge.s32.totalorder %s26, 2
    %s28 = scalar_select %p27, 0, %s26
    %s29 = ssub.s32 %s16, %s28
    %p30 = scmp.eq.s32.totalorder %s29, 0
    %s32 = sadd.s32 %s31, 1
    %s33 = scalar_select %p30, %s31, %s32
    %p36 = pneg %p30
    %p37 = scmp.eq.s32.totalorder %s9, 1
    %p38 = por %p36, %p37
    %p39 = scmp.ne.s32.totalorder %s31, %s34
    %p40 = scmp.eq.s32.totalorder %s9, 0
    %p41 = por %p39, %p40
    %p42 = scmp.ne.s32.totalorder %s31, %s34
    %p43 = scmp.eq.s32.totalorder %s14, 1
    %p44 = por %p42, %p43
    %p45 = scmp.ne.s32.totalorder %s34, %s35
    %p46 = scmp.eq.s32.totalorder %s14, 0
    %p47 = por %p45, %p46
    %p48 = scmp.ne.s32.totalorder %s34, %s35
    %p49 = scmp.eq.s32.totalorder %s15, 1
    %p50 = por %p48, %p49
    %p52 = scmp.ne.s32.totalorder %s35, %s51
    %p53 = scmp.eq.s32.totalorder %s15, 0
    %p54 = por %p52, %p53
    %s55 = ssub.s32 %s17, %s24
    %p56 = scmp.eq.s32.totalorder %s55, 0
    %s58 = sadd.s32 %s57, 1
    %s59 = scalar_select %p56, %s57, %s58
    %p62 = pneg %p56
    %p63 = scmp.eq.s32.totalorder %s9, 1
    %p64 = por %p62, %p63
    %p65 = scmp.ne.s32.totalorder %s57, %s60
    %p66 = scmp.eq.s32.totalorder %s9, 0
    %p67 = por %p65, %p66
    %p68 = scmp.ne.s32.totalorder %s57, %s60
    %p69 = scmp.eq.s32.totalorder %s14, 1
    %p70 = por %p68, %p69
    %p71 = scmp.ne.s32.totalorder %s60, %s61
    %p72 = scmp.eq.s32.totalorder %s14, 0
    %p73 = por %p71, %p72
    %p74 = scmp.ne.s32.totalorder %s60, %s61
    %p75 = scmp.eq.s32.totalorder %s15, 1
    %p76 = por %p74, %p75
    %p78 = scmp.ne.s32.totalorder %s61, %s77
    %p79 = scmp.eq.s32.totalorder %s15, 0
    %p80 = por %p78, %p79
    %s81 = ssub.s32 %s17, %s24
    %p82 = scmp.eq.s32.totalorder %s81, 0
    %s84 = sadd.s32 %s83, 1
    %s85 = scalar_select %p82, %s83, %s84
    %p88 = pneg %p82
    %p89 = scmp.eq.s32.totalorder %s9, 1
    %p90 = por %p88, %p89
    %p91 = scmp.ne.s32.totalorder %s83, %s86
    %p92 = scmp.eq.s32.totalorder %s9, 0
    %p93 = por %p91, %p92
    %p94 = scmp.ne.s32.totalorder %s83, %s86
    %p95 = scmp.eq.s32.totalorder %s14, 1
    %p96 = por %p94, %p95
    %p97 = scmp.ne.s32.totalorder %s86, %s87
    %p98 = scmp.eq.s32.totalorder %s14, 0
    %p99 = por %p97, %p98
    %p100 = scmp.ne.s32.totalorder %s86, %s87
    %p101 = scmp.eq.s32.totalorder %s15, 1
    %p102 = por %p100, %p101
    %p104 = scmp.ne.s32.totalorder %s87, %s103
    %p105 = scmp.eq.s32.totalorder %s15, 0
    %p106 = por %p104, %p105
    %s107 = ssub.s32 %s16, %s28
    %s108 = ssub.s32 %s17, %s24
    %s109 = sor.u32 %s107, %s108
    %p110 = scmp.eq.s32.totalorder %s109, 0
    %s112 = sadd.s32 %s111, 1
    %s113 = scalar_select %p110, %s111, %s112
    %p116 = pneg %p110
    %p117 = scmp.eq.s32.totalorder %s9, 1
    %p118 = por %p116, %p117
    %p119 = scmp.ne.s32.totalorder %s111, %s114
    %p120 = scmp.eq.s32.totalorder %s9, 0
    %p121 = por %p119, %p120
    %p122 = scmp.ne.s32.totalorder %s111, %s114
    %p123 = scmp.eq.s32.totalorder %s14, 1
    %p124 = por %p122, %p123
    %p125 = scmp.ne.s32.totalorder %s114, %s115
    %p126 = scmp.eq.s32.totalorder %s14, 0
    %p127 = por %p125, %p126
    %p128 = scmp.ne.s32.totalorder %s114, %s115
    %p129 = scmp.eq.s32.totalorder %s15, 1
    %p130 = por %p128, %p129
    %p132 = scmp.ne.s32.totalorder %s115, %s131
    %p133 = scmp.eq.s32.totalorder %s15, 0
    %p134 = por %p132, %p133
    %p135 = scmp.le.s32.totalorder 1, %s9
    %p136 = scmp.lt.s32.totalorder %s9, 3
    %p137 = pnand %p135, %p136
    %p138 = pneg %p137
    // Predicated region
    $region9: #{basic_conv2d.1} parent=5 // pred_check
      _
    $region10: #{basic_conv2d.1} parent=5 // pred_check_branch
      %140 = sbr.rel (%p137) target = $region12
    $region11: #{basic_conv2d.1} parent=5 // pred_region
      %s141 = ssub.s32 %s9, 1
      // Predicated region
      $region13: #{basic_conv2d.1} parent=11 // pred_check
        %p142 = pneg %p73
      $region14: #{basic_conv2d.1} parent=11 // pred_check_branch
        %144 = sbr.rel (%p142) target = $region16
      $region15: #{basic_conv2d.1} parent=11 // pred_region
        %p145 = scmp.lt.s32.totalorder %s19, 0
        %s146 = scalar_select %p145, %s19, 0
        %s147 = smul.addr %s146, 2
        %s148 = scalar_lea.vmem %s1, %s147
      $region16: #{basic_conv2d.1} parent=11 // pred_fallthru
        _
      // Predicated region
      $region17: #{basic_conv2d.1} parent=11 // pred_check
        %p149 = pneg %p99
      $region18: #{basic_conv2d.1} parent=11 // pred_check_branch
        %151 = sbr.rel (%p149) target = $region20
      $region19: #{basic_conv2d.1} parent=11 // pred_region
        %p152 = scmp.lt.s32.totalorder %s19, 0
        %s153 = scalar_select %p152, %s19, 0
        %s154 = scalar_lea.vmem %s2, %s153
      $region20: #{basic_conv2d.1} parent=11 // pred_fallthru
        _
    $region12: #{basic_conv2d.1} parent=5 // pred_fallthru
      _
    %p155 = scmp.lt.s32.totalorder %s9, 2
    // Predicated region
    $region21: #{basic_conv2d.1} parent=5 // pred_check
      %p156 = pneg %p155
    $region22: #{basic_conv2d.1} parent=5 // pred_check_branch
      %158 = sbr.rel (%p156) target = $region24
    $region23: #{basic_conv2d.1} parent=5 // pred_region
      // Predicated region
      $region25: #{basic_conv2d.1} parent=23 // pred_check
        %p159 = pneg %p41
      $region26: #{basic_conv2d.1} parent=23 // pred_check_branch
        %161 = sbr.rel (%p159) target = $region28
      $region27: #{basic_conv2d.1} parent=23 // pred_region
        %p162 = scmp.lt.s32.totalorder %s16, 1
        %s163 = scalar_select %p162, %s16, 1
        %s164 = smul.addr %s163, 54
        %s165 = smul.addr %s164, 4
        %s166 = scalar_lea.vmem %s0, %s165
      $region28: #{basic_conv2d.1} parent=23 // pred_fallthru
        _
    $region24: #{basic_conv2d.1} parent=5 // pred_fallthru
      _
    %p167 = scmp.le.s32.totalorder 1, %s9
    %p168 = scmp.lt.s32.totalorder %s9, 3
    %p169 = pnand %p167, %p168
    %p170 = pneg %p169
    // Predicated region
    $region29: #{basic_conv2d.1} parent=5 // pred_check
      _
    $region30: #{basic_conv2d.1} parent=5 // pred_check_branch
      %172 = sbr.rel (%p169) target = $region32
    $region31: #{basic_conv2d.1} parent=5 // pred_region
      %s173 = ssub.s32 %s9, 1
      %p174 = scmp.lt.s32.totalorder %s18, 1
      %s175 = scalar_select %p174, %s18, 1
      %s176 = smul.addr %s175, 54
      %s177 = smul.addr %s176, 4
      %s178 = scalar_lea.vmem %s0, %s177
      %p179 = pneg %p47
      %p180 = pneg %p44
      %p181 = scmp.lt.s32.totalorder %s19, 0
      %s182 = scalar_select %p181, %s19, 0
      %s183 = smul.addr %s182, 2
      %s184 = scalar_lea.vmem %s1, %s183
      %p185 = pneg %p73
      %p186 = pneg %p70
      %p187 = scmp.lt.s32.totalorder %s19, 0
      %s188 = scalar_select %p187, %s19, 0
      %s189 = scalar_lea.vmem %s2, %s188
      %p190 = pneg %p99
      %p191 = pneg %p96
      %p192 = pneg %p127
      %p193 = pneg %p124
      %p194 = scmp.lt.s32.totalorder %s18, 1
      %s195 = scalar_select %p194, %s18, 1
      %p196 = scmp.lt.s32.totalorder %s19, 0
      %s197 = scalar_select %p196, %s19, 0
      %s198 = smul.addr %s195, 32
      %s199 = sadd.s32 %s197, %s198
      %s200 = smul.addr %s199, 8
      %s201 = scalar_lea.vmem %s3, %s200
      %p202 = scmp.lt.s32.totalorder %s18, 1
      %s203 = scalar_select %p202, %s18, 1
      %s204 = smul.addr %s203, 54
      %s205 = smul.addr %s204, 4
      %s206 = scalar_lea.vmem %s0, %s205
      %p207 = scmp.lt.s32.totalorder %s19, 0
      %s208 = scalar_select %p207, %s19, 0
      %s209 = smul.addr %s208, 2
      %s210 = scalar_lea.vmem %s1, %s209
      %p211 = scmp.lt.s32.totalorder %s19, 0
      %s212 = scalar_select %p211, %s19, 0
      %s213 = scalar_lea.vmem %s2, %s212
      %p214 = scmp.lt.s32.totalorder %s18, 1
      %s215 = scalar_select %p214, %s18, 1
      %p216 = scmp.lt.s32.totalorder %s19, 0
      %s217 = scalar_select %p216, %s19, 0
      %s218 = smul.addr %s215, 32
      %s219 = sadd.s32 %s217, %s218
      %s220 = smul.addr %s219, 8
      %s221 = scalar_lea.vmem %s3, %s220
      %v223 = vld [vmem:[%s206] sm:$0xf]
      %v224 = vld [vmem:[%s206 + $0x4] sm:$0xf]
      %v225 = vld [vmem:[%s206 + $0xc] sm:$0xf]
      %v226 = vld [vmem:[%s206 + $0x10] sm:$0xf]
      %v227 = vld [vmem:[%s206 + $0x18] sm:$0xf]
      %v228 = vld [vmem:[%s206 + $0x1c] sm:$0xf]
      %v229 = vld [vmem:[%s206 + $0x24] sm:$0xf]
      %v230 = vld [vmem:[%s206 + $0x28] sm:$0xf]
      %v231 = vld [vmem:[%s206 + $0x30] sm:$0xf]
      %v232 = vld [vmem:[%s206 + $0x34] sm:$0xf]
      %v233 = vld [vmem:[%s206 + $0x3c] sm:$0xf]
      %v234 = vld [vmem:[%s206 + $0x40] sm:$0xf]
      %v235 = vld [vmem:[%s206 + $0x48] sm:$0xf]
      %v236 = vld [vmem:[%s206 + $0x4c] sm:$0xf]
      %v237 = vld [vmem:[%s206 + $0x54] sm:$0xf]
      %v238 = vld [vmem:[%s206 + $0x58] sm:$0xf]
      %v239 = vld [vmem:[%s206 + $0x60] sm:$0xf]
      %v240 = vld [vmem:[%s206 + $0x64] sm:$0xf]
      %v241 = vld [vmem:[%s206 + $0x6c] sm:$0xf]
      %v242 = vld [vmem:[%s206 + $0x70] sm:$0xf]
      %v243 = vld [vmem:[%s206 + $0x78] sm:$0xf]
      %v244 = vld [vmem:[%s206 + $0x7c] sm:$0xf]
      %v245 = vld [vmem:[%s206 + $0x84] sm:$0xf]
      %v246 = vld [vmem:[%s206 + $0x88] sm:$0xf]
      %v247 = vld [vmem:[%s206 + $0x90] sm:$0xf]
      %v248 = vld [vmem:[%s206 + $0x94] sm:$0xf]
      %v249 = vld [vmem:[%s206 + $0x9c] sm:$0xf]
      %v250 = vld [vmem:[%s206 + $0xa0] sm:$0xf]
      %v251 = vld [vmem:[%s206 + $0xa8] sm:$0xf]
      %v252 = vld [vmem:[%s206 + $0xac] sm:$0xf]
      %v253 = vld [vmem:[%s206 + $0xb4] sm:$0xf]
      %v254 = vld [vmem:[%s206 + $0xb8] sm:$0xf]
      %v255 = vld [vmem:[%s210] sm:$0x3]
      %v256 = vld [vmem:[%s206 + $0x8] sm:$0x1]
      %v257 = vld [vmem:[%s206 + $0x14] sm:$0x1]
      %v258 = vld [vmem:[%s206 + $0x20] sm:$0x1]
      %v259 = vld [vmem:[%s206 + $0x2c] sm:$0x1]
      %v260 = vld [vmem:[%s206 + $0x38] sm:$0x1]
      %v261 = vld [vmem:[%s206 + $0x44] sm:$0x1]
      %v262 = vld [vmem:[%s206 + $0x50] sm:$0x1]
      %v263 = vld [vmem:[%s206 + $0x5c] sm:$0x1]
      %v264 = vld [vmem:[%s206 + $0x68] sm:$0x1]
      %v265 = vld [vmem:[%s206 + $0x74] sm:$0x1]
      %v266 = vld [vmem:[%s206 + $0x80] sm:$0x1]
      %v267 = vld [vmem:[%s206 + $0x8c] sm:$0x1]
      %v268 = vld [vmem:[%s206 + $0x98] sm:$0x1]
      %v269 = vld [vmem:[%s206 + $0xa4] sm:$0x1]
      %v270 = vld [vmem:[%s206 + $0xb0] sm:$0x1]
      %v271 = vld [vmem:[%s206 + $0xbc] sm:$0x1]
      %vm272 = vsmask.f32 3328
      %vm273 = vsmask.f32 7440
      %vm274 = vmor %vm272, %vm273
      %v276 = vshrl.u32 %v223, 16
      %v278 = vrot.slane %v276, 4
      %v279 = vshll.u32 %v223, 16
      %v281 = vrot.slane %v279, 5
      %v282 = vor.u32 %v278, %v281
      %v283 = vrot.slane %v282, 4
      %v285 = vshll.u32 %v224, 16
      %v287 = vrot.slane %v285, 5
      %v288 = vsel %vm274, %v283, %v287
      %v289 = vshrl.u32 %v224, 16
      %v291 = vrot.slane %v289, 4
      %v292 = vor.u32 %v291, %v287
      %v293 = vrot.slane %v292, 4
      %v295 = vshll.u32 %v256, 16
      %v297 = vrot.slane %v295, 5
      %v298 = vsel %vm274, %v293, %v297
      %v300 = vshrl.u32 %v225, 16
      %v302 = vrot.slane %v300, 4
      %v303 = vshll.u32 %v225, 16
      %v305 = vrot.slane %v303, 5
      %v306 = vor.u32 %v302, %v305
      %v307 = vrot.slane %v306, 4
      %v309 = vshll.u32 %v226, 16
      %v311 = vrot.slane %v309, 5
      %v312 = vsel %vm274, %v307, %v311
      %v313 = vshrl.u32 %v226, 16
      %v315 = vrot.slane %v313, 4
      %v316 = vor.u32 %v315, %v311
      %v317 = vrot.slane %v316, 4
      %v319 = vshll.u32 %v257, 16
      %v321 = vrot.slane %v319, 5
      %v322 = vsel %vm274, %v317, %v321
      %v324 = vshrl.u32 %v227, 16
      %v326 = vrot.slane %v324, 4
      %v327 = vshll.u32 %v227, 16
      %v329 = vrot.slane %v327, 5
      %v330 = vor.u32 %v326, %v329
      %v331 = vrot.slane %v330, 4
      %v333 = vshll.u32 %v228, 16
      %v335 = vrot.slane %v333, 5
      %v336 = vsel %vm274, %v331, %v335
      %v337 = vshrl.u32 %v228, 16
      %v339 = vrot.slane %v337, 4
      %v340 = vor.u32 %v339, %v335
      %v341 = vrot.slane %v340, 4
      %v343 = vshll.u32 %v258, 16
      %v345 = vrot.slane %v343, 5
      %v346 = vsel %vm274, %v341, %v345
      %v348 = vshrl.u32 %v229, 16
      %v350 = vrot.slane %v348, 4
      %v351 = vshll.u32 %v229, 16
      %v353 = vrot.slane %v351, 5
      %v354 = vor.u32 %v350, %v353
      %v355 = vrot.slane %v354, 4
      %v357 = vshll.u32 %v230, 16
      %v359 = vrot.slane %v357, 5
      %v360 = vsel %vm274, %v355, %v359
      %v361 = vshrl.u32 %v230, 16
      %v363 = vrot.slane %v361, 4
      %v364 = vor.u32 %v363, %v359
      %v365 = vrot.slane %v364, 4
      %v367 = vshll.u32 %v259, 16
      %v369 = vrot.slane %v367, 5
      %v370 = vsel %vm274, %v365, %v369
      %v372 = vshrl.u32 %v231, 16
      %v374 = vrot.slane %v372, 4
      %v375 = vshll.u32 %v231, 16
      %v377 = vrot.slane %v375, 5
      %v378 = vor.u32 %v374, %v377
      %v379 = vrot.slane %v378, 4
      %v381 = vshll.u32 %v232, 16
      %v383 = vrot.slane %v381, 5
      %v384 = vsel %vm274, %v379, %v383
      %v385 = vshrl.u32 %v232, 16
      %v387 = vrot.slane %v385, 4
      %v388 = vor.u32 %v387, %v383
      %v389 = vrot.slane %v388, 4
      %v391 = vshll.u32 %v260, 16
      %v393 = vrot.slane %v391, 5
      %v394 = vsel %vm274, %v389, %v393
      %v396 = vshrl.u32 %v233, 16
      %v398 = vrot.slane %v396, 4
      %v399 = vshll.u32 %v233, 16
      %v401 = vrot.slane %v399, 5
      %v402 = vor.u32 %v398, %v401
      %v403 = vrot.slane %v402, 4
      %v405 = vshll.u32 %v234, 16
      %v407 = vrot.slane %v405, 5
      %v408 = vsel %vm274, %v403, %v407
      %v409 = vshrl.u32 %v234, 16
      %v411 = vrot.slane %v409, 4
      %v412 = vor.u32 %v411, %v407
      %v413 = vrot.slane %v412, 4
      %v415 = vshll.u32 %v261, 16
      %v417 = vrot.slane %v415, 5
      %v418 = vsel %vm274, %v413, %v417
      %v420 = vshrl.u32 %v235, 16
      %v422 = vrot.slane %v420, 4
      %v423 = vshll.u32 %v235, 16
      %v425 = vrot.slane %v423, 5
      %v426 = vor.u32 %v422, %v425
      %v427 = vrot.slane %v426, 4
      %v429 = vshll.u32 %v236, 16
      %v431 = vrot.slane %v429, 5
      %v432 = vsel %vm274, %v427, %v431
      %v433 = vshrl.u32 %v236, 16
      %v435 = vrot.slane %v433, 4
      %v436 = vor.u32 %v435, %v431
      %v437 = vrot.slane %v436, 4
      %v439 = vshll.u32 %v262, 16
      %v441 = vrot.slane %v439, 5
      %v442 = vsel %vm274, %v437, %v441
      %v444 = vshrl.u32 %v237, 16
      %v446 = vrot.slane %v444, 4
      %v447 = vshll.u32 %v237, 16
      %v449 = vrot.slane %v447, 5
      %v450 = vor.u32 %v446, %v449
      %v451 = vrot.slane %v450, 4
      %v453 = vshll.u32 %v238, 16
      %v455 = vrot.slane %v453, 5
      %v456 = vsel %vm274, %v451, %v455
      %v457 = vshrl.u32 %v238, 16
      %v459 = vrot.slane %v457, 4
      %v460 = vor.u32 %v459, %v455
      %v461 = vrot.slane %v460, 4
      %v463 = vshll.u32 %v263, 16
      %v465 = vrot.slane %v463, 5
      %v466 = vsel %vm274, %v461, %v465
      %v468 = vshrl.u32 %v239, 16
      %v470 = vrot.slane %v468, 4
      %v471 = vshll.u32 %v239, 16
      %v473 = vrot.slane %v471, 5
      %v474 = vor.u32 %v470, %v473
      %v475 = vrot.slane %v474, 4
      %v477 = vshll.u32 %v240, 16
      %v479 = vrot.slane %v477, 5
      %v480 = vsel %vm274, %v475, %v479
      %v481 = vshrl.u32 %v240, 16
      %v483 = vrot.slane %v481, 4
      %v484 = vor.u32 %v483, %v479
      %v485 = vrot.slane %v484, 4
      %v487 = vshll.u32 %v264, 16
      %v489 = vrot.slane %v487, 5
      %v490 = vsel %vm274, %v485, %v489
      %v492 = vshrl.u32 %v241, 16
      %v494 = vrot.slane %v492, 4
      %v495 = vshll.u32 %v241, 16
      %v497 = vrot.slane %v495, 5
      %v498 = vor.u32 %v494, %v497
      %v499 = vrot.slane %v498, 4
      %v501 = vshll.u32 %v242, 16
      %v503 = vrot.slane %v501, 5
      %v504 = vsel %vm274, %v499, %v503
      %v505 = vshrl.u32 %v242, 16
      %v507 = vrot.slane %v505, 4
      %v508 = vor.u32 %v507, %v503
      %v509 = vrot.slane %v508, 4
      %v511 = vshll.u32 %v265, 16
      %v513 = vrot.slane %v511, 5
      %v514 = vsel %vm274, %v509, %v513
      %v516 = vshrl.u32 %v243, 16
      %v518 = vrot.slane %v516, 4
      %v519 = vshll.u32 %v243, 16
      %v521 = vrot.slane %v519, 5
      %v522 = vor.u32 %v518, %v521
      %v523 = vrot.slane %v522, 4
      %v525 = vshll.u32 %v244, 16
      %v527 = vrot.slane %v525, 5
      %v528 = vsel %vm274, %v523, %v527
      %v529 = vshrl.u32 %v244, 16
      %v531 = vrot.slane %v529, 4
      %v532 = vor.u32 %v531, %v527
      %v533 = vrot.slane %v532, 4
      %v535 = vshll.u32 %v266, 16
      %v537 = vrot.slane %v535, 5
      %v538 = vsel %vm274, %v533, %v537
      %v540 = vshrl.u32 %v245, 16
      %v542 = vrot.slane %v540, 4
      %v543 = vshll.u32 %v245, 16
      %v545 = vrot.slane %v543, 5
      %v546 = vor.u32 %v542, %v545
      %v547 = vrot.slane %v546, 4
      %v549 = vshll.u32 %v246, 16
      %v551 = vrot.slane %v549, 5
      %v552 = vsel %vm274, %v547, %v551
      %v553 = vshrl.u32 %v246, 16
      %v555 = vrot.slane %v553, 4
      %v556 = vor.u32 %v555, %v551
      %v557 = vrot.slane %v556, 4
      %v559 = vshll.u32 %v267, 16
      %v561 = vrot.slane %v559, 5
      %v562 = vsel %vm274, %v557, %v561
      %v564 = vshrl.u32 %v247, 16
      %v566 = vrot.slane %v564, 4
      %v567 = vshll.u32 %v247, 16
      %v569 = vrot.slane %v567, 5
      %v570 = vor.u32 %v566, %v569
      %v571 = vrot.slane %v570, 4
      %v573 = vshll.u32 %v248, 16
      %v575 = vrot.slane %v573, 5
      %v576 = vsel %vm274, %v571, %v575
      %v577 = vshrl.u32 %v248, 16
      %v579 = vrot.slane %v577, 4
      %v580 = vor.u32 %v579, %v575
      %v581 = vrot.slane %v580, 4
      %v583 = vshll.u32 %v268, 16
      %v585 = vrot.slane %v583, 5
      %v586 = vsel %vm274, %v581, %v585
      %v588 = vshrl.u32 %v249, 16
      %v590 = vrot.slane %v588, 4
      %v591 = vshll.u32 %v249, 16
      %v593 = vrot.slane %v591, 5
      %v594 = vor.u32 %v590, %v593
      %v595 = vrot.slane %v594, 4
      %v597 = vshll.u32 %v250, 16
      %v599 = vrot.slane %v597, 5
      %v600 = vsel %vm274, %v595, %v599
      %v601 = vshrl.u32 %v250, 16
      %v603 = vrot.slane %v601, 4
      %v604 = vor.u32 %v603, %v599
      %v605 = vrot.slane %v604, 4
      %v607 = vshll.u32 %v269, 16
      %v609 = vrot.slane %v607, 5
      %v610 = vsel %vm274, %v605, %v609
      %v612 = vshrl.u32 %v251, 16
      %v614 = vrot.slane %v612, 4
      %v615 = vshll.u32 %v251, 16
      %v617 = vrot.slane %v615, 5
      %v618 = vor.u32 %v614, %v617
      %v619 = vrot.slane %v618, 4
      %v621 = vshll.u32 %v252, 16
      %v623 = vrot.slane %v621, 5
      %v624 = vsel %vm274, %v619, %v623
      %v625 = vshrl.u32 %v252, 16
      %v627 = vrot.slane %v625, 4
      %v628 = vor.u32 %v627, %v623
      %v629 = vrot.slane %v628, 4
      %v631 = vshll.u32 %v270, 16
      %v633 = vrot.slane %v631, 5
      %v634 = vsel %vm274, %v629, %v633
      %v636 = vshrl.u32 %v253, 16
      %v638 = vrot.slane %v636, 4
      %v639 = vshll.u32 %v253, 16
      %v641 = vrot.slane %v639, 5
      %v642 = vor.u32 %v638, %v641
      %v643 = vrot.slane %v642, 4
      %v645 = vshll.u32 %v254, 16
      %v647 = vrot.slane %v645, 5
      %v648 = vsel %vm274, %v643, %v647
      %v649 = vshrl.u32 %v254, 16
      %v651 = vrot.slane %v649, 4
      %v652 = vor.u32 %v651, %v647
      %v653 = vrot.slane %v652, 4
      %v655 = vshll.u32 %v271, 16
      %v657 = vrot.slane %v655, 5
      %v658 = vsel %vm274, %v653, %v657
      %s659 = scalar_lea.vmem %s210, 2
      %v660 = vld [vmem:[%s659] sm:$0x3]
      %v661 = vunpack.c.l.b16 %v288
      %v662 = vunpack.c.l.b16 %v298
      %v663 = vunpack.c.l.b16 %v312
      %v664 = vunpack.c.l.b16 %v322
      %v665 = vunpack.c.l.b16 %v336
      %v666 = vunpack.c.l.b16 %v346
      %v667 = vunpack.c.l.b16 %v360
      %v668 = vunpack.c.l.b16 %v370
      %v669 = vunpack.c.l.b16 %v384
      %v670 = vunpack.c.l.b16 %v394
      %v671 = vunpack.c.l.b16 %v408
      %v672 = vunpack.c.l.b16 %v418
      %v673 = vunpack.c.l.b16 %v432
      %v674 = vunpack.c.l.b16 %v442
      %v675 = vunpack.c.l.b16 %v456
      %v676 = vunpack.c.l.b16 %v466
      %v677 = vunpack.c.l.b16 %v480
      %v678 = vunpack.c.l.b16 %v490
      %v679 = vunpack.c.l.b16 %v504
      %v680 = vunpack.c.l.b16 %v514
      %v681 = vunpack.c.l.b16 %v528
      %v682 = vunpack.c.l.b16 %v538
      %v683 = vunpack.c.l.b16 %v552
      %v684 = vunpack.c.l.b16 %v562
      %v685 = vunpack.c.l.b16 %v576
      %v686 = vunpack.c.l.b16 %v586
      %v687 = vunpack.c.l.b16 %v600
      %v688 = vunpack.c.l.b16 %v610
      %v689 = vunpack.c.l.b16 %v624
      %v690 = vunpack.c.l.b16 %v634
      %v691 = vunpack.c.l.b16 %v648
      %v692 = vunpack.c.l.b16 %v658
      %v693 = vpack.c.b16 %v662, %v661
      %v694 = vpack.c.b16 %v664, %v663
      %v695 = vpack.c.b16 %v666, %v665
      %v696 = vpack.c.b16 %v668, %v667
      %v697 = vpack.c.b16 %v670, %v669
      %v698 = vpack.c.b16 %v672, %v671
      %v699 = vpack.c.b16 %v674, %v673
      %v700 = vpack.c.b16 %v676, %v675
      %v701 = vpack.c.b16 %v678, %v677
      %v702 = vpack.c.b16 %v680, %v679
      %v703 = vpack.c.b16 %v682, %v681
      %v704 = vpack.c.b16 %v684, %v683
      %v705 = vpack.c.b16 %v686, %v685
      %v706 = vpack.c.b16 %v688, %v687
      %v707 = vpack.c.b16 %v690, %v689
      %v708 = vpack.c.b16 %v692, %v691
      %vm709 = vcmask 31744
      %v711 = vsel %vm709, %v693, 0
      %v714 = vsel %vm709, %v694, 0
      %v717 = vsel %vm709, %v695, 0
      %v720 = vsel %vm709, %v696, 0
      %v723 = vsel %vm709, %v697, 0
      %v726 = vsel %vm709, %v698, 0
      %v729 = vsel %vm709, %v699, 0
      %v732 = vsel %vm709, %v700, 0
      %v735 = vsel %vm709, %v701, 0
      %v738 = vsel %vm709, %v702, 0
      %v741 = vsel %vm709, %v703, 0
      %v744 = vsel %vm709, %v704, 0
      %v747 = vsel %vm709, %v705, 0
      %v750 = vsel %vm709, %v706, 0
      %v753 = vsel %vm709, %v707, 0
      %v756 = vsel %vm709, %v708, 0
      %vm758 = vcmask 1041408
      %v760 = vsel %vm758, %v660, 0
      %762 = vmatpush.bf16.msra.mxu0 0
      %763 = vmatpush.bf16.msra.mxu0 0
      %764 = vmatpush.bf16.msra.mxu0 0
      %765 = vmatpush.bf16.msra.mxu0 0
      %766 = vmatpush.bf16.msra.mxu0 0
      %767 = vmatpush.bf16.msra.mxu0 0
      %768 = vmatpush.bf16.msra.mxu0 0
      %769 = vmatpush.bf16.msra.mxu0 %v760
      %770 = vmatmul.bf16.gmra.mxu0 %v711
      %v771 = vpop.f32.mrf.mxu0
      %v772 = vadd.f32 0.0, %v771
      %v773 = vpop.f32.mrf.mxu0
      %v774 = vadd.f32 0.0, %v773
      %775 = vmatmul.bf16.gmra.mxu0 %v714
      %v776 = vpop.f32.mrf.mxu0
      %v777 = vadd.f32 0.0, %v776
      %v778 = vpop.f32.mrf.mxu0
      %v779 = vadd.f32 0.0, %v778
      %780 = vmatmul.bf16.gmra.mxu0 %v717
      %v781 = vpop.f32.mrf.mxu0
      %v782 = vadd.f32 0.0, %v781
      %v783 = vpop.f32.mrf.mxu0
      %v784 = vadd.f32 0.0, %v783
      %785 = vmatmul.bf16.gmra.mxu0 %v720
      %v786 = vpop.f32.mrf.mxu0
      %v787 = vadd.f32 0.0, %v786
      %v788 = vpop.f32.mrf.mxu0
      %v789 = vadd.f32 0.0, %v788
      %790 = vmatmul.bf16.gmra.mxu0 %v723
      %v791 = vpop.f32.mrf.mxu0
      %v792 = vadd.f32 0.0, %v791
      %v793 = vpop.f32.mrf.mxu0
      %v794 = vadd.f32 0.0, %v793
      %795 = vmatmul.bf16.gmra.mxu0 %v726
      %v796 = vpop.f32.mrf.mxu0
      %v797 = vadd.f32 0.0, %v796
      %v798 = vpop.f32.mrf.mxu0
      %v799 = vadd.f32 0.0, %v798
      %800 = vmatmul.bf16.gmra.mxu0 %v729
      %v801 = vpop.f32.mrf.mxu0
      %v802 = vadd.f32 0.0, %v801
      %v803 = vpop.f32.mrf.mxu0
      %v804 = vadd.f32 0.0, %v803
      %805 = vmatmul.bf16.gmra.mxu0 %v732
      %v806 = vpop.f32.mrf.mxu0
      %v807 = vadd.f32 0.0, %v806
      %v808 = vpop.f32.mrf.mxu0
      %v809 = vadd.f32 0.0, %v808
      %810 = vmatmul.bf16.gmra.mxu0 %v735
      %v811 = vpop.f32.mrf.mxu0
      %v812 = vadd.f32 0.0, %v811
      %v813 = vpop.f32.mrf.mxu0
      %v814 = vadd.f32 0.0, %v813
      %815 = vmatmul.bf16.gmra.mxu0 %v738
      %v816 = vpop.f32.mrf.mxu0
      %v817 = vadd.f32 0.0, %v816
      %v818 = vpop.f32.mrf.mxu0
      %v819 = vadd.f32 0.0, %v818
      %820 = vmatmul.bf16.gmra.mxu0 %v741
      %v821 = vpop.f32.mrf.mxu0
      %v822 = vadd.f32 0.0, %v821
      %v823 = vpop.f32.mrf.mxu0
      %v824 = vadd.f32 0.0, %v823
      %825 = vmatmul.bf16.gmra.mxu0 %v744
      %v826 = vpop.f32.mrf.mxu0
      %v827 = vadd.f32 0.0, %v826
      %v828 = vpop.f32.mrf.mxu0
      %v829 = vadd.f32 0.0, %v828
      %830 = vmatmul.bf16.gmra.mxu0 %v747
      %v831 = vpop.f32.mrf.mxu0
      %v832 = vadd.f32 0.0, %v831
      %v833 = vpop.f32.mrf.mxu0
      %v834 = vadd.f32 0.0, %v833
      %835 = vmatmul.bf16.gmra.mxu0 %v750
      %v836 = vpop.f32.mrf.mxu0
      %v837 = vadd.f32 0.0, %v836
      %v838 = vpop.f32.mrf.mxu0
      %v839 = vadd.f32 0.0, %v838
      %840 = vmatmul.bf16.gmra.mxu0 %v753
      %v841 = vpop.f32.mrf.mxu0
      %v842 = vadd.f32 0.0, %v841
      %v843 = vpop.f32.mrf.mxu0
      %v844 = vadd.f32 0.0, %v843
      %845 = vmatmul.bf16.gmra.mxu0 %v756
      %v846 = vpop.f32.mrf.mxu0
      %v847 = vadd.f32 0.0, %v846
      %v848 = vpop.f32.mrf.mxu0
      %v849 = vadd.f32 0.0, %v848
      %850 = vdwg.mxu0
      %v883 = vunpack.c.l.b16 %v223
      %v884 = vunpack.c.l.b16 %v224
      %v885 = vunpack.c.l.b16 %v225
      %v886 = vunpack.c.l.b16 %v226
      %v887 = vunpack.c.l.b16 %v227
      %v888 = vunpack.c.l.b16 %v228
      %v889 = vunpack.c.l.b16 %v229
      %v890 = vunpack.c.l.b16 %v230
      %v891 = vunpack.c.l.b16 %v231
      %v892 = vunpack.c.l.b16 %v232
      %v893 = vunpack.c.l.b16 %v233
      %v894 = vunpack.c.l.b16 %v234
      %v895 = vunpack.c.l.b16 %v235
      %v896 = vunpack.c.l.b16 %v236
      %v897 = vunpack.c.l.b16 %v237
      %v898 = vunpack.c.l.b16 %v238
      %v899 = vunpack.c.l.b16 %v239
      %v900 = vunpack.c.l.b16 %v240
      %v901 = vunpack.c.l.b16 %v241
      %v902 = vunpack.c.l.b16 %v242
      %v903 = vunpack.c.l.b16 %v243
      %v904 = vunpack.c.l.b16 %v244
      %v905 = vunpack.c.l.b16 %v245
      %v906 = vunpack.c.l.b16 %v246
      %v907 = vunpack.c.l.b16 %v247
      %v908 = vunpack.c.l.b16 %v248
      %v909 = vunpack.c.l.b16 %v249
      %v910 = vunpack.c.l.b16 %v250
      %v911 = vunpack.c.l.b16 %v251
      %v912 = vunpack.c.l.b16 %v252
      %v913 = vunpack.c.l.b16 %v253
      %v914 = vunpack.c.l.b16 %v254
      %v915 = vpack.c.b16 %v884, %v883
      %v916 = vpack.c.b16 %v886, %v885
      %v917 = vpack.c.b16 %v888, %v887
      %v918 = vpack.c.b16 %v890, %v889
      %v919 = vpack.c.b16 %v892, %v891
      %v920 = vpack.c.b16 %v894, %v893
      %v921 = vpack.c.b16 %v896, %v895
      %v922 = vpack.c.b16 %v898, %v897
      %v923 = vpack.c.b16 %v900, %v899
      %v924 = vpack.c.b16 %v902, %v901
      %v925 = vpack.c.b16 %v904, %v903
      %v926 = vpack.c.b16 %v906, %v905
      %v927 = vpack.c.b16 %v908, %v907
      %v928 = vpack.c.b16 %v910, %v909
      %v929 = vpack.c.b16 %v912, %v911
      %v930 = vpack.c.b16 %v914, %v913
      %v932 = vsel %vm709, %v915, 0
      %v935 = vsel %vm709, %v916, 0
      %v938 = vsel %vm709, %v917, 0
      %v941 = vsel %vm709, %v918, 0
      %v944 = vsel %vm709, %v919, 0
      %v947 = vsel %vm709, %v920, 0
      %v950 = vsel %vm709, %v921, 0
      %v953 = vsel %vm709, %v922, 0
      %v956 = vsel %vm709, %v923, 0
      %v959 = vsel %vm709, %v924, 0
      %v962 = vsel %vm709, %v925, 0
      %v965 = vsel %vm709, %v926, 0
      %v968 = vsel %vm709, %v927, 0
      %v971 = vsel %vm709, %v928, 0
      %v974 = vsel %vm709, %v929, 0
      %v977 = vsel %vm709, %v930, 0
      %v980 = vsel %vm758, %v255, 0
      %982 = vmatpush.bf16.msra.mxu0 0
      %983 = vmatpush.bf16.msra.mxu0 0
      %984 = vmatpush.bf16.msra.mxu0 0
      %985 = vmatpush.bf16.msra.mxu0 0
      %986 = vmatpush.bf16.msra.mxu0 0
      %987 = vmatpush.bf16.msra.mxu0 0
      %988 = vmatpush.bf16.msra.mxu0 0
      %989 = vmatpush.bf16.msra.mxu0 %v980
      %990 = vmatmul.bf16.gmra.mxu0 %v932
      %v991 = vpop.f32.mrf.mxu0
      %v992 = vadd.f32 %v772, %v991
      %v993 = vpop.f32.mrf.mxu0
      %v994 = vadd.f32 %v774, %v993
      %995 = vmatmul.bf16.gmra.mxu0 %v935
      %v996 = vpop.f32.mrf.mxu0
      %v997 = vadd.f32 %v777, %v996
      %v998 = vpop.f32.mrf.mxu0
      %v999 = vadd.f32 %v779, %v998
      %1000 = vmatmul.bf16.gmra.mxu0 %v938
      %v1001 = vpop.f32.mrf.mxu0
      %v1002 = vadd.f32 %v782, %v1001
      %v1003 = vpop.f32.mrf.mxu0
      %v1004 = vadd.f32 %v784, %v1003
      %1005 = vmatmul.bf16.gmra.mxu0 %v941
      %v1006 = vpop.f32.mrf.mxu0
      %v1007 = vadd.f32 %v787, %v1006
      %v1008 = vpop.f32.mrf.mxu0
      %v1009 = vadd.f32 %v789, %v1008
      %1010 = vmatmul.bf16.gmra.mxu0 %v944
      %v1011 = vpop.f32.mrf.mxu0
      %v1012 = vadd.f32 %v792, %v1011
      %v1013 = vpop.f32.mrf.mxu0
      %v1014 = vadd.f32 %v794, %v1013
      %1015 = vmatmul.bf16.gmra.mxu0 %v947
      %v1016 = vpop.f32.mrf.mxu0
      %v1017 = vadd.f32 %v797, %v1016
      %v1018 = vpop.f32.mrf.mxu0
      %v1019 = vadd.f32 %v799, %v1018
      %1020 = vmatmul.bf16.gmra.mxu0 %v950
      %v1021 = vpop.f32.mrf.mxu0
      %v1022 = vadd.f32 %v802, %v1021
      %v1023 = vpop.f32.mrf.mxu0
      %v1024 = vadd.f32 %v804, %v1023
      %1025 = vmatmul.bf16.gmra.mxu0 %v953
      %v1026 = vpop.f32.mrf.mxu0
      %v1027 = vadd.f32 %v807, %v1026
      %v1028 = vpop.f32.mrf.mxu0
      %v1029 = vadd.f32 %v809, %v1028
      %1030 = vmatmul.bf16.gmra.mxu0 %v956
      %v1031 = vpop.f32.mrf.mxu0
      %v1032 = vadd.f32 %v812, %v1031
      %v1033 = vpop.f32.mrf.mxu0
      %v1034 = vadd.f32 %v814, %v1033
      %1035 = vmatmul.bf16.gmra.mxu0 %v959
      %v1036 = vpop.f32.mrf.mxu0
      %v1037 = vadd.f32 %v817, %v1036
      %v1038 = vpop.f32.mrf.mxu0
      %v1039 = vadd.f32 %v819, %v1038
      %1040 = vmatmul.bf16.gmra.mxu0 %v962
      %v1041 = vpop.f32.mrf.mxu0
      %v1042 = vadd.f32 %v822, %v1041
      %v1043 = vpop.f32.mrf.mxu0
      %v1044 = vadd.f32 %v824, %v1043
      %1045 = vmatmul.bf16.gmra.mxu0 %v965
      %v1046 = vpop.f32.mrf.mxu0
      %v1047 = vadd.f32 %v827, %v1046
      %v1048 = vpop.f32.mrf.mxu0
      %v1049 = vadd.f32 %v829, %v1048
      %1050 = vmatmul.bf16.gmra.mxu0 %v968
      %v1051 = vpop.f32.mrf.mxu0
      %v1052 = vadd.f32 %v832, %v1051
      %v1053 = vpop.f32.mrf.mxu0
      %v1054 = vadd.f32 %v834, %v1053
      %1055 = vmatmul.bf16.gmra.mxu0 %v971
      %v1056 = vpop.f32.mrf.mxu0
      %v1057 = vadd.f32 %v837, %v1056
      %v1058 = vpop.f32.mrf.mxu0
      %v1059 = vadd.f32 %v839, %v1058
      %1060 = vmatmul.bf16.gmra.mxu0 %v974
      %v1061 = vpop.f32.mrf.mxu0
      %v1062 = vadd.f32 %v842, %v1061
      %v1063 = vpop.f32.mrf.mxu0
      %v1064 = vadd.f32 %v844, %v1063
      %1065 = vmatmul.bf16.gmra.mxu0 %v977
      %v1066 = vpop.f32.mrf.mxu0
      %v1067 = vadd.f32 %v847, %v1066
      %v1068 = vpop.f32.mrf.mxu0
      %v1069 = vadd.f32 %v849, %v1068
      %1070 = vdwg.mxu0
      %v1071 = vld [vmem:[%s206] sm:$0xe]
      %v1072 = vld [vmem:[%s206 + $0xc] sm:$0xe]
      %v1073 = vld [vmem:[%s206 + $0x18] sm:$0xe]
      %v1074 = vld [vmem:[%s206 + $0x24] sm:$0xe]
      %v1075 = vld [vmem:[%s206 + $0x30] sm:$0xe]
      %v1076 = vld [vmem:[%s206 + $0x3c] sm:$0xe]
      %v1077 = vld [vmem:[%s206 + $0x48] sm:$0xe]
      %v1078 = vld [vmem:[%s206 + $0x54] sm:$0xe]
      %v1079 = vld [vmem:[%s206 + $0x60] sm:$0xe]
      %v1080 = vld [vmem:[%s206 + $0x6c] sm:$0xe]
      %v1081 = vld [vmem:[%s206 + $0x78] sm:$0xe]
      %v1082 = vld [vmem:[%s206 + $0x84] sm:$0xe]
      %v1083 = vld [vmem:[%s206 + $0x90] sm:$0xe]
      %v1084 = vld [vmem:[%s206 + $0x9c] sm:$0xe]
      %v1085 = vld [vmem:[%s206 + $0xa8] sm:$0xe]
      %v1086 = vld [vmem:[%s206 + $0xb4] sm:$0xe]
      %vm1119 = vcmask 1042432
      %vm1120 = vcmask 1046532
      %vm1121 = vmor %vm1119, %vm1120
      %v1122 = vrot.slane %v1071, 5
      %v1123 = vrot.slane %v1122, 4
      %v1124 = vrot.slane %v224, 5
      %v1125 = vsel %vm1121, %v1123, %v1124
      %v1126 = vrot.slane %v1124, 4
      %v1127 = vrot.slane %v256, 5
      %v1128 = vsel %vm1121, %v1126, %v1127
      %v1129 = vrot.slane %v1072, 5
      %v1130 = vrot.slane %v1129, 4
      %v1131 = vrot.slane %v226, 5
      %v1132 = vsel %vm1121, %v1130, %v1131
      %v1133 = vrot.slane %v1131, 4
      %v1134 = vrot.slane %v257, 5
      %v1135 = vsel %vm1121, %v1133, %v1134
      %v1136 = vrot.slane %v1073, 5
      %v1137 = vrot.slane %v1136, 4
      %v1138 = vrot.slane %v228, 5
      %v1139 = vsel %vm1121, %v1137, %v1138
      %v1140 = vrot.slane %v1138, 4
      %v1141 = vrot.slane %v258, 5
      %v1142 = vsel %vm1121, %v1140, %v1141
      %v1143 = vrot.slane %v1074, 5
      %v1144 = vrot.slane %v1143, 4
      %v1145 = vrot.slane %v230, 5
      %v1146 = vsel %vm1121, %v1144, %v1145
      %v1147 = vrot.slane %v1145, 4
      %v1148 = vrot.slane %v259, 5
      %v1149 = vsel %vm1121, %v1147, %v1148
      %v1150 = vrot.slane %v1075, 5
      %v1151 = vrot.slane %v1150, 4
      %v1152 = vrot.slane %v232, 5
      %v1153 = vsel %vm1121, %v1151, %v1152
      %v1154 = vrot.slane %v1152, 4
      %v1155 = vrot.slane %v260, 5
      %v1156 = vsel %vm1121, %v1154, %v1155
      %v1157 = vrot.slane %v1076, 5
      %v1158 = vrot.slane %v1157, 4
      %v1159 = vrot.slane %v234, 5
      %v1160 = vsel %vm1121, %v1158, %v1159
      %v1161 = vrot.slane %v1159, 4
      %v1162 = vrot.slane %v261, 5
      %v1163 = vsel %vm1121, %v1161, %v1162
      %v1164 = vrot.slane %v1077, 5
      %v1165 = vrot.slane %v1164, 4
      %v1166 = vrot.slane %v236, 5
      %v1167 = vsel %vm1121, %v1165, %v1166
      %v1168 = vrot.slane %v1166, 4
      %v1169 = vrot.slane %v262, 5
      %v1170 = vsel %vm1121, %v1168, %v1169
      %v1171 = vrot.slane %v1078, 5
      %v1172 = vrot.slane %v1171, 4
      %v1173 = vrot.slane %v238, 5
      %v1174 = vsel %vm1121, %v1172, %v1173
      %v1175 = vrot.slane %v1173, 4
      %v1176 = vrot.slane %v263, 5
      %v1177 = vsel %vm1121, %v1175, %v1176
      %v1178 = vrot.slane %v1079, 5
      %v1179 = vrot.slane %v1178, 4
      %v1180 = vrot.slane %v240, 5
      %v1181 = vsel %vm1121, %v1179, %v1180
      %v1182 = vrot.slane %v1180, 4
      %v1183 = vrot.slane %v264, 5
      %v1184 = vsel %vm1121, %v1182, %v1183
      %v1185 = vrot.slane %v1080, 5
      %v1186 = vrot.slane %v1185, 4
      %v1187 = vrot.slane %v242, 5
      %v1188 = vsel %vm1121, %v1186, %v1187
      %v1189 = vrot.slane %v1187, 4
      %v1190 = vrot.slane %v265, 5
      %v1191 = vsel %vm1121, %v1189, %v1190
      %v1192 = vrot.slane %v1081, 5
      %v1193 = vrot.slane %v1192, 4
      %v1194 = vrot.slane %v244, 5
      %v1195 = vsel %vm1121, %v1193, %v1194
      %v1196 = vrot.slane %v1194, 4
      %v1197 = vrot.slane %v266, 5
      %v1198 = vsel %vm1121, %v1196, %v1197
      %v1199 = vrot.slane %v1082, 5
      %v1200 = vrot.slane %v1199, 4
      %v1201 = vrot.slane %v246, 5
      %v1202 = vsel %vm1121, %v1200, %v1201
      %v1203 = vrot.slane %v1201, 4
      %v1204 = vrot.slane %v267, 5
      %v1205 = vsel %vm1121, %v1203, %v1204
      %v1206 = vrot.slane %v1083, 5
      %v1207 = vrot.slane %v1206, 4
      %v1208 = vrot.slane %v248, 5
      %v1209 = vsel %vm1121, %v1207, %v1208
      %v1210 = vrot.slane %v1208, 4
      %v1211 = vrot.slane %v268, 5
      %v1212 = vsel %vm1121, %v1210, %v1211
      %v1213 = vrot.slane %v1084, 5
      %v1214 = vrot.slane %v1213, 4
      %v1215 = vrot.slane %v250, 5
      %v1216 = vsel %vm1121, %v1214, %v1215
      %v1217 = vrot.slane %v1215, 4
      %v1218 = vrot.slane %v269, 5
      %v1219 = vsel %vm1121, %v1217, %v1218
      %v1220 = vrot.slane %v1085, 5
      %v1221 = vrot.slane %v1220, 4
      %v1222 = vrot.slane %v252, 5
      %v1223 = vsel %vm1121, %v1221, %v1222
      %v1224 = vrot.slane %v1222, 4
      %v1225 = vrot.slane %v270, 5
      %v1226 = vsel %vm1121, %v1224, %v1225
      %v1227 = vrot.slane %v1086, 5
      %v1228 = vrot.slane %v1227, 4
      %v1229 = vrot.slane %v254, 5
      %v1230 = vsel %vm1121, %v1228, %v1229
      %v1231 = vrot.slane %v1229, 4
      %v1232 = vrot.slane %v271, 5
      %v1233 = vsel %vm1121, %v1231, %v1232
      %s1234 = scalar_lea.vmem %s210, 4
      %v1235 = vld [vmem:[%s1234] sm:$0x3]
      %v1236 = vunpack.c.l.b16 %v1125
      %v1237 = vunpack.c.l.b16 %v1128
      %v1238 = vunpack.c.l.b16 %v1132
      %v1239 = vunpack.c.l.b16 %v1135
      %v1240 = vunpack.c.l.b16 %v1139
      %v1241 = vunpack.c.l.b16 %v1142
      %v1242 = vunpack.c.l.b16 %v1146
      %v1243 = vunpack.c.l.b16 %v1149
      %v1244 = vunpack.c.l.b16 %v1153
      %v1245 = vunpack.c.l.b16 %v1156
      %v1246 = vunpack.c.l.b16 %v1160
      %v1247 = vunpack.c.l.b16 %v1163
      %v1248 = vunpack.c.l.b16 %v1167
      %v1249 = vunpack.c.l.b16 %v1170
      %v1250 = vunpack.c.l.b16 %v1174
      %v1251 = vunpack.c.l.b16 %v1177
      %v1252 = vunpack.c.l.b16 %v1181
      %v1253 = vunpack.c.l.b16 %v1184
      %v1254 = vunpack.c.l.b16 %v1188
      %v1255 = vunpack.c.l.b16 %v1191
      %v1256 = vunpack.c.l.b16 %v1195
      %v1257 = vunpack.c.l.b16 %v1198
      %v1258 = vunpack.c.l.b16 %v1202
      %v1259 = vunpack.c.l.b16 %v1205
      %v1260 = vunpack.c.l.b16 %v1209
      %v1261 = vunpack.c.l.b16 %v1212
      %v1262 = vunpack.c.l.b16 %v1216
      %v1263 = vunpack.c.l.b16 %v1219
      %v1264 = vunpack.c.l.b16 %v1223
      %v1265 = vunpack.c.l.b16 %v1226
      %v1266 = vunpack.c.l.b16 %v1230
      %v1267 = vunpack.c.l.b16 %v1233
      %v1268 = vpack.c.b16 %v1237, %v1236
      %v1269 = vpack.c.b16 %v1239, %v1238
      %v1270 = vpack.c.b16 %v1241, %v1240
      %v1271 = vpack.c.b16 %v1243, %v1242
      %v1272 = vpack.c.b16 %v1245, %v1244
      %v1273 = vpack.c.b16 %v1247, %v1246
      %v1274 = vpack.c.b16 %v1249, %v1248
      %v1275 = vpack.c.b16 %v1251, %v1250
      %v1276 = vpack.c.b16 %v1253, %v1252
      %v1277 = vpack.c.b16 %v1255, %v1254
      %v1278 = vpack.c.b16 %v1257, %v1256
      %v1279 = vpack.c.b16 %v1259, %v1258
      %v1280 = vpack.c.b16 %v1261, %v1260
      %v1281 = vpack.c.b16 %v1263, %v1262
      %v1282 = vpack.c.b16 %v1265, %v1264
      %v1283 = vpack.c.b16 %v1267, %v1266
      %v1285 = vsel %vm709, %v1268, 0
      %v1288 = vsel %vm709, %v1269, 0
      %v1291 = vsel %vm709, %v1270, 0
      %v1294 = vsel %vm709, %v1271, 0
      %v1297 = vsel %vm709, %v1272, 0
      %v1300 = vsel %vm709, %v1273, 0
      %v1303 = vsel %vm709, %v1274, 0
      %v1306 = vsel %vm709, %v1275, 0
      %v1309 = vsel %vm709, %v1276, 0
      %v1312 = vsel %vm709, %v1277, 0
      %v1315 = vsel %vm709, %v1278, 0
      %v1318 = vsel %vm709, %v1279, 0
      %v1321 = vsel %vm709, %v1280, 0
      %v1324 = vsel %vm709, %v1281, 0
      %v1327 = vsel %vm709, %v1282, 0
      %v1330 = vsel %vm709, %v1283, 0
      %v1333 = vsel %vm758, %v1235, 0
      %1335 = vmatpush.bf16.msra.mxu0 0
      %1336 = vmatpush.bf16.msra.mxu0 0
      %1337 = vmatpush.bf16.msra.mxu0 0
      %1338 = vmatpush.bf16.msra.mxu0 0
      %1339 = vmatpush.bf16.msra.mxu0 0
      %1340 = vmatpush.bf16.msra.mxu0 0
      %1341 = vmatpush.bf16.msra.mxu0 0
      %1342 = vmatpush.bf16.msra.mxu0 %v1333
      %1343 = vmatmul.bf16.gmra.mxu0 %v1285
      %v1344 = vpop.f32.mrf.mxu0
      %v1345 = vadd.f32 0.0, %v1344
      %v1346 = vpop.f32.mrf.mxu0
      %v1347 = vadd.f32 0.0, %v1346
      %1348 = vmatmul.bf16.gmra.mxu0 %v1288
      %v1349 = vpop.f32.mrf.mxu0
      %v1350 = vadd.f32 0.0, %v1349
      %v1351 = vpop.f32.mrf.mxu0
      %v1352 = vadd.f32 0.0, %v1351
      %1353 = vmatmul.bf16.gmra.mxu0 %v1291
      %v1354 = vpop.f32.mrf.mxu0
      %v1355 = vadd.f32 0.0, %v1354
      %v1356 = vpop.f32.mrf.mxu0
      %v1357 = vadd.f32 0.0, %v1356
      %1358 = vmatmul.bf16.gmra.mxu0 %v1294
      %v1359 = vpop.f32.mrf.mxu0
      %v1360 = vadd.f32 0.0, %v1359
      %v1361 = vpop.f32.mrf.mxu0
      %v1362 = vadd.f32 0.0, %v1361
      %1363 = vmatmul.bf16.gmra.mxu0 %v1297
      %v1364 = vpop.f32.mrf.mxu0
      %v1365 = vadd.f32 0.0, %v1364
      %v1366 = vpop.f32.mrf.mxu0
      %v1367 = vadd.f32 0.0, %v1366
      %1368 = vmatmul.bf16.gmra.mxu0 %v1300
      %v1369 = vpop.f32.mrf.mxu0
      %v1370 = vadd.f32 0.0, %v1369
      %v1371 = vpop.f32.mrf.mxu0
      %v1372 = vadd.f32 0.0, %v1371
      %1373 = vmatmul.bf16.gmra.mxu0 %v1303
      %v1374 = vpop.f32.mrf.mxu0
      %v1375 = vadd.f32 0.0, %v1374
      %v1376 = vpop.f32.mrf.mxu0
      %v1377 = vadd.f32 0.0, %v1376
      %1378 = vmatmul.bf16.gmra.mxu0 %v1306
      %v1379 = vpop.f32.mrf.mxu0
      %v1380 = vadd.f32 0.0, %v1379
      %v1381 = vpop.f32.mrf.mxu0
      %v1382 = vadd.f32 0.0, %v1381
      %1383 = vmatmul.bf16.gmra.mxu0 %v1309
      %v1384 = vpop.f32.mrf.mxu0
      %v1385 = vadd.f32 0.0, %v1384
      %v1386 = vpop.f32.mrf.mxu0
      %v1387 = vadd.f32 0.0, %v1386
      %1388 = vmatmul.bf16.gmra.mxu0 %v1312
      %v1389 = vpop.f32.mrf.mxu0
      %v1390 = vadd.f32 0.0, %v1389
      %v1391 = vpop.f32.mrf.mxu0
      %v1392 = vadd.f32 0.0, %v1391
      %1393 = vmatmul.bf16.gmra.mxu0 %v1315
      %v1394 = vpop.f32.mrf.mxu0
      %v1395 = vadd.f32 0.0, %v1394
      %v1396 = vpop.f32.mrf.mxu0
      %v1397 = vadd.f32 0.0, %v1396
      %1398 = vmatmul.bf16.gmra.mxu0 %v1318
      %v1399 = vpop.f32.mrf.mxu0
      %v1400 = vadd.f32 0.0, %v1399
      %v1401 = vpop.f32.mrf.mxu0
      %v1402 = vadd.f32 0.0, %v1401
      %1403 = vmatmul.bf16.gmra.mxu0 %v1321
      %v1404 = vpop.f32.mrf.mxu0
      %v1405 = vadd.f32 0.0, %v1404
      %v1406 = vpop.f32.mrf.mxu0
      %v1407 = vadd.f32 0.0, %v1406
      %1408 = vmatmul.bf16.gmra.mxu0 %v1324
      %v1409 = vpop.f32.mrf.mxu0
      %v1410 = vadd.f32 0.0, %v1409
      %v1411 = vpop.f32.mrf.mxu0
      %v1412 = vadd.f32 0.0, %v1411
      %1413 = vmatmul.bf16.gmra.mxu0 %v1327
      %v1414 = vpop.f32.mrf.mxu0
      %v1415 = vadd.f32 0.0, %v1414
      %v1416 = vpop.f32.mrf.mxu0
      %v1417 = vadd.f32 0.0, %v1416
      %1418 = vmatmul.bf16.gmra.mxu0 %v1330
      %v1419 = vpop.f32.mrf.mxu0
      %v1420 = vadd.f32 0.0, %v1419
      %v1421 = vpop.f32.mrf.mxu0
      %v1422 = vadd.f32 0.0, %v1421
      %1423 = vdwg.mxu0
      %v1424 = vadd.f32 %v992, %v1345
      %v1425 = vadd.f32 %v994, %v1347
      %v1426 = vadd.f32 %v997, %v1350
      %v1427 = vadd.f32 %v999, %v1352
      %v1428 = vadd.f32 %v1002, %v1355
      %v1429 = vadd.f32 %v1004, %v1357
      %v1430 = vadd.f32 %v1007, %v1360
      %v1431 = vadd.f32 %v1009, %v1362
      %v1432 = vadd.f32 %v1012, %v1365
      %v1433 = vadd.f32 %v1014, %v1367
      %v1434 = vadd.f32 %v1017, %v1370
      %v1435 = vadd.f32 %v1019, %v1372
      %v1436 = vadd.f32 %v1022, %v1375
      %v1437 = vadd.f32 %v1024, %v1377
      %v1438 = vadd.f32 %v1027, %v1380
      %v1439 = vadd.f32 %v1029, %v1382
      %v1440 = vadd.f32 %v1032, %v1385
      %v1441 = vadd.f32 %v1034, %v1387
      %v1442 = vadd.f32 %v1037, %v1390
      %v1443 = vadd.f32 %v1039, %v1392
      %v1444 = vadd.f32 %v1042, %v1395
      %v1445 = vadd.f32 %v1044, %v1397
      %v1446 = vadd.f32 %v1047, %v1400
      %v1447 = vadd.f32 %v1049, %v1402
      %v1448 = vadd.f32 %v1052, %v1405
      %v1449 = vadd.f32 %v1054, %v1407
      %v1450 = vadd.f32 %v1057, %v1410
      %v1451 = vadd.f32 %v1059, %v1412
      %v1452 = vadd.f32 %v1062, %v1415
      %v1453 = vadd.f32 %v1064, %v1417
      %v1454 = vadd.f32 %v1067, %v1420
      %v1455 = vadd.f32 %v1069, %v1422
      %s1456 = scalar_lea.vmem %s206, 12
      %v1457 = vld [vmem:[%s1456] sm:$0xf]
      %v1458 = vld [vmem:[%s1456 + $0x4] sm:$0xf]
      %v1459 = vld [vmem:[%s1456 + $0xc] sm:$0xf]
      %v1460 = vld [vmem:[%s1456 + $0x10] sm:$0xf]
      %v1461 = vld [vmem:[%s1456 + $0x18] sm:$0xf]
      %v1462 = vld [vmem:[%s1456 + $0x1c] sm:$0xf]
      %v1463 = vld [vmem:[%s1456 + $0x24] sm:$0xf]
      %v1464 = vld [vmem:[%s1456 + $0x28] sm:$0xf]
      %v1465 = vld [vmem:[%s1456 + $0x30] sm:$0xf]
      %v1466 = vld [vmem:[%s1456 + $0x34] sm:$0xf]
      %v1467 = vld [vmem:[%s1456 + $0x3c] sm:$0xf]
      %v1468 = vld [vmem:[%s1456 + $0x40] sm:$0xf]
      %v1469 = vld [vmem:[%s1456 + $0x48] sm:$0xf]
      %v1470 = vld [vmem:[%s1456 + $0x4c] sm:$0xf]
      %v1471 = vld [vmem:[%s1456 + $0x54] sm:$0xf]
      %v1472 = vld [vmem:[%s1456 + $0x58] sm:$0xf]
      %v1473 = vld [vmem:[%s1456 + $0x60] sm:$0xf]
      %v1474 = vld [vmem:[%s1456 + $0x64] sm:$0xf]
      %v1475 = vld [vmem:[%s1456 + $0x6c] sm:$0xf]
      %v1476 = vld [vmem:[%s1456 + $0x70] sm:$0xf]
      %v1477 = vld [vmem:[%s1456 + $0x78] sm:$0xf]
      %v1478 = vld [vmem:[%s1456 + $0x7c] sm:$0xf]
      %v1479 = vld [vmem:[%s1456 + $0x84] sm:$0xf]
      %v1480 = vld [vmem:[%s1456 + $0x88] sm:$0xf]
      %v1481 = vld [vmem:[%s1456 + $0x90] sm:$0xf]
      %v1482 = vld [vmem:[%s1456 + $0x94] sm:$0xf]
      %v1483 = vld [vmem:[%s1456 + $0x9c] sm:$0xf]
      %v1484 = vld [vmem:[%s1456 + $0xa0] sm:$0xf]
      %v1485 = vld [vmem:[%s1456 + $0xa8] sm:$0xf]
      %v1486 = vld [vmem:[%s1456 + $0xac] sm:$0xf]
      %v1487 = vld [vmem:[%s1456 + $0xb4] sm:$0xf]
      %v1488 = vld [vmem:[%s1456 + $0xb8] sm:$0xf]
      %s1489 = scalar_lea.vmem %s210, 6
      %v1490 = vld [vmem:[%s1489] sm:$0x3]
      %v1523 = vunpack.c.l.b16 %v1457
      %v1524 = vunpack.c.l.b16 %v1458
      %v1525 = vunpack.c.l.b16 %v1459
      %v1526 = vunpack.c.l.b16 %v1460
      %v1527 = vunpack.c.l.b16 %v1461
      %v1528 = vunpack.c.l.b16 %v1462
      %v1529 = vunpack.c.l.b16 %v1463
      %v1530 = vunpack.c.l.b16 %v1464
      %v1531 = vunpack.c.l.b16 %v1465
      %v1532 = vunpack.c.l.b16 %v1466
      %v1533 = vunpack.c.l.b16 %v1467
      %v1534 = vunpack.c.l.b16 %v1468
      %v1535 = vunpack.c.l.b16 %v1469
      %v1536 = vunpack.c.l.b16 %v1470
      %v1537 = vunpack.c.l.b16 %v1471
      %v1538 = vunpack.c.l.b16 %v1472
      %v1539 = vunpack.c.l.b16 %v1473
      %v1540 = vunpack.c.l.b16 %v1474
      %v1541 = vunpack.c.l.b16 %v1475
      %v1542 = vunpack.c.l.b16 %v1476
      %v1543 = vunpack.c.l.b16 %v1477
      %v1544 = vunpack.c.l.b16 %v1478
      %v1545 = vunpack.c.l.b16 %v1479
      %v1546 = vunpack.c.l.b16 %v1480
      %v1547 = vunpack.c.l.b16 %v1481
      %v1548 = vunpack.c.l.b16 %v1482
      %v1549 = vunpack.c.l.b16 %v1483
      %v1550 = vunpack.c.l.b16 %v1484
      %v1551 = vunpack.c.l.b16 %v1485
      %v1552 = vunpack.c.l.b16 %v1486
      %v1553 = vunpack.c.l.b16 %v1487
      %v1554 = vunpack.c.l.b16 %v1488
      %v1555 = vpack.c.b16 %v1524, %v1523
      %v1556 = vpack.c.b16 %v1526, %v1525
      %v1557 = vpack.c.b16 %v1528, %v1527
      %v1558 = vpack.c.b16 %v1530, %v1529
      %v1559 = vpack.c.b16 %v1532, %v1531
      %v1560 = vpack.c.b16 %v1534, %v1533
      %v1561 = vpack.c.b16 %v1536, %v1535
      %v1562 = vpack.c.b16 %v1538, %v1537
      %v1563 = vpack.c.b16 %v1540, %v1539
      %v1564 = vpack.c.b16 %v1542, %v1541
      %v1565 = vpack.c.b16 %v1544, %v1543
      %v1566 = vpack.c.b16 %v1546, %v1545
      %v1567 = vpack.c.b16 %v1548, %v1547
      %v1568 = vpack.c.b16 %v1550, %v1549
      %v1569 = vpack.c.b16 %v1552, %v1551
      %v1570 = vpack.c.b16 %v1554, %v1553
      %v1572 = vsel %vm709, %v1555, 0
      %v1575 = vsel %vm709, %v1556, 0
      %v1578 = vsel %vm709, %v1557, 0
      %v1581 = vsel %vm709, %v1558, 0
      %v1584 = vsel %vm709, %v1559, 0
      %v1587 = vsel %vm709, %v1560, 0
      %v1590 = vsel %vm709, %v1561, 0
      %v1593 = vsel %vm709, %v1562, 0
      %v1596 = vsel %vm709, %v1563, 0
      %v1599 = vsel %vm709, %v1564, 0
      %v1602 = vsel %vm709, %v1565, 0
      %v1605 = vsel %vm709, %v1566, 0
      %v1608 = vsel %vm709, %v1567, 0
      %v1611 = vsel %vm709, %v1568, 0
      %v1614 = vsel %vm709, %v1569, 0
      %v1617 = vsel %vm709, %v1570, 0
      %v1620 = vsel %vm758, %v1490, 0
      %1622 = vmatpush.bf16.msra.mxu0 0
      %1623 = vmatpush.bf16.msra.mxu0 0
      %1624 = vmatpush.bf16.msra.mxu0 0
      %1625 = vmatpush.bf16.msra.mxu0 0
      %1626 = vmatpush.bf16.msra.mxu0 0
      %1627 = vmatpush.bf16.msra.mxu0 0
      %1628 = vmatpush.bf16.msra.mxu0 0
      %1629 = vmatpush.bf16.msra.mxu0 %v1620
      %1630 = vmatmul.bf16.gmra.mxu0 %v1572
      %v1631 = vpop.f32.mrf.mxu0
      %v1632 = vadd.f32 0.0, %v1631
      %v1633 = vpop.f32.mrf.mxu0
      %v1634 = vadd.f32 0.0, %v1633
      %1635 = vmatmul.bf16.gmra.mxu0 %v1575
      %v1636 = vpop.f32.mrf.mxu0
      %v1637 = vadd.f32 0.0, %v1636
      %v1638 = vpop.f32.mrf.mxu0
      %v1639 = vadd.f32 0.0, %v1638
      %1640 = vmatmul.bf16.gmra.mxu0 %v1578
      %v1641 = vpop.f32.mrf.mxu0
      %v1642 = vadd.f32 0.0, %v1641
      %v1643 = vpop.f32.mrf.mxu0
      %v1644 = vadd.f32 0.0, %v1643
      %1645 = vmatmul.bf16.gmra.mxu0 %v1581
      %v1646 = vpop.f32.mrf.mxu0
      %v1647 = vadd.f32 0.0, %v1646
      %v1648 = vpop.f32.mrf.mxu0
      %v1649 = vadd.f32 0.0, %v1648
      %1650 = vmatmul.bf16.gmra.mxu0 %v1584
      %v1651 = vpop.f32.mrf.mxu0
      %v1652 = vadd.f32 0.0, %v1651
      %v1653 = vpop.f32.mrf.mxu0
      %v1654 = vadd.f32 0.0, %v1653
      %1655 = vmatmul.bf16.gmra.mxu0 %v1587
      %v1656 = vpop.f32.mrf.mxu0
      %v1657 = vadd.f32 0.0, %v1656
      %v1658 = vpop.f32.mrf.mxu0
      %v1659 = vadd.f32 0.0, %v1658
      %1660 = vmatmul.bf16.gmra.mxu0 %v1590
      %v1661 = vpop.f32.mrf.mxu0
      %v1662 = vadd.f32 0.0, %v1661
      %v1663 = vpop.f32.mrf.mxu0
      %v1664 = vadd.f32 0.0, %v1663
      %1665 = vmatmul.bf16.gmra.mxu0 %v1593
      %v1666 = vpop.f32.mrf.mxu0
      %v1667 = vadd.f32 0.0, %v1666
      %v1668 = vpop.f32.mrf.mxu0
      %v1669 = vadd.f32 0.0, %v1668
      %1670 = vmatmul.bf16.gmra.mxu0 %v1596
      %v1671 = vpop.f32.mrf.mxu0
      %v1672 = vadd.f32 0.0, %v1671
      %v1673 = vpop.f32.mrf.mxu0
      %v1674 = vadd.f32 0.0, %v1673
      %1675 = vmatmul.bf16.gmra.mxu0 %v1599
      %v1676 = vpop.f32.mrf.mxu0
      %v1677 = vadd.f32 0.0, %v1676
      %v1678 = vpop.f32.mrf.mxu0
      %v1679 = vadd.f32 0.0, %v1678
      %1680 = vmatmul.bf16.gmra.mxu0 %v1602
      %v1681 = vpop.f32.mrf.mxu0
      %v1682 = vadd.f32 0.0, %v1681
      %v1683 = vpop.f32.mrf.mxu0
      %v1684 = vadd.f32 0.0, %v1683
      %1685 = vmatmul.bf16.gmra.mxu0 %v1605
      %v1686 = vpop.f32.mrf.mxu0
      %v1687 = vadd.f32 0.0, %v1686
      %v1688 = vpop.f32.mrf.mxu0
      %v1689 = vadd.f32 0.0, %v1688
      %1690 = vmatmul.bf16.gmra.mxu0 %v1608
      %v1691 = vpop.f32.mrf.mxu0
      %v1692 = vadd.f32 0.0, %v1691
      %v1693 = vpop.f32.mrf.mxu0
      %v1694 = vadd.f32 0.0, %v1693
      %1695 = vmatmul.bf16.gmra.mxu0 %v1611
      %v1696 = vpop.f32.mrf.mxu0
      %v1697 = vadd.f32 0.0, %v1696
      %v1698 = vpop.f32.mrf.mxu0
      %v1699 = vadd.f32 0.0, %v1698
      %1700 = vmatmul.bf16.gmra.mxu0 %v1614
      %v1701 = vpop.f32.mrf.mxu0
      %v1702 = vadd.f32 0.0, %v1701
      %v1703 = vpop.f32.mrf.mxu0
      %v1704 = vadd.f32 0.0, %v1703
      %1705 = vmatmul.bf16.gmra.mxu0 %v1617
      %v1706 = vpop.f32.mrf.mxu0
      %v1707 = vadd.f32 0.0, %v1706
      %v1708 = vpop.f32.mrf.mxu0
      %v1709 = vadd.f32 0.0, %v1708
      %1710 = vdwg.mxu0
      %v1711 = vadd.f32 %v1424, %v1632
      %v1712 = vadd.f32 %v1425, %v1634
      %v1713 = vadd.f32 %v1426, %v1637
      %v1714 = vadd.f32 %v1427, %v1639
      %v1715 = vadd.f32 %v1428, %v1642
      %v1716 = vadd.f32 %v1429, %v1644
      %v1717 = vadd.f32 %v1430, %v1647
      %v1718 = vadd.f32 %v1431, %v1649
      %v1719 = vadd.f32 %v1432, %v1652
      %v1720 = vadd.f32 %v1433, %v1654
      %v1721 = vadd.f32 %v1434, %v1657
      %v1722 = vadd.f32 %v1435, %v1659
      %v1723 = vadd.f32 %v1436, %v1662
      %v1724 = vadd.f32 %v1437, %v1664
      %v1725 = vadd.f32 %v1438, %v1667
      %v1726 = vadd.f32 %v1439, %v1669
      %v1727 = vadd.f32 %v1440, %v1672
      %v1728 = vadd.f32 %v1441, %v1674
      %v1729 = vadd.f32 %v1442, %v1677
      %v1730 = vadd.f32 %v1443, %v1679
      %v1731 = vadd.f32 %v1444, %v1682
      %v1732 = vadd.f32 %v1445, %v1684
      %v1733 = vadd.f32 %v1446, %v1687
      %v1734 = vadd.f32 %v1447, %v1689
      %v1735 = vadd.f32 %v1448, %v1692
      %v1736 = vadd.f32 %v1449, %v1694
      %v1737 = vadd.f32 %v1450, %v1697
      %v1738 = vadd.f32 %v1451, %v1699
      %v1739 = vadd.f32 %v1452, %v1702
      %v1740 = vadd.f32 %v1453, %v1704
      %v1741 = vadd.f32 %v1454, %v1707
      %v1742 = vadd.f32 %v1455, %v1709
      %v1743 = vld [vmem:[%s1456] sm:$0xf]
      %v1744 = vld [vmem:[%s1456 + $0x4] sm:$0xf]
      %v1745 = vld [vmem:[%s1456 + $0x8] sm:$0x1]
      %v1746 = vld [vmem:[%s1456 + $0xc] sm:$0xf]
      %v1747 = vld [vmem:[%s1456 + $0x10] sm:$0xf]
      %v1748 = vld [vmem:[%s1456 + $0x14] sm:$0x1]
      %v1749 = vld [vmem:[%s1456 + $0x18] sm:$0xf]
      %v1750 = vld [vmem:[%s1456 + $0x1c] sm:$0xf]
      %v1751 = vld [vmem:[%s1456 + $0x20] sm:$0x1]
      %v1752 = vld [vmem:[%s1456 + $0x24] sm:$0xf]
      %v1753 = vld [vmem:[%s1456 + $0x28] sm:$0xf]
      %v1754 = vld [vmem:[%s1456 + $0x2c] sm:$0x1]
      %v1755 = vld [vmem:[%s1456 + $0x30] sm:$0xf]
      %v1756 = vld [vmem:[%s1456 + $0x34] sm:$0xf]
      %v1757 = vld [vmem:[%s1456 + $0x38] sm:$0x1]
      %v1758 = vld [vmem:[%s1456 + $0x3c] sm:$0xf]
      %v1759 = vld [vmem:[%s1456 + $0x40] sm:$0xf]
      %v1760 = vld [vmem:[%s1456 + $0x44] sm:$0x1]
      %v1761 = vld [vmem:[%s1456 + $0x48] sm:$0xf]
      %v1762 = vld [vmem:[%s1456 + $0x4c] sm:$0xf]
      %v1763 = vld [vmem:[%s1456 + $0x50] sm:$0x1]
      %v1764 = vld [vmem:[%s1456 + $0x54] sm:$0xf]
      %v1765 = vld [vmem:[%s1456 + $0x58] sm:$0xf]
      %v1766 = vld [vmem:[%s1456 + $0x5c] sm:$0x1]
      %v1767 = vld [vmem:[%s1456 + $0x60] sm:$0xf]
      %v1768 = vld [vmem:[%s1456 + $0x64] sm:$0xf]
      %v1769 = vld [vmem:[%s1456 + $0x68] sm:$0x1]
      %v1770 = vld [vmem:[%s1456 + $0x6c] sm:$0xf]
      %v1771 = vld [vmem:[%s1456 + $0x70] sm:$0xf]
      %v1772 = vld [vmem:[%s1456 + $0x74] sm:$0x1]
      %v1773 = vld [vmem:[%s1456 + $0x78] sm:$0xf]
      %v1774 = vld [vmem:[%s1456 + $0x7c] sm:$0xf]
      %v1775 = vld [vmem:[%s1456 + $0x80] sm:$0x1]
      %v1776 = vld [vmem:[%s1456 + $0x84] sm:$0xf]
      %v1777 = vld [vmem:[%s1456 + $0x88] sm:$0xf]
      %v1778 = vld [vmem:[%s1456 + $0x8c] sm:$0x1]
      %v1779 = vld [vmem:[%s1456 + $0x90] sm:$0xf]
      %v1780 = vld [vmem:[%s1456 + $0x94] sm:$0xf]
      %v1781 = vld [vmem:[%s1456 + $0x98] sm:$0x1]
      %v1782 = vld [vmem:[%s1456 + $0x9c] sm:$0xf]
      %v1783 = vld [vmem:[%s1456 + $0xa0] sm:$0xf]
      %v1784 = vld [vmem:[%s1456 + $0xa4] sm:$0x1]
      %v1785 = vld [vmem:[%s1456 + $0xa8] sm:$0xf]
      %v1786 = vld [vmem:[%s1456 + $0xac] sm:$0xf]
      %v1787 = vld [vmem:[%s1456 + $0xb0] sm:$0x1]
      %v1788 = vld [vmem:[%s1456 + $0xb4] sm:$0xf]
      %v1789 = vld [vmem:[%s1456 + $0xb8] sm:$0xf]
      %v1790 = vld [vmem:[%s1456 + $0xbc] sm:$0x1]
      %v1792 = vshrl.u32 %v1743, 16
      %v1794 = vrot.slane %v1792, 4
      %v1795 = vshll.u32 %v1743, 16
      %v1797 = vrot.slane %v1795, 5
      %v1798 = vor.u32 %v1794, %v1797
      %v1799 = vrot.slane %v1798, 4
      %v1801 = vshll.u32 %v1744, 16
      %v1803 = vrot.slane %v1801, 5
      %v1804 = vsel %vm274, %v1799, %v1803
      %v1805 = vshrl.u32 %v1744, 16
      %v1807 = vrot.slane %v1805, 4
      %v1808 = vor.u32 %v1807, %v1803
      %v1809 = vrot.slane %v1808, 4
      %v1811 = vshll.u32 %v1745, 16
      %v1813 = vrot.slane %v1811, 5
      %v1814 = vsel %vm274, %v1809, %v1813
      %v1816 = vshrl.u32 %v1746, 16
      %v1818 = vrot.slane %v1816, 4
      %v1819 = vshll.u32 %v1746, 16
      %v1821 = vrot.slane %v1819, 5
      %v1822 = vor.u32 %v1818, %v1821
      %v1823 = vrot.slane %v1822, 4
      %v1825 = vshll.u32 %v1747, 16
      %v1827 = vrot.slane %v1825, 5
      %v1828 = vsel %vm274, %v1823, %v1827
      %v1829 = vshrl.u32 %v1747, 16
      %v1831 = vrot.slane %v1829, 4
      %v1832 = vor.u32 %v1831, %v1827
      %v1833 = vrot.slane %v1832, 4
      %v1835 = vshll.u32 %v1748, 16
      %v1837 = vrot.slane %v1835, 5
      %v1838 = vsel %vm274, %v1833, %v1837
      %v1840 = vshrl.u32 %v1749, 16
      %v1842 = vrot.slane %v1840, 4
      %v1843 = vshll.u32 %v1749, 16
      %v1845 = vrot.slane %v1843, 5
      %v1846 = vor.u32 %v1842, %v1845
      %v1847 = vrot.slane %v1846, 4
      %v1849 = vshll.u32 %v1750, 16
      %v1851 = vrot.slane %v1849, 5
      %v1852 = vsel %vm274, %v1847, %v1851
      %v1853 = vshrl.u32 %v1750, 16
      %v1855 = vrot.slane %v1853, 4
      %v1856 = vor.u32 %v1855, %v1851
      %v1857 = vrot.slane %v1856, 4
      %v1859 = vshll.u32 %v1751, 16
      %v1861 = vrot.slane %v1859, 5
      %v1862 = vsel %vm274, %v1857, %v1861
      %v1864 = vshrl.u32 %v1752, 16
      %v1866 = vrot.slane %v1864, 4
      %v1867 = vshll.u32 %v1752, 16
      %v1869 = vrot.slane %v1867, 5
      %v1870 = vor.u32 %v1866, %v1869
      %v1871 = vrot.slane %v1870, 4
      %v1873 = vshll.u32 %v1753, 16
      %v1875 = vrot.slane %v1873, 5
      %v1876 = vsel %vm274, %v1871, %v1875
      %v1877 = vshrl.u32 %v1753, 16
      %v1879 = vrot.slane %v1877, 4
      %v1880 = vor.u32 %v1879, %v1875
      %v1881 = vrot.slane %v1880, 4
      %v1883 = vshll.u32 %v1754, 16
      %v1885 = vrot.slane %v1883, 5
      %v1886 = vsel %vm274, %v1881, %v1885
      %v1888 = vshrl.u32 %v1755, 16
      %v1890 = vrot.slane %v1888, 4
      %v1891 = vshll.u32 %v1755, 16
      %v1893 = vrot.slane %v1891, 5
      %v1894 = vor.u32 %v1890, %v1893
      %v1895 = vrot.slane %v1894, 4
      %v1897 = vshll.u32 %v1756, 16
      %v1899 = vrot.slane %v1897, 5
      %v1900 = vsel %vm274, %v1895, %v1899
      %v1901 = vshrl.u32 %v1756, 16
      %v1903 = vrot.slane %v1901, 4
      %v1904 = vor.u32 %v1903, %v1899
      %v1905 = vrot.slane %v1904, 4
      %v1907 = vshll.u32 %v1757, 16
      %v1909 = vrot.slane %v1907, 5
      %v1910 = vsel %vm274, %v1905, %v1909
      %v1912 = vshrl.u32 %v1758, 16
      %v1914 = vrot.slane %v1912, 4
      %v1915 = vshll.u32 %v1758, 16
      %v1917 = vrot.slane %v1915, 5
      %v1918 = vor.u32 %v1914, %v1917
      %v1919 = vrot.slane %v1918, 4
      %v1921 = vshll.u32 %v1759, 16
      %v1923 = vrot.slane %v1921, 5
      %v1924 = vsel %vm274, %v1919, %v1923
      %v1925 = vshrl.u32 %v1759, 16
      %v1927 = vrot.slane %v1925, 4
      %v1928 = vor.u32 %v1927, %v1923
      %v1929 = vrot.slane %v1928, 4
      %v1931 = vshll.u32 %v1760, 16
      %v1933 = vrot.slane %v1931, 5
      %v1934 = vsel %vm274, %v1929, %v1933
      %v1936 = vshrl.u32 %v1761, 16
      %v1938 = vrot.slane %v1936, 4
      %v1939 = vshll.u32 %v1761, 16
      %v1941 = vrot.slane %v1939, 5
      %v1942 = vor.u32 %v1938, %v1941
      %v1943 = vrot.slane %v1942, 4
      %v1945 = vshll.u32 %v1762, 16
      %v1947 = vrot.slane %v1945, 5
      %v1948 = vsel %vm274, %v1943, %v1947
      %v1949 = vshrl.u32 %v1762, 16
      %v1951 = vrot.slane %v1949, 4
      %v1952 = vor.u32 %v1951, %v1947
      %v1953 = vrot.slane %v1952, 4
      %v1955 = vshll.u32 %v1763, 16
      %v1957 = vrot.slane %v1955, 5
      %v1958 = vsel %vm274, %v1953, %v1957
      %v1960 = vshrl.u32 %v1764, 16
      %v1962 = vrot.slane %v1960, 4
      %v1963 = vshll.u32 %v1764, 16
      %v1965 = vrot.slane %v1963, 5
      %v1966 = vor.u32 %v1962, %v1965
      %v1967 = vrot.slane %v1966, 4
      %v1969 = vshll.u32 %v1765, 16
      %v1971 = vrot.slane %v1969, 5
      %v1972 = vsel %vm274, %v1967, %v1971
      %v1973 = vshrl.u32 %v1765, 16
      %v1975 = vrot.slane %v1973, 4
      %v1976 = vor.u32 %v1975, %v1971
      %v1977 = vrot.slane %v1976, 4
      %v1979 = vshll.u32 %v1766, 16
      %v1981 = vrot.slane %v1979, 5
      %v1982 = vsel %vm274, %v1977, %v1981
      %v1984 = vshrl.u32 %v1767, 16
      %v1986 = vrot.slane %v1984, 4
      %v1987 = vshll.u32 %v1767, 16
      %v1989 = vrot.slane %v1987, 5
      %v1990 = vor.u32 %v1986, %v1989
      %v1991 = vrot.slane %v1990, 4
      %v1993 = vshll.u32 %v1768, 16
      %v1995 = vrot.slane %v1993, 5
      %v1996 = vsel %vm274, %v1991, %v1995
      %v1997 = vshrl.u32 %v1768, 16
      %v1999 = vrot.slane %v1997, 4
      %v2000 = vor.u32 %v1999, %v1995
      %v2001 = vrot.slane %v2000, 4
      %v2003 = vshll.u32 %v1769, 16
      %v2005 = vrot.slane %v2003, 5
      %v2006 = vsel %vm274, %v2001, %v2005
      %v2008 = vshrl.u32 %v1770, 16
      %v2010 = vrot.slane %v2008, 4
      %v2011 = vshll.u32 %v1770, 16
      %v2013 = vrot.slane %v2011, 5
      %v2014 = vor.u32 %v2010, %v2013
      %v2015 = vrot.slane %v2014, 4
      %v2017 = vshll.u32 %v1771, 16
      %v2019 = vrot.slane %v2017, 5
      %v2020 = vsel %vm274, %v2015, %v2019
      %v2021 = vshrl.u32 %v1771, 16
      %v2023 = vrot.slane %v2021, 4
      %v2024 = vor.u32 %v2023, %v2019
      %v2025 = vrot.slane %v2024, 4
      %v2027 = vshll.u32 %v1772, 16
      %v2029 = vrot.slane %v2027, 5
      %v2030 = vsel %vm274, %v2025, %v2029
      %v2032 = vshrl.u32 %v1773, 16
      %v2034 = vrot.slane %v2032, 4
      %v2035 = vshll.u32 %v1773, 16
      %v2037 = vrot.slane %v2035, 5
      %v2038 = vor.u32 %v2034, %v2037
      %v2039 = vrot.slane %v2038, 4
      %v2041 = vshll.u32 %v1774, 16
      %v2043 = vrot.slane %v2041, 5
      %v2044 = vsel %vm274, %v2039, %v2043
      %v2045 = vshrl.u32 %v1774, 16
      %v2047 = vrot.slane %v2045, 4
      %v2048 = vor.u32 %v2047, %v2043
      %v2049 = vrot.slane %v2048, 4
      %v2051 = vshll.u32 %v1775, 16
      %v2053 = vrot.slane %v2051, 5
      %v2054 = vsel %vm274, %v2049, %v2053
      %v2056 = vshrl.u32 %v1776, 16
      %v2058 = vrot.slane %v2056, 4
      %v2059 = vshll.u32 %v1776, 16
      %v2061 = vrot.slane %v2059, 5
      %v2062 = vor.u32 %v2058, %v2061
      %v2063 = vrot.slane %v2062, 4
      %v2065 = vshll.u32 %v1777, 16
      %v2067 = vrot.slane %v2065, 5
      %v2068 = vsel %vm274, %v2063, %v2067
      %v2069 = vshrl.u32 %v1777, 16
      %v2071 = vrot.slane %v2069, 4
      %v2072 = vor.u32 %v2071, %v2067
      %v2073 = vrot.slane %v2072, 4
      %v2075 = vshll.u32 %v1778, 16
      %v2077 = vrot.slane %v2075, 5
      %v2078 = vsel %vm274, %v2073, %v2077
      %v2080 = vshrl.u32 %v1779, 16
      %v2082 = vrot.slane %v2080, 4
      %v2083 = vshll.u32 %v1779, 16
      %v2085 = vrot.slane %v2083, 5
      %v2086 = vor.u32 %v2082, %v2085
      %v2087 = vrot.slane %v2086, 4
      %v2089 = vshll.u32 %v1780, 16
      %v2091 = vrot.slane %v2089, 5
      %v2092 = vsel %vm274, %v2087, %v2091
      %v2093 = vshrl.u32 %v1780, 16
      %v2095 = vrot.slane %v2093, 4
      %v2096 = vor.u32 %v2095, %v2091
      %v2097 = vrot.slane %v2096, 4
      %v2099 = vshll.u32 %v1781, 16
      %v2101 = vrot.slane %v2099, 5
      %v2102 = vsel %vm274, %v2097, %v2101
      %v2104 = vshrl.u32 %v1782, 16
      %v2106 = vrot.slane %v2104, 4
      %v2107 = vshll.u32 %v1782, 16
      %v2109 = vrot.slane %v2107, 5
      %v2110 = vor.u32 %v2106, %v2109
      %v2111 = vrot.slane %v2110, 4
      %v2113 = vshll.u32 %v1783, 16
      %v2115 = vrot.slane %v2113, 5
      %v2116 = vsel %vm274, %v2111, %v2115
      %v2117 = vshrl.u32 %v1783, 16
      %v2119 = vrot.slane %v2117, 4
      %v2120 = vor.u32 %v2119, %v2115
      %v2121 = vrot.slane %v2120, 4
      %v2123 = vshll.u32 %v1784, 16
      %v2125 = vrot.slane %v2123, 5
      %v2126 = vsel %vm274, %v2121, %v2125
      %v2128 = vshrl.u32 %v1785, 16
      %v2130 = vrot.slane %v2128, 4
      %v2131 = vshll.u32 %v1785, 16
      %v2133 = vrot.slane %v2131, 5
      %v2134 = vor.u32 %v2130, %v2133
      %v2135 = vrot.slane %v2134, 4
      %v2137 = vshll.u32 %v1786, 16
      %v2139 = vrot.slane %v2137, 5
      %v2140 = vsel %vm274, %v2135, %v2139
      %v2141 = vshrl.u32 %v1786, 16
      %v2143 = vrot.slane %v2141, 4
      %v2144 = vor.u32 %v2143, %v2139
      %v2145 = vrot.slane %v2144, 4
      %v2147 = vshll.u32 %v1787, 16
      %v2149 = vrot.slane %v2147, 5
      %v2150 = vsel %vm274, %v2145, %v2149
      %v2152 = vshrl.u32 %v1788, 16
      %v2154 = vrot.slane %v2152, 4
      %v2155 = vshll.u32 %v1788, 16
      %v2157 = vrot.slane %v2155, 5
      %v2158 = vor.u32 %v2154, %v2157
      %v2159 = vrot.slane %v2158, 4
      %v2161 = vshll.u32 %v1789, 16
      %v2163 = vrot.slane %v2161, 5
      %v2164 = vsel %vm274, %v2159, %v2163
      %v2165 = vshrl.u32 %v1789, 16
      %v2167 = vrot.slane %v2165, 4
      %v2168 = vor.u32 %v2167, %v2163
      %v2169 = vrot.slane %v2168, 4
      %v2171 = vshll.u32 %v1790, 16
      %v2173 = vrot.slane %v2171, 5
      %v2174 = vsel %vm274, %v2169, %v2173
      %s2175 = scalar_lea.vmem %s210, 8
      %v2176 = vld [vmem:[%s2175] sm:$0x3]
      %v2177 = vunpack.c.l.b16 %v1804
      %v2178 = vunpack.c.l.b16 %v1814
      %v2179 = vunpack.c.l.b16 %v1828
      %v2180 = vunpack.c.l.b16 %v1838
      %v2181 = vunpack.c.l.b16 %v1852
      %v2182 = vunpack.c.l.b16 %v1862
      %v2183 = vunpack.c.l.b16 %v1876
      %v2184 = vunpack.c.l.b16 %v1886
      %v2185 = vunpack.c.l.b16 %v1900
      %v2186 = vunpack.c.l.b16 %v1910
      %v2187 = vunpack.c.l.b16 %v1924
      %v2188 = vunpack.c.l.b16 %v1934
      %v2189 = vunpack.c.l.b16 %v1948
      %v2190 = vunpack.c.l.b16 %v1958
      %v2191 = vunpack.c.l.b16 %v1972
      %v2192 = vunpack.c.l.b16 %v1982
      %v2193 = vunpack.c.l.b16 %v1996
      %v2194 = vunpack.c.l.b16 %v2006
      %v2195 = vunpack.c.l.b16 %v2020
      %v2196 = vunpack.c.l.b16 %v2030
      %v2197 = vunpack.c.l.b16 %v2044
      %v2198 = vunpack.c.l.b16 %v2054
      %v2199 = vunpack.c.l.b16 %v2068
      %v2200 = vunpack.c.l.b16 %v2078
      %v2201 = vunpack.c.l.b16 %v2092
      %v2202 = vunpack.c.l.b16 %v2102
      %v2203 = vunpack.c.l.b16 %v2116
      %v2204 = vunpack.c.l.b16 %v2126
      %v2205 = vunpack.c.l.b16 %v2140
      %v2206 = vunpack.c.l.b16 %v2150
      %v2207 = vunpack.c.l.b16 %v2164
      %v2208 = vunpack.c.l.b16 %v2174
      %v2209 = vpack.c.b16 %v2178, %v2177
      %v2210 = vpack.c.b16 %v2180, %v2179
      %v2211 = vpack.c.b16 %v2182, %v2181
      %v2212 = vpack.c.b16 %v2184, %v2183
      %v2213 = vpack.c.b16 %v2186, %v2185
      %v2214 = vpack.c.b16 %v2188, %v2187
      %v2215 = vpack.c.b16 %v2190, %v2189
      %v2216 = vpack.c.b16 %v2192, %v2191
      %v2217 = vpack.c.b16 %v2194, %v2193
      %v2218 = vpack.c.b16 %v2196, %v2195
      %v2219 = vpack.c.b16 %v2198, %v2197
      %v2220 = vpack.c.b16 %v2200, %v2199
      %v2221 = vpack.c.b16 %v2202, %v2201
      %v2222 = vpack.c.b16 %v2204, %v2203
      %v2223 = vpack.c.b16 %v2206, %v2205
      %v2224 = vpack.c.b16 %v2208, %v2207
      %v2226 = vsel %vm709, %v2209, 0
      %v2229 = vsel %vm709, %v2210, 0
      %v2232 = vsel %vm709, %v2211, 0
      %v2235 = vsel %vm709, %v2212, 0
      %v2238 = vsel %vm709, %v2213, 0
      %v2241 = vsel %vm709, %v2214, 0
      %v2244 = vsel %vm709, %v2215, 0
      %v2247 = vsel %vm709, %v2216, 0
      %v2250 = vsel %vm709, %v2217, 0
      %v2253 = vsel %vm709, %v2218, 0
      %v2256 = vsel %vm709, %v2219, 0
      %v2259 = vsel %vm709, %v2220, 0
      %v2262 = vsel %vm709, %v2221, 0
      %v2265 = vsel %vm709, %v2222, 0
      %v2268 = vsel %vm709, %v2223, 0
      %v2271 = vsel %vm709, %v2224, 0
      %v2274 = vsel %vm758, %v2176, 0
      %2276 = vmatpush.bf16.msra.mxu0 0
      %2277 = vmatpush.bf16.msra.mxu0 0
      %2278 = vmatpush.bf16.msra.mxu0 0
      %2279 = vmatpush.bf16.msra.mxu0 0
      %2280 = vmatpush.bf16.msra.mxu0 0
      %2281 = vmatpush.bf16.msra.mxu0 0
      %2282 = vmatpush.bf16.msra.mxu0 0
      %2283 = vmatpush.bf16.msra.mxu0 %v2274
      %2284 = vmatmul.bf16.gmra.mxu0 %v2226
      %v2285 = vpop.f32.mrf.mxu0
      %v2286 = vadd.f32 0.0, %v2285
      %v2287 = vpop.f32.mrf.mxu0
      %v2288 = vadd.f32 0.0, %v2287
      %2289 = vmatmul.bf16.gmra.mxu0 %v2229
      %v2290 = vpop.f32.mrf.mxu0
      %v2291 = vadd.f32 0.0, %v2290
      %v2292 = vpop.f32.mrf.mxu0
      %v2293 = vadd.f32 0.0, %v2292
      %2294 = vmatmul.bf16.gmra.mxu0 %v2232
      %v2295 = vpop.f32.mrf.mxu0
      %v2296 = vadd.f32 0.0, %v2295
      %v2297 = vpop.f32.mrf.mxu0
      %v2298 = vadd.f32 0.0, %v2297
      %2299 = vmatmul.bf16.gmra.mxu0 %v2235
      %v2300 = vpop.f32.mrf.mxu0
      %v2301 = vadd.f32 0.0, %v2300
      %v2302 = vpop.f32.mrf.mxu0
      %v2303 = vadd.f32 0.0, %v2302
      %2304 = vmatmul.bf16.gmra.mxu0 %v2238
      %v2305 = vpop.f32.mrf.mxu0
      %v2306 = vadd.f32 0.0, %v2305
      %v2307 = vpop.f32.mrf.mxu0
      %v2308 = vadd.f32 0.0, %v2307
      %2309 = vmatmul.bf16.gmra.mxu0 %v2241
      %v2310 = vpop.f32.mrf.mxu0
      %v2311 = vadd.f32 0.0, %v2310
      %v2312 = vpop.f32.mrf.mxu0
      %v2313 = vadd.f32 0.0, %v2312
      %2314 = vmatmul.bf16.gmra.mxu0 %v2244
      %v2315 = vpop.f32.mrf.mxu0
      %v2316 = vadd.f32 0.0, %v2315
      %v2317 = vpop.f32.mrf.mxu0
      %v2318 = vadd.f32 0.0, %v2317
      %2319 = vmatmul.bf16.gmra.mxu0 %v2247
      %v2320 = vpop.f32.mrf.mxu0
      %v2321 = vadd.f32 0.0, %v2320
      %v2322 = vpop.f32.mrf.mxu0
      %v2323 = vadd.f32 0.0, %v2322
      %2324 = vmatmul.bf16.gmra.mxu0 %v2250
      %v2325 = vpop.f32.mrf.mxu0
      %v2326 = vadd.f32 0.0, %v2325
      %v2327 = vpop.f32.mrf.mxu0
      %v2328 = vadd.f32 0.0, %v2327
      %2329 = vmatmul.bf16.gmra.mxu0 %v2253
      %v2330 = vpop.f32.mrf.mxu0
      %v2331 = vadd.f32 0.0, %v2330
      %v2332 = vpop.f32.mrf.mxu0
      %v2333 = vadd.f32 0.0, %v2332
      %2334 = vmatmul.bf16.gmra.mxu0 %v2256
      %v2335 = vpop.f32.mrf.mxu0
      %v2336 = vadd.f32 0.0, %v2335
      %v2337 = vpop.f32.mrf.mxu0
      %v2338 = vadd.f32 0.0, %v2337
      %2339 = vmatmul.bf16.gmra.mxu0 %v2259
      %v2340 = vpop.f32.mrf.mxu0
      %v2341 = vadd.f32 0.0, %v2340
      %v2342 = vpop.f32.mrf.mxu0
      %v2343 = vadd.f32 0.0, %v2342
      %2344 = vmatmul.bf16.gmra.mxu0 %v2262
      %v2345 = vpop.f32.mrf.mxu0
      %v2346 = vadd.f32 0.0, %v2345
      %v2347 = vpop.f32.mrf.mxu0
      %v2348 = vadd.f32 0.0, %v2347
      %2349 = vmatmul.bf16.gmra.mxu0 %v2265
      %v2350 = vpop.f32.mrf.mxu0
      %v2351 = vadd.f32 0.0, %v2350
      %v2352 = vpop.f32.mrf.mxu0
      %v2353 = vadd.f32 0.0, %v2352
      %2354 = vmatmul.bf16.gmra.mxu0 %v2268
      %v2355 = vpop.f32.mrf.mxu0
      %v2356 = vadd.f32 0.0, %v2355
      %v2357 = vpop.f32.mrf.mxu0
      %v2358 = vadd.f32 0.0, %v2357
      %2359 = vmatmul.bf16.gmra.mxu0 %v2271
      %v2360 = vpop.f32.mrf.mxu0
      %v2361 = vadd.f32 0.0, %v2360
      %v2362 = vpop.f32.mrf.mxu0
      %v2363 = vadd.f32 0.0, %v2362
      %2364 = vdwg.mxu0
      %v2365 = vadd.f32 %v1711, %v2286
      %v2366 = vadd.f32 %v1712, %v2288
      %v2367 = vadd.f32 %v1713, %v2291
      %v2368 = vadd.f32 %v1714, %v2293
      %v2369 = vadd.f32 %v1715, %v2296
      %v2370 = vadd.f32 %v1716, %v2298
      %v2371 = vadd.f32 %v1717, %v2301
      %v2372 = vadd.f32 %v1718, %v2303
      %v2373 = vadd.f32 %v1719, %v2306
      %v2374 = vadd.f32 %v1720, %v2308
      %v2375 = vadd.f32 %v1721, %v2311
      %v2376 = vadd.f32 %v1722, %v2313
      %v2377 = vadd.f32 %v1723, %v2316
      %v2378 = vadd.f32 %v1724, %v2318
      %v2379 = vadd.f32 %v1725, %v2321
      %v2380 = vadd.f32 %v1726, %v2323
      %v2381 = vadd.f32 %v1727, %v2326
      %v2382 = vadd.f32 %v1728, %v2328
      %v2383 = vadd.f32 %v1729, %v2331
      %v2384 = vadd.f32 %v1730, %v2333
      %v2385 = vadd.f32 %v1731, %v2336
      %v2386 = vadd.f32 %v1732, %v2338
      %v2387 = vadd.f32 %v1733, %v2341
      %v2388 = vadd.f32 %v1734, %v2343
      %v2389 = vadd.f32 %v1735, %v2346
      %v2390 = vadd.f32 %v1736, %v2348
      %v2391 = vadd.f32 %v1737, %v2351
      %v2392 = vadd.f32 %v1738, %v2353
      %v2393 = vadd.f32 %v1739, %v2356
      %v2394 = vadd.f32 %v1740, %v2358
      %v2395 = vadd.f32 %v1741, %v2361
      %v2396 = vadd.f32 %v1742, %v2363
      %v2397 = vld [vmem:[%s1456] sm:$0xe]
      %v2398 = vld [vmem:[%s1456 + $0xc] sm:$0xe]
      %v2399 = vld [vmem:[%s1456 + $0x18] sm:$0xe]
      %v2400 = vld [vmem:[%s1456 + $0x24] sm:$0xe]
      %v2401 = vld [vmem:[%s1456 + $0x30] sm:$0xe]
      %v2402 = vld [vmem:[%s1456 + $0x3c] sm:$0xe]
      %v2403 = vld [vmem:[%s1456 + $0x48] sm:$0xe]
      %v2404 = vld [vmem:[%s1456 + $0x54] sm:$0xe]
      %v2405 = vld [vmem:[%s1456 + $0x60] sm:$0xe]
      %v2406 = vld [vmem:[%s1456 + $0x6c] sm:$0xe]
      %v2407 = vld [vmem:[%s1456 + $0x78] sm:$0xe]
      %v2408 = vld [vmem:[%s1456 + $0x84] sm:$0xe]
      %v2409 = vld [vmem:[%s1456 + $0x90] sm:$0xe]
      %v2410 = vld [vmem:[%s1456 + $0x9c] sm:$0xe]
      %v2411 = vld [vmem:[%s1456 + $0xa8] sm:$0xe]
      %v2412 = vld [vmem:[%s1456 + $0xb4] sm:$0xe]
      %v2461 = vrot.slane %v2397, 5
      %v2462 = vrot.slane %v2461, 4
      %v2463 = vrot.slane %v1744, 5
      %v2464 = vsel %vm1121, %v2462, %v2463
      %v2465 = vrot.slane %v2463, 4
      %v2466 = vrot.slane %v1745, 5
      %v2467 = vsel %vm1121, %v2465, %v2466
      %v2468 = vrot.slane %v2398, 5
      %v2469 = vrot.slane %v2468, 4
      %v2470 = vrot.slane %v1747, 5
      %v2471 = vsel %vm1121, %v2469, %v2470
      %v2472 = vrot.slane %v2470, 4
      %v2473 = vrot.slane %v1748, 5
      %v2474 = vsel %vm1121, %v2472, %v2473
      %v2475 = vrot.slane %v2399, 5
      %v2476 = vrot.slane %v2475, 4
      %v2477 = vrot.slane %v1750, 5
      %v2478 = vsel %vm1121, %v2476, %v2477
      %v2479 = vrot.slane %v2477, 4
      %v2480 = vrot.slane %v1751, 5
      %v2481 = vsel %vm1121, %v2479, %v2480
      %v2482 = vrot.slane %v2400, 5
      %v2483 = vrot.slane %v2482, 4
      %v2484 = vrot.slane %v1753, 5
      %v2485 = vsel %vm1121, %v2483, %v2484
      %v2486 = vrot.slane %v2484, 4
      %v2487 = vrot.slane %v1754, 5
      %v2488 = vsel %vm1121, %v2486, %v2487
      %v2489 = vrot.slane %v2401, 5
      %v2490 = vrot.slane %v2489, 4
      %v2491 = vrot.slane %v1756, 5
      %v2492 = vsel %vm1121, %v2490, %v2491
      %v2493 = vrot.slane %v2491, 4
      %v2494 = vrot.slane %v1757, 5
      %v2495 = vsel %vm1121, %v2493, %v2494
      %v2496 = vrot.slane %v2402, 5
      %v2497 = vrot.slane %v2496, 4
      %v2498 = vrot.slane %v1759, 5
      %v2499 = vsel %vm1121, %v2497, %v2498
      %v2500 = vrot.slane %v2498, 4
      %v2501 = vrot.slane %v1760, 5
      %v2502 = vsel %vm1121, %v2500, %v2501
      %v2503 = vrot.slane %v2403, 5
      %v2504 = vrot.slane %v2503, 4
      %v2505 = vrot.slane %v1762, 5
      %v2506 = vsel %vm1121, %v2504, %v2505
      %v2507 = vrot.slane %v2505, 4
      %v2508 = vrot.slane %v1763, 5
      %v2509 = vsel %vm1121, %v2507, %v2508
      %v2510 = vrot.slane %v2404, 5
      %v2511 = vrot.slane %v2510, 4
      %v2512 = vrot.slane %v1765, 5
      %v2513 = vsel %vm1121, %v2511, %v2512
      %v2514 = vrot.slane %v2512, 4
      %v2515 = vrot.slane %v1766, 5
      %v2516 = vsel %vm1121, %v2514, %v2515
      %v2517 = vrot.slane %v2405, 5
      %v2518 = vrot.slane %v2517, 4
      %v2519 = vrot.slane %v1768, 5
      %v2520 = vsel %vm1121, %v2518, %v2519
      %v2521 = vrot.slane %v2519, 4
      %v2522 = vrot.slane %v1769, 5
      %v2523 = vsel %vm1121, %v2521, %v2522
      %v2524 = vrot.slane %v2406, 5
      %v2525 = vrot.slane %v2524, 4
      %v2526 = vrot.slane %v1771, 5
      %v2527 = vsel %vm1121, %v2525, %v2526
      %v2528 = vrot.slane %v2526, 4
      %v2529 = vrot.slane %v1772, 5
      %v2530 = vsel %vm1121, %v2528, %v2529
      %v2531 = vrot.slane %v2407, 5
      %v2532 = vrot.slane %v2531, 4
      %v2533 = vrot.slane %v1774, 5
      %v2534 = vsel %vm1121, %v2532, %v2533
      %v2535 = vrot.slane %v2533, 4
      %v2536 = vrot.slane %v1775, 5
      %v2537 = vsel %vm1121, %v2535, %v2536
      %v2538 = vrot.slane %v2408, 5
      %v2539 = vrot.slane %v2538, 4
      %v2540 = vrot.slane %v1777, 5
      %v2541 = vsel %vm1121, %v2539, %v2540
      %v2542 = vrot.slane %v2540, 4
      %v2543 = vrot.slane %v1778, 5
      %v2544 = vsel %vm1121, %v2542, %v2543
      %v2545 = vrot.slane %v2409, 5
      %v2546 = vrot.slane %v2545, 4
      %v2547 = vrot.slane %v1780, 5
      %v2548 = vsel %vm1121, %v2546, %v2547
      %v2549 = vrot.slane %v2547, 4
      %v2550 = vrot.slane %v1781, 5
      %v2551 = vsel %vm1121, %v2549, %v2550
      %v2552 = vrot.slane %v2410, 5
      %v2553 = vrot.slane %v2552, 4
      %v2554 = vrot.slane %v1783, 5
      %v2555 = vsel %vm1121, %v2553, %v2554
      %v2556 = vrot.slane %v2554, 4
      %v2557 = vrot.slane %v1784, 5
      %v2558 = vsel %vm1121, %v2556, %v2557
      %v2559 = vrot.slane %v2411, 5
      %v2560 = vrot.slane %v2559, 4
      %v2561 = vrot.slane %v1786, 5
      %v2562 = vsel %vm1121, %v2560, %v2561
      %v2563 = vrot.slane %v2561, 4
      %v2564 = vrot.slane %v1787, 5
      %v2565 = vsel %vm1121, %v2563, %v2564
      %v2566 = vrot.slane %v2412, 5
      %v2567 = vrot.slane %v2566, 4
      %v2568 = vrot.slane %v1789, 5
      %v2569 = vsel %vm1121, %v2567, %v2568
      %v2570 = vrot.slane %v2568, 4
      %v2571 = vrot.slane %v1790, 5
      %v2572 = vsel %vm1121, %v2570, %v2571
      %s2573 = scalar_lea.vmem %s210, 10
      %v2574 = vld [vmem:[%s2573] sm:$0x3]
      %v2575 = vunpack.c.l.b16 %v2464
      %v2576 = vunpack.c.l.b16 %v2467
      %v2577 = vunpack.c.l.b16 %v2471
      %v2578 = vunpack.c.l.b16 %v2474
      %v2579 = vunpack.c.l.b16 %v2478
      %v2580 = vunpack.c.l.b16 %v2481
      %v2581 = vunpack.c.l.b16 %v2485
      %v2582 = vunpack.c.l.b16 %v2488
      %v2583 = vunpack.c.l.b16 %v2492
      %v2584 = vunpack.c.l.b16 %v2495
      %v2585 = vunpack.c.l.b16 %v2499
      %v2586 = vunpack.c.l.b16 %v2502
      %v2587 = vunpack.c.l.b16 %v2506
      %v2588 = vunpack.c.l.b16 %v2509
      %v2589 = vunpack.c.l.b16 %v2513
      %v2590 = vunpack.c.l.b16 %v2516
      %v2591 = vunpack.c.l.b16 %v2520
      %v2592 = vunpack.c.l.b16 %v2523
      %v2593 = vunpack.c.l.b16 %v2527
      %v2594 = vunpack.c.l.b16 %v2530
      %v2595 = vunpack.c.l.b16 %v2534
      %v2596 = vunpack.c.l.b16 %v2537
      %v2597 = vunpack.c.l.b16 %v2541
      %v2598 = vunpack.c.l.b16 %v2544
      %v2599 = vunpack.c.l.b16 %v2548
      %v2600 = vunpack.c.l.b16 %v2551
      %v2601 = vunpack.c.l.b16 %v2555
      %v2602 = vunpack.c.l.b16 %v2558
      %v2603 = vunpack.c.l.b16 %v2562
      %v2604 = vunpack.c.l.b16 %v2565
      %v2605 = vunpack.c.l.b16 %v2569
      %v2606 = vunpack.c.l.b16 %v2572
      %v2607 = vpack.c.b16 %v2576, %v2575
      %v2608 = vpack.c.b16 %v2578, %v2577
      %v2609 = vpack.c.b16 %v2580, %v2579
      %v2610 = vpack.c.b16 %v2582, %v2581
      %v2611 = vpack.c.b16 %v2584, %v2583
      %v2612 = vpack.c.b16 %v2586, %v2585
      %v2613 = vpack.c.b16 %v2588, %v2587
      %v2614 = vpack.c.b16 %v2590, %v2589
      %v2615 = vpack.c.b16 %v2592, %v2591
      %v2616 = vpack.c.b16 %v2594, %v2593
      %v2617 = vpack.c.b16 %v2596, %v2595
      %v2618 = vpack.c.b16 %v2598, %v2597
      %v2619 = vpack.c.b16 %v2600, %v2599
      %v2620 = vpack.c.b16 %v2602, %v2601
      %v2621 = vpack.c.b16 %v2604, %v2603
      %v2622 = vpack.c.b16 %v2606, %v2605
      %v2624 = vsel %vm709, %v2607, 0
      %v2627 = vsel %vm709, %v2608, 0
      %v2630 = vsel %vm709, %v2609, 0
      %v2633 = vsel %vm709, %v2610, 0
      %v2636 = vsel %vm709, %v2611, 0
      %v2639 = vsel %vm709, %v2612, 0
      %v2642 = vsel %vm709, %v2613, 0
      %v2645 = vsel %vm709, %v2614, 0
      %v2648 = vsel %vm709, %v2615, 0
      %v2651 = vsel %vm709, %v2616, 0
      %v2654 = vsel %vm709, %v2617, 0
      %v2657 = vsel %vm709, %v2618, 0
      %v2660 = vsel %vm709, %v2619, 0
      %v2663 = vsel %vm709, %v2620, 0
      %v2666 = vsel %vm709, %v2621, 0
      %v2669 = vsel %vm709, %v2622, 0
      %v2672 = vsel %vm758, %v2574, 0
      %2674 = vmatpush.bf16.msra.mxu0 0
      %2675 = vmatpush.bf16.msra.mxu0 0
      %2676 = vmatpush.bf16.msra.mxu0 0
      %2677 = vmatpush.bf16.msra.mxu0 0
      %2678 = vmatpush.bf16.msra.mxu0 0
      %2679 = vmatpush.bf16.msra.mxu0 0
      %2680 = vmatpush.bf16.msra.mxu0 0
      %2681 = vmatpush.bf16.msra.mxu0 %v2672
      %2682 = vmatmul.bf16.gmra.mxu0 %v2624
      %v2683 = vpop.f32.mrf.mxu0
      %v2684 = vadd.f32 0.0, %v2683
      %v2685 = vpop.f32.mrf.mxu0
      %v2686 = vadd.f32 0.0, %v2685
      %2687 = vmatmul.bf16.gmra.mxu0 %v2627
      %v2688 = vpop.f32.mrf.mxu0
      %v2689 = vadd.f32 0.0, %v2688
      %v2690 = vpop.f32.mrf.mxu0
      %v2691 = vadd.f32 0.0, %v2690
      %2692 = vmatmul.bf16.gmra.mxu0 %v2630
      %v2693 = vpop.f32.mrf.mxu0
      %v2694 = vadd.f32 0.0, %v2693
      %v2695 = vpop.f32.mrf.mxu0
      %v2696 = vadd.f32 0.0, %v2695
      %2697 = vmatmul.bf16.gmra.mxu0 %v2633
      %v2698 = vpop.f32.mrf.mxu0
      %v2699 = vadd.f32 0.0, %v2698
      %v2700 = vpop.f32.mrf.mxu0
      %v2701 = vadd.f32 0.0, %v2700
      %2702 = vmatmul.bf16.gmra.mxu0 %v2636
      %v2703 = vpop.f32.mrf.mxu0
      %v2704 = vadd.f32 0.0, %v2703
      %v2705 = vpop.f32.mrf.mxu0
      %v2706 = vadd.f32 0.0, %v2705
      %2707 = vmatmul.bf16.gmra.mxu0 %v2639
      %v2708 = vpop.f32.mrf.mxu0
      %v2709 = vadd.f32 0.0, %v2708
      %v2710 = vpop.f32.mrf.mxu0
      %v2711 = vadd.f32 0.0, %v2710
      %2712 = vmatmul.bf16.gmra.mxu0 %v2642
      %v2713 = vpop.f32.mrf.mxu0
      %v2714 = vadd.f32 0.0, %v2713
      %v2715 = vpop.f32.mrf.mxu0
      %v2716 = vadd.f32 0.0, %v2715
      %2717 = vmatmul.bf16.gmra.mxu0 %v2645
      %v2718 = vpop.f32.mrf.mxu0
      %v2719 = vadd.f32 0.0, %v2718
      %v2720 = vpop.f32.mrf.mxu0
      %v2721 = vadd.f32 0.0, %v2720
      %2722 = vmatmul.bf16.gmra.mxu0 %v2648
      %v2723 = vpop.f32.mrf.mxu0
      %v2724 = vadd.f32 0.0, %v2723
      %v2725 = vpop.f32.mrf.mxu0
      %v2726 = vadd.f32 0.0, %v2725
      %2727 = vmatmul.bf16.gmra.mxu0 %v2651
      %v2728 = vpop.f32.mrf.mxu0
      %v2729 = vadd.f32 0.0, %v2728
      %v2730 = vpop.f32.mrf.mxu0
      %v2731 = vadd.f32 0.0, %v2730
      %2732 = vmatmul.bf16.gmra.mxu0 %v2654
      %v2733 = vpop.f32.mrf.mxu0
      %v2734 = vadd.f32 0.0, %v2733
      %v2735 = vpop.f32.mrf.mxu0
      %v2736 = vadd.f32 0.0, %v2735
      %2737 = vmatmul.bf16.gmra.mxu0 %v2657
      %v2738 = vpop.f32.mrf.mxu0
      %v2739 = vadd.f32 0.0, %v2738
      %v2740 = vpop.f32.mrf.mxu0
      %v2741 = vadd.f32 0.0, %v2740
      %2742 = vmatmul.bf16.gmra.mxu0 %v2660
      %v2743 = vpop.f32.mrf.mxu0
      %v2744 = vadd.f32 0.0, %v2743
      %v2745 = vpop.f32.mrf.mxu0
      %v2746 = vadd.f32 0.0, %v2745
      %2747 = vmatmul.bf16.gmra.mxu0 %v2663
      %v2748 = vpop.f32.mrf.mxu0
      %v2749 = vadd.f32 0.0, %v2748
      %v2750 = vpop.f32.mrf.mxu0
      %v2751 = vadd.f32 0.0, %v2750
      %2752 = vmatmul.bf16.gmra.mxu0 %v2666
      %v2753 = vpop.f32.mrf.mxu0
      %v2754 = vadd.f32 0.0, %v2753
      %v2755 = vpop.f32.mrf.mxu0
      %v2756 = vadd.f32 0.0, %v2755
      %2757 = vmatmul.bf16.gmra.mxu0 %v2669
      %v2758 = vpop.f32.mrf.mxu0
      %v2759 = vadd.f32 0.0, %v2758
      %v2760 = vpop.f32.mrf.mxu0
      %v2761 = vadd.f32 0.0, %v2760
      %2762 = vdwg.mxu0
      %v2763 = vadd.f32 %v2365, %v2684
      %v2764 = vadd.f32 %v2366, %v2686
      %v2765 = vadd.f32 %v2367, %v2689
      %v2766 = vadd.f32 %v2368, %v2691
      %v2767 = vadd.f32 %v2369, %v2694
      %v2768 = vadd.f32 %v2370, %v2696
      %v2769 = vadd.f32 %v2371, %v2699
      %v2770 = vadd.f32 %v2372, %v2701
      %v2771 = vadd.f32 %v2373, %v2704
      %v2772 = vadd.f32 %v2374, %v2706
      %v2773 = vadd.f32 %v2375, %v2709
      %v2774 = vadd.f32 %v2376, %v2711
      %v2775 = vadd.f32 %v2377, %v2714
      %v2776 = vadd.f32 %v2378, %v2716
      %v2777 = vadd.f32 %v2379, %v2719
      %v2778 = vadd.f32 %v2380, %v2721
      %v2779 = vadd.f32 %v2381, %v2724
      %v2780 = vadd.f32 %v2382, %v2726
      %v2781 = vadd.f32 %v2383, %v2729
      %v2782 = vadd.f32 %v2384, %v2731
      %v2783 = vadd.f32 %v2385, %v2734
      %v2784 = vadd.f32 %v2386, %v2736
      %v2785 = vadd.f32 %v2387, %v2739
      %v2786 = vadd.f32 %v2388, %v2741
      %v2787 = vadd.f32 %v2389, %v2744
      %v2788 = vadd.f32 %v2390, %v2746
      %v2789 = vadd.f32 %v2391, %v2749
      %v2790 = vadd.f32 %v2392, %v2751
      %v2791 = vadd.f32 %v2393, %v2754
      %v2792 = vadd.f32 %v2394, %v2756
      %v2793 = vadd.f32 %v2395, %v2759
      %v2794 = vadd.f32 %v2396, %v2761
      %s2795 = scalar_lea.vmem %s206, 24
      %v2796 = vld [vmem:[%s2795] sm:$0xf]
      %v2797 = vld [vmem:[%s2795 + $0x4] sm:$0xf]
      %v2798 = vld [vmem:[%s2795 + $0xc] sm:$0xf]
      %v2799 = vld [vmem:[%s2795 + $0x10] sm:$0xf]
      %v2800 = vld [vmem:[%s2795 + $0x18] sm:$0xf]
      %v2801 = vld [vmem:[%s2795 + $0x1c] sm:$0xf]
      %v2802 = vld [vmem:[%s2795 + $0x24] sm:$0xf]
      %v2803 = vld [vmem:[%s2795 + $0x28] sm:$0xf]
      %v2804 = vld [vmem:[%s2795 + $0x30] sm:$0xf]
      %v2805 = vld [vmem:[%s2795 + $0x34] sm:$0xf]
      %v2806 = vld [vmem:[%s2795 + $0x3c] sm:$0xf]
      %v2807 = vld [vmem:[%s2795 + $0x40] sm:$0xf]
      %v2808 = vld [vmem:[%s2795 + $0x48] sm:$0xf]
      %v2809 = vld [vmem:[%s2795 + $0x4c] sm:$0xf]
      %v2810 = vld [vmem:[%s2795 + $0x54] sm:$0xf]
      %v2811 = vld [vmem:[%s2795 + $0x58] sm:$0xf]
      %v2812 = vld [vmem:[%s2795 + $0x60] sm:$0xf]
      %v2813 = vld [vmem:[%s2795 + $0x64] sm:$0xf]
      %v2814 = vld [vmem:[%s2795 + $0x6c] sm:$0xf]
      %v2815 = vld [vmem:[%s2795 + $0x70] sm:$0xf]
      %v2816 = vld [vmem:[%s2795 + $0x78] sm:$0xf]
      %v2817 = vld [vmem:[%s2795 + $0x7c] sm:$0xf]
      %v2818 = vld [vmem:[%s2795 + $0x84] sm:$0xf]
      %v2819 = vld [vmem:[%s2795 + $0x88] sm:$0xf]
      %v2820 = vld [vmem:[%s2795 + $0x90] sm:$0xf]
      %v2821 = vld [vmem:[%s2795 + $0x94] sm:$0xf]
      %v2822 = vld [vmem:[%s2795 + $0x9c] sm:$0xf]
      %v2823 = vld [vmem:[%s2795 + $0xa0] sm:$0xf]
      %v2824 = vld [vmem:[%s2795 + $0xa8] sm:$0xf]
      %v2825 = vld [vmem:[%s2795 + $0xac] sm:$0xf]
      %v2826 = vld [vmem:[%s2795 + $0xb4] sm:$0xf]
      %v2827 = vld [vmem:[%s2795 + $0xb8] sm:$0xf]
      %s2828 = scalar_lea.vmem %s210, 12
      %v2829 = vld [vmem:[%s2828] sm:$0x3]
      %v2862 = vunpack.c.l.b16 %v2796
      %v2863 = vunpack.c.l.b16 %v2797
      %v2864 = vunpack.c.l.b16 %v2798
      %v2865 = vunpack.c.l.b16 %v2799
      %v2866 = vunpack.c.l.b16 %v2800
      %v2867 = vunpack.c.l.b16 %v2801
      %v2868 = vunpack.c.l.b16 %v2802
      %v2869 = vunpack.c.l.b16 %v2803
      %v2870 = vunpack.c.l.b16 %v2804
      %v2871 = vunpack.c.l.b16 %v2805
      %v2872 = vunpack.c.l.b16 %v2806
      %v2873 = vunpack.c.l.b16 %v2807
      %v2874 = vunpack.c.l.b16 %v2808
      %v2875 = vunpack.c.l.b16 %v2809
      %v2876 = vunpack.c.l.b16 %v2810
      %v2877 = vunpack.c.l.b16 %v2811
      %v2878 = vunpack.c.l.b16 %v2812
      %v2879 = vunpack.c.l.b16 %v2813
      %v2880 = vunpack.c.l.b16 %v2814
      %v2881 = vunpack.c.l.b16 %v2815
      %v2882 = vunpack.c.l.b16 %v2816
      %v2883 = vunpack.c.l.b16 %v2817
      %v2884 = vunpack.c.l.b16 %v2818
      %v2885 = vunpack.c.l.b16 %v2819
      %v2886 = vunpack.c.l.b16 %v2820
      %v2887 = vunpack.c.l.b16 %v2821
      %v2888 = vunpack.c.l.b16 %v2822
      %v2889 = vunpack.c.l.b16 %v2823
      %v2890 = vunpack.c.l.b16 %v2824
      %v2891 = vunpack.c.l.b16 %v2825
      %v2892 = vunpack.c.l.b16 %v2826
      %v2893 = vunpack.c.l.b16 %v2827
      %v2894 = vpack.c.b16 %v2863, %v2862
      %v2895 = vpack.c.b16 %v2865, %v2864
      %v2896 = vpack.c.b16 %v2867, %v2866
      %v2897 = vpack.c.b16 %v2869, %v2868
      %v2898 = vpack.c.b16 %v2871, %v2870
      %v2899 = vpack.c.b16 %v2873, %v2872
      %v2900 = vpack.c.b16 %v2875, %v2874
      %v2901 = vpack.c.b16 %v2877, %v2876
      %v2902 = vpack.c.b16 %v2879, %v2878
      %v2903 = vpack.c.b16 %v2881, %v2880
      %v2904 = vpack.c.b16 %v2883, %v2882
      %v2905 = vpack.c.b16 %v2885, %v2884
      %v2906 = vpack.c.b16 %v2887, %v2886
      %v2907 = vpack.c.b16 %v2889, %v2888
      %v2908 = vpack.c.b16 %v2891, %v2890
      %v2909 = vpack.c.b16 %v2893, %v2892
      %v2911 = vsel %vm709, %v2894, 0
      %v2914 = vsel %vm709, %v2895, 0
      %v2917 = vsel %vm709, %v2896, 0
      %v2920 = vsel %vm709, %v2897, 0
      %v2923 = vsel %vm709, %v2898, 0
      %v2926 = vsel %vm709, %v2899, 0
      %v2929 = vsel %vm709, %v2900, 0
      %v2932 = vsel %vm709, %v2901, 0
      %v2935 = vsel %vm709, %v2902, 0
      %v2938 = vsel %vm709, %v2903, 0
      %v2941 = vsel %vm709, %v2904, 0
      %v2944 = vsel %vm709, %v2905, 0
      %v2947 = vsel %vm709, %v2906, 0
      %v2950 = vsel %vm709, %v2907, 0
      %v2953 = vsel %vm709, %v2908, 0
      %v2956 = vsel %vm709, %v2909, 0
      %v2959 = vsel %vm758, %v2829, 0
      %2961 = vmatpush.bf16.msra.mxu0 0
      %2962 = vmatpush.bf16.msra.mxu0 0
      %2963 = vmatpush.bf16.msra.mxu0 0
      %2964 = vmatpush.bf16.msra.mxu0 0
      %2965 = vmatpush.bf16.msra.mxu0 0
      %2966 = vmatpush.bf16.msra.mxu0 0
      %2967 = vmatpush.bf16.msra.mxu0 0
      %2968 = vmatpush.bf16.msra.mxu0 %v2959
      %2969 = vmatmul.bf16.gmra.mxu0 %v2911
      %v2970 = vpop.f32.mrf.mxu0
      %v2971 = vadd.f32 0.0, %v2970
      %v2972 = vpop.f32.mrf.mxu0
      %v2973 = vadd.f32 0.0, %v2972
      %2974 = vmatmul.bf16.gmra.mxu0 %v2914
      %v2975 = vpop.f32.mrf.mxu0
      %v2976 = vadd.f32 0.0, %v2975
      %v2977 = vpop.f32.mrf.mxu0
      %v2978 = vadd.f32 0.0, %v2977
      %2979 = vmatmul.bf16.gmra.mxu0 %v2917
      %v2980 = vpop.f32.mrf.mxu0
      %v2981 = vadd.f32 0.0, %v2980
      %v2982 = vpop.f32.mrf.mxu0
      %v2983 = vadd.f32 0.0, %v2982
      %2984 = vmatmul.bf16.gmra.mxu0 %v2920
      %v2985 = vpop.f32.mrf.mxu0
      %v2986 = vadd.f32 0.0, %v2985
      %v2987 = vpop.f32.mrf.mxu0
      %v2988 = vadd.f32 0.0, %v2987
      %2989 = vmatmul.bf16.gmra.mxu0 %v2923
      %v2990 = vpop.f32.mrf.mxu0
      %v2991 = vadd.f32 0.0, %v2990
      %v2992 = vpop.f32.mrf.mxu0
      %v2993 = vadd.f32 0.0, %v2992
      %2994 = vmatmul.bf16.gmra.mxu0 %v2926
      %v2995 = vpop.f32.mrf.mxu0
      %v2996 = vadd.f32 0.0, %v2995
      %v2997 = vpop.f32.mrf.mxu0
      %v2998 = vadd.f32 0.0, %v2997
      %2999 = vmatmul.bf16.gmra.mxu0 %v2929
      %v3000 = vpop.f32.mrf.mxu0
      %v3001 = vadd.f32 0.0, %v3000
      %v3002 = vpop.f32.mrf.mxu0
      %v3003 = vadd.f32 0.0, %v3002
      %3004 = vmatmul.bf16.gmra.mxu0 %v2932
      %v3005 = vpop.f32.mrf.mxu0
      %v3006 = vadd.f32 0.0, %v3005
      %v3007 = vpop.f32.mrf.mxu0
      %v3008 = vadd.f32 0.0, %v3007
      %3009 = vmatmul.bf16.gmra.mxu0 %v2935
      %v3010 = vpop.f32.mrf.mxu0
      %v3011 = vadd.f32 0.0, %v3010
      %v3012 = vpop.f32.mrf.mxu0
      %v3013 = vadd.f32 0.0, %v3012
      %3014 = vmatmul.bf16.gmra.mxu0 %v2938
      %v3015 = vpop.f32.mrf.mxu0
      %v3016 = vadd.f32 0.0, %v3015
      %v3017 = vpop.f32.mrf.mxu0
      %v3018 = vadd.f32 0.0, %v3017
      %3019 = vmatmul.bf16.gmra.mxu0 %v2941
      %v3020 = vpop.f32.mrf.mxu0
      %v3021 = vadd.f32 0.0, %v3020
      %v3022 = vpop.f32.mrf.mxu0
      %v3023 = vadd.f32 0.0, %v3022
      %3024 = vmatmul.bf16.gmra.mxu0 %v2944
      %v3025 = vpop.f32.mrf.mxu0
      %v3026 = vadd.f32 0.0, %v3025
      %v3027 = vpop.f32.mrf.mxu0
      %v3028 = vadd.f32 0.0, %v3027
      %3029 = vmatmul.bf16.gmra.mxu0 %v2947
      %v3030 = vpop.f32.mrf.mxu0
      %v3031 = vadd.f32 0.0, %v3030
      %v3032 = vpop.f32.mrf.mxu0
      %v3033 = vadd.f32 0.0, %v3032
      %3034 = vmatmul.bf16.gmra.mxu0 %v2950
      %v3035 = vpop.f32.mrf.mxu0
      %v3036 = vadd.f32 0.0, %v3035
      %v3037 = vpop.f32.mrf.mxu0
      %v3038 = vadd.f32 0.0, %v3037
      %3039 = vmatmul.bf16.gmra.mxu0 %v2953
      %v3040 = vpop.f32.mrf.mxu0
      %v3041 = vadd.f32 0.0, %v3040
      %v3042 = vpop.f32.mrf.mxu0
      %v3043 = vadd.f32 0.0, %v3042
      %3044 = vmatmul.bf16.gmra.mxu0 %v2956
      %v3045 = vpop.f32.mrf.mxu0
      %v3046 = vadd.f32 0.0, %v3045
      %v3047 = vpop.f32.mrf.mxu0
      %v3048 = vadd.f32 0.0, %v3047
      %3049 = vdwg.mxu0
      %v3050 = vadd.f32 %v2763, %v2971
      %v3051 = vadd.f32 %v2764, %v2973
      %v3052 = vadd.f32 %v2765, %v2976
      %v3053 = vadd.f32 %v2766, %v2978
      %v3054 = vadd.f32 %v2767, %v2981
      %v3055 = vadd.f32 %v2768, %v2983
      %v3056 = vadd.f32 %v2769, %v2986
      %v3057 = vadd.f32 %v2770, %v2988
      %v3058 = vadd.f32 %v2771, %v2991
      %v3059 = vadd.f32 %v2772, %v2993
      %v3060 = vadd.f32 %v2773, %v2996
      %v3061 = vadd.f32 %v2774, %v2998
      %v3062 = vadd.f32 %v2775, %v3001
      %v3063 = vadd.f32 %v2776, %v3003
      %v3064 = vadd.f32 %v2777, %v3006
      %v3065 = vadd.f32 %v2778, %v3008
      %v3066 = vadd.f32 %v2779, %v3011
      %v3067 = vadd.f32 %v2780, %v3013
      %v3068 = vadd.f32 %v2781, %v3016
      %v3069 = vadd.f32 %v2782, %v3018
      %v3070 = vadd.f32 %v2783, %v3021
      %v3071 = vadd.f32 %v2784, %v3023
      %v3072 = vadd.f32 %v2785, %v3026
      %v3073 = vadd.f32 %v2786, %v3028
      %v3074 = vadd.f32 %v2787, %v3031
      %v3075 = vadd.f32 %v2788, %v3033
      %v3076 = vadd.f32 %v2789, %v3036
      %v3077 = vadd.f32 %v2790, %v3038
      %v3078 = vadd.f32 %v2791, %v3041
      %v3079 = vadd.f32 %v2792, %v3043
      %v3080 = vadd.f32 %v2793, %v3046
      %v3081 = vadd.f32 %v2794, %v3048
      %v3082 = vld [vmem:[%s2795] sm:$0xf]
      %v3083 = vld [vmem:[%s2795 + $0x4] sm:$0xf]
      %v3084 = vld [vmem:[%s2795 + $0x8] sm:$0x1]
      %v3085 = vld [vmem:[%s2795 + $0xc] sm:$0xf]
      %v3086 = vld [vmem:[%s2795 + $0x10] sm:$0xf]
      %v3087 = vld [vmem:[%s2795 + $0x14] sm:$0x1]
      %v3088 = vld [vmem:[%s2795 + $0x18] sm:$0xf]
      %v3089 = vld [vmem:[%s2795 + $0x1c] sm:$0xf]
      %v3090 = vld [vmem:[%s2795 + $0x20] sm:$0x1]
      %v3091 = vld [vmem:[%s2795 + $0x24] sm:$0xf]
      %v3092 = vld [vmem:[%s2795 + $0x28] sm:$0xf]
      %v3093 = vld [vmem:[%s2795 + $0x2c] sm:$0x1]
      %v3094 = vld [vmem:[%s2795 + $0x30] sm:$0xf]
      %v3095 = vld [vmem:[%s2795 + $0x34] sm:$0xf]
      %v3096 = vld [vmem:[%s2795 + $0x38] sm:$0x1]
      %v3097 = vld [vmem:[%s2795 + $0x3c] sm:$0xf]
      %v3098 = vld [vmem:[%s2795 + $0x40] sm:$0xf]
      %v3099 = vld [vmem:[%s2795 + $0x44] sm:$0x1]
      %v3100 = vld [vmem:[%s2795 + $0x48] sm:$0xf]
      %v3101 = vld [vmem:[%s2795 + $0x4c] sm:$0xf]
      %v3102 = vld [vmem:[%s2795 + $0x50] sm:$0x1]
      %v3103 = vld [vmem:[%s2795 + $0x54] sm:$0xf]
      %v3104 = vld [vmem:[%s2795 + $0x58] sm:$0xf]
      %v3105 = vld [vmem:[%s2795 + $0x5c] sm:$0x1]
      %v3106 = vld [vmem:[%s2795 + $0x60] sm:$0xf]
      %v3107 = vld [vmem:[%s2795 + $0x64] sm:$0xf]
      %v3108 = vld [vmem:[%s2795 + $0x68] sm:$0x1]
      %v3109 = vld [vmem:[%s2795 + $0x6c] sm:$0xf]
      %v3110 = vld [vmem:[%s2795 + $0x70] sm:$0xf]
      %v3111 = vld [vmem:[%s2795 + $0x74] sm:$0x1]
      %v3112 = vld [vmem:[%s2795 + $0x78] sm:$0xf]
      %v3113 = vld [vmem:[%s2795 + $0x7c] sm:$0xf]
      %v3114 = vld [vmem:[%s2795 + $0x80] sm:$0x1]
      %v3115 = vld [vmem:[%s2795 + $0x84] sm:$0xf]
      %v3116 = vld [vmem:[%s2795 + $0x88] sm:$0xf]
      %v3117 = vld [vmem:[%s2795 + $0x8c] sm:$0x1]
      %v3118 = vld [vmem:[%s2795 + $0x90] sm:$0xf]
      %v3119 = vld [vmem:[%s2795 + $0x94] sm:$0xf]
      %v3120 = vld [vmem:[%s2795 + $0x98] sm:$0x1]
      %v3121 = vld [vmem:[%s2795 + $0x9c] sm:$0xf]
      %v3122 = vld [vmem:[%s2795 + $0xa0] sm:$0xf]
      %v3123 = vld [vmem:[%s2795 + $0xa4] sm:$0x1]
      %v3124 = vld [vmem:[%s2795 + $0xa8] sm:$0xf]
      %v3125 = vld [vmem:[%s2795 + $0xac] sm:$0xf]
      %v3126 = vld [vmem:[%s2795 + $0xb0] sm:$0x1]
      %v3127 = vld [vmem:[%s2795 + $0xb4] sm:$0xf]
      %v3128 = vld [vmem:[%s2795 + $0xb8] sm:$0xf]
      %v3129 = vld [vmem:[%s2795 + $0xbc] sm:$0x1]
      %v3131 = vshrl.u32 %v3082, 16
      %v3133 = vrot.slane %v3131, 4
      %v3134 = vshll.u32 %v3082, 16
      %v3136 = vrot.slane %v3134, 5
      %v3137 = vor.u32 %v3133, %v3136
      %v3138 = vrot.slane %v3137, 4
      %v3140 = vshll.u32 %v3083, 16
      %v3142 = vrot.slane %v3140, 5
      %v3143 = vsel %vm274, %v3138, %v3142
      %v3144 = vshrl.u32 %v3083, 16
      %v3146 = vrot.slane %v3144, 4
      %v3147 = vor.u32 %v3146, %v3142
      %v3148 = vrot.slane %v3147, 4
      %v3150 = vshll.u32 %v3084, 16
      %v3152 = vrot.slane %v3150, 5
      %v3153 = vsel %vm274, %v3148, %v3152
      %v3155 = vshrl.u32 %v3085, 16
      %v3157 = vrot.slane %v3155, 4
      %v3158 = vshll.u32 %v3085, 16
      %v3160 = vrot.slane %v3158, 5
      %v3161 = vor.u32 %v3157, %v3160
      %v3162 = vrot.slane %v3161, 4
      %v3164 = vshll.u32 %v3086, 16
      %v3166 = vrot.slane %v3164, 5
      %v3167 = vsel %vm274, %v3162, %v3166
      %v3168 = vshrl.u32 %v3086, 16
      %v3170 = vrot.slane %v3168, 4
      %v3171 = vor.u32 %v3170, %v3166
      %v3172 = vrot.slane %v3171, 4
      %v3174 = vshll.u32 %v3087, 16
      %v3176 = vrot.slane %v3174, 5
      %v3177 = vsel %vm274, %v3172, %v3176
      %v3179 = vshrl.u32 %v3088, 16
      %v3181 = vrot.slane %v3179, 4
      %v3182 = vshll.u32 %v3088, 16
      %v3184 = vrot.slane %v3182, 5
      %v3185 = vor.u32 %v3181, %v3184
      %v3186 = vrot.slane %v3185, 4
      %v3188 = vshll.u32 %v3089, 16
      %v3190 = vrot.slane %v3188, 5
      %v3191 = vsel %vm274, %v3186, %v3190
      %v3192 = vshrl.u32 %v3089, 16
      %v3194 = vrot.slane %v3192, 4
      %v3195 = vor.u32 %v3194, %v3190
      %v3196 = vrot.slane %v3195, 4
      %v3198 = vshll.u32 %v3090, 16
      %v3200 = vrot.slane %v3198, 5
      %v3201 = vsel %vm274, %v3196, %v3200
      %v3203 = vshrl.u32 %v3091, 16
      %v3205 = vrot.slane %v3203, 4
      %v3206 = vshll.u32 %v3091, 16
      %v3208 = vrot.slane %v3206, 5
      %v3209 = vor.u32 %v3205, %v3208
      %v3210 = vrot.slane %v3209, 4
      %v3212 = vshll.u32 %v3092, 16
      %v3214 = vrot.slane %v3212, 5
      %v3215 = vsel %vm274, %v3210, %v3214
      %v3216 = vshrl.u32 %v3092, 16
      %v3218 = vrot.slane %v3216, 4
      %v3219 = vor.u32 %v3218, %v3214
      %v3220 = vrot.slane %v3219, 4
      %v3222 = vshll.u32 %v3093, 16
      %v3224 = vrot.slane %v3222, 5
      %v3225 = vsel %vm274, %v3220, %v3224
      %v3227 = vshrl.u32 %v3094, 16
      %v3229 = vrot.slane %v3227, 4
      %v3230 = vshll.u32 %v3094, 16
      %v3232 = vrot.slane %v3230, 5
      %v3233 = vor.u32 %v3229, %v3232
      %v3234 = vrot.slane %v3233, 4
      %v3236 = vshll.u32 %v3095, 16
      %v3238 = vrot.slane %v3236, 5
      %v3239 = vsel %vm274, %v3234, %v3238
      %v3240 = vshrl.u32 %v3095, 16
      %v3242 = vrot.slane %v3240, 4
      %v3243 = vor.u32 %v3242, %v3238
      %v3244 = vrot.slane %v3243, 4
      %v3246 = vshll.u32 %v3096, 16
      %v3248 = vrot.slane %v3246, 5
      %v3249 = vsel %vm274, %v3244, %v3248
      %v3251 = vshrl.u32 %v3097, 16
      %v3253 = vrot.slane %v3251, 4
      %v3254 = vshll.u32 %v3097, 16
      %v3256 = vrot.slane %v3254, 5
      %v3257 = vor.u32 %v3253, %v3256
      %v3258 = vrot.slane %v3257, 4
      %v3260 = vshll.u32 %v3098, 16
      %v3262 = vrot.slane %v3260, 5
      %v3263 = vsel %vm274, %v3258, %v3262
      %v3264 = vshrl.u32 %v3098, 16
      %v3266 = vrot.slane %v3264, 4
      %v3267 = vor.u32 %v3266, %v3262
      %v3268 = vrot.slane %v3267, 4
      %v3270 = vshll.u32 %v3099, 16
      %v3272 = vrot.slane %v3270, 5
      %v3273 = vsel %vm274, %v3268, %v3272
      %v3275 = vshrl.u32 %v3100, 16
      %v3277 = vrot.slane %v3275, 4
      %v3278 = vshll.u32 %v3100, 16
      %v3280 = vrot.slane %v3278, 5
      %v3281 = vor.u32 %v3277, %v3280
      %v3282 = vrot.slane %v3281, 4
      %v3284 = vshll.u32 %v3101, 16
      %v3286 = vrot.slane %v3284, 5
      %v3287 = vsel %vm274, %v3282, %v3286
      %v3288 = vshrl.u32 %v3101, 16
      %v3290 = vrot.slane %v3288, 4
      %v3291 = vor.u32 %v3290, %v3286
      %v3292 = vrot.slane %v3291, 4
      %v3294 = vshll.u32 %v3102, 16
      %v3296 = vrot.slane %v3294, 5
      %v3297 = vsel %vm274, %v3292, %v3296
      %v3299 = vshrl.u32 %v3103, 16
      %v3301 = vrot.slane %v3299, 4
      %v3302 = vshll.u32 %v3103, 16
      %v3304 = vrot.slane %v3302, 5
      %v3305 = vor.u32 %v3301, %v3304
      %v3306 = vrot.slane %v3305, 4
      %v3308 = vshll.u32 %v3104, 16
      %v3310 = vrot.slane %v3308, 5
      %v3311 = vsel %vm274, %v3306, %v3310
      %v3312 = vshrl.u32 %v3104, 16
      %v3314 = vrot.slane %v3312, 4
      %v3315 = vor.u32 %v3314, %v3310
      %v3316 = vrot.slane %v3315, 4
      %v3318 = vshll.u32 %v3105, 16
      %v3320 = vrot.slane %v3318, 5
      %v3321 = vsel %vm274, %v3316, %v3320
      %v3323 = vshrl.u32 %v3106, 16
      %v3325 = vrot.slane %v3323, 4
      %v3326 = vshll.u32 %v3106, 16
      %v3328 = vrot.slane %v3326, 5
      %v3329 = vor.u32 %v3325, %v3328
      %v3330 = vrot.slane %v3329, 4
      %v3332 = vshll.u32 %v3107, 16
      %v3334 = vrot.slane %v3332, 5
      %v3335 = vsel %vm274, %v3330, %v3334
      %v3336 = vshrl.u32 %v3107, 16
      %v3338 = vrot.slane %v3336, 4
      %v3339 = vor.u32 %v3338, %v3334
      %v3340 = vrot.slane %v3339, 4
      %v3342 = vshll.u32 %v3108, 16
      %v3344 = vrot.slane %v3342, 5
      %v3345 = vsel %vm274, %v3340, %v3344
      %v3347 = vshrl.u32 %v3109, 16
      %v3349 = vrot.slane %v3347, 4
      %v3350 = vshll.u32 %v3109, 16
      %v3352 = vrot.slane %v3350, 5
      %v3353 = vor.u32 %v3349, %v3352
      %v3354 = vrot.slane %v3353, 4
      %v3356 = vshll.u32 %v3110, 16
      %v3358 = vrot.slane %v3356, 5
      %v3359 = vsel %vm274, %v3354, %v3358
      %v3360 = vshrl.u32 %v3110, 16
      %v3362 = vrot.slane %v3360, 4
      %v3363 = vor.u32 %v3362, %v3358
      %v3364 = vrot.slane %v3363, 4
      %v3366 = vshll.u32 %v3111, 16
      %v3368 = vrot.slane %v3366, 5
      %v3369 = vsel %vm274, %v3364, %v3368
      %v3371 = vshrl.u32 %v3112, 16
      %v3373 = vrot.slane %v3371, 4
      %v3374 = vshll.u32 %v3112, 16
      %v3376 = vrot.slane %v3374, 5
      %v3377 = vor.u32 %v3373, %v3376
      %v3378 = vrot.slane %v3377, 4
      %v3380 = vshll.u32 %v3113, 16
      %v3382 = vrot.slane %v3380, 5
      %v3383 = vsel %vm274, %v3378, %v3382
      %v3384 = vshrl.u32 %v3113, 16
      %v3386 = vrot.slane %v3384, 4
      %v3387 = vor.u32 %v3386, %v3382
      %v3388 = vrot.slane %v3387, 4
      %v3390 = vshll.u32 %v3114, 16
      %v3392 = vrot.slane %v3390, 5
      %v3393 = vsel %vm274, %v3388, %v3392
      %v3395 = vshrl.u32 %v3115, 16
      %v3397 = vrot.slane %v3395, 4
      %v3398 = vshll.u32 %v3115, 16
      %v3400 = vrot.slane %v3398, 5
      %v3401 = vor.u32 %v3397, %v3400
      %v3402 = vrot.slane %v3401, 4
      %v3404 = vshll.u32 %v3116, 16
      %v3406 = vrot.slane %v3404, 5
      %v3407 = vsel %vm274, %v3402, %v3406
      %v3408 = vshrl.u32 %v3116, 16
      %v3410 = vrot.slane %v3408, 4
      %v3411 = vor.u32 %v3410, %v3406
      %v3412 = vrot.slane %v3411, 4
      %v3414 = vshll.u32 %v3117, 16
      %v3416 = vrot.slane %v3414, 5
      %v3417 = vsel %vm274, %v3412, %v3416
      %v3419 = vshrl.u32 %v3118, 16
      %v3421 = vrot.slane %v3419, 4
      %v3422 = vshll.u32 %v3118, 16
      %v3424 = vrot.slane %v3422, 5
      %v3425 = vor.u32 %v3421, %v3424
      %v3426 = vrot.slane %v3425, 4
      %v3428 = vshll.u32 %v3119, 16
      %v3430 = vrot.slane %v3428, 5
      %v3431 = vsel %vm274, %v3426, %v3430
      %v3432 = vshrl.u32 %v3119, 16
      %v3434 = vrot.slane %v3432, 4
      %v3435 = vor.u32 %v3434, %v3430
      %v3436 = vrot.slane %v3435, 4
      %v3438 = vshll.u32 %v3120, 16
      %v3440 = vrot.slane %v3438, 5
      %v3441 = vsel %vm274, %v3436, %v3440
      %v3443 = vshrl.u32 %v3121, 16
      %v3445 = vrot.slane %v3443, 4
      %v3446 = vshll.u32 %v3121, 16
      %v3448 = vrot.slane %v3446, 5
      %v3449 = vor.u32 %v3445, %v3448
      %v3450 = vrot.slane %v3449, 4
      %v3452 = vshll.u32 %v3122, 16
      %v3454 = vrot.slane %v3452, 5
      %v3455 = vsel %vm274, %v3450, %v3454
      %v3456 = vshrl.u32 %v3122, 16
      %v3458 = vrot.slane %v3456, 4
      %v3459 = vor.u32 %v3458, %v3454
      %v3460 = vrot.slane %v3459, 4
      %v3462 = vshll.u32 %v3123, 16
      %v3464 = vrot.slane %v3462, 5
      %v3465 = vsel %vm274, %v3460, %v3464
      %v3467 = vshrl.u32 %v3124, 16
      %v3469 = vrot.slane %v3467, 4
      %v3470 = vshll.u32 %v3124, 16
      %v3472 = vrot.slane %v3470, 5
      %v3473 = vor.u32 %v3469, %v3472
      %v3474 = vrot.slane %v3473, 4
      %v3476 = vshll.u32 %v3125, 16
      %v3478 = vrot.slane %v3476, 5
      %v3479 = vsel %vm274, %v3474, %v3478
      %v3480 = vshrl.u32 %v3125, 16
      %v3482 = vrot.slane %v3480, 4
      %v3483 = vor.u32 %v3482, %v3478
      %v3484 = vrot.slane %v3483, 4
      %v3486 = vshll.u32 %v3126, 16
      %v3488 = vrot.slane %v3486, 5
      %v3489 = vsel %vm274, %v3484, %v3488
      %v3491 = vshrl.u32 %v3127, 16
      %v3493 = vrot.slane %v3491, 4
      %v3494 = vshll.u32 %v3127, 16
      %v3496 = vrot.slane %v3494, 5
      %v3497 = vor.u32 %v3493, %v3496
      %v3498 = vrot.slane %v3497, 4
      %v3500 = vshll.u32 %v3128, 16
      %v3502 = vrot.slane %v3500, 5
      %v3503 = vsel %vm274, %v3498, %v3502
      %v3504 = vshrl.u32 %v3128, 16
      %v3506 = vrot.slane %v3504, 4
      %v3507 = vor.u32 %v3506, %v3502
      %v3508 = vrot.slane %v3507, 4
      %v3510 = vshll.u32 %v3129, 16
      %v3512 = vrot.slane %v3510, 5
      %v3513 = vsel %vm274, %v3508, %v3512
      %s3514 = scalar_lea.vmem %s210, 14
      %v3515 = vld [vmem:[%s3514] sm:$0x3]
      %v3516 = vunpack.c.l.b16 %v3143
      %v3517 = vunpack.c.l.b16 %v3153
      %v3518 = vunpack.c.l.b16 %v3167
      %v3519 = vunpack.c.l.b16 %v3177
      %v3520 = vunpack.c.l.b16 %v3191
      %v3521 = vunpack.c.l.b16 %v3201
      %v3522 = vunpack.c.l.b16 %v3215
      %v3523 = vunpack.c.l.b16 %v3225
      %v3524 = vunpack.c.l.b16 %v3239
      %v3525 = vunpack.c.l.b16 %v3249
      %v3526 = vunpack.c.l.b16 %v3263
      %v3527 = vunpack.c.l.b16 %v3273
      %v3528 = vunpack.c.l.b16 %v3287
      %v3529 = vunpack.c.l.b16 %v3297
      %v3530 = vunpack.c.l.b16 %v3311
      %v3531 = vunpack.c.l.b16 %v3321
      %v3532 = vunpack.c.l.b16 %v3335
      %v3533 = vunpack.c.l.b16 %v3345
      %v3534 = vunpack.c.l.b16 %v3359
      %v3535 = vunpack.c.l.b16 %v3369
      %v3536 = vunpack.c.l.b16 %v3383
      %v3537 = vunpack.c.l.b16 %v3393
      %v3538 = vunpack.c.l.b16 %v3407
      %v3539 = vunpack.c.l.b16 %v3417
      %v3540 = vunpack.c.l.b16 %v3431
      %v3541 = vunpack.c.l.b16 %v3441
      %v3542 = vunpack.c.l.b16 %v3455
      %v3543 = vunpack.c.l.b16 %v3465
      %v3544 = vunpack.c.l.b16 %v3479
      %v3545 = vunpack.c.l.b16 %v3489
      %v3546 = vunpack.c.l.b16 %v3503
      %v3547 = vunpack.c.l.b16 %v3513
      %v3548 = vpack.c.b16 %v3517, %v3516
      %v3549 = vpack.c.b16 %v3519, %v3518
      %v3550 = vpack.c.b16 %v3521, %v3520
      %v3551 = vpack.c.b16 %v3523, %v3522
      %v3552 = vpack.c.b16 %v3525, %v3524
      %v3553 = vpack.c.b16 %v3527, %v3526
      %v3554 = vpack.c.b16 %v3529, %v3528
      %v3555 = vpack.c.b16 %v3531, %v3530
      %v3556 = vpack.c.b16 %v3533, %v3532
      %v3557 = vpack.c.b16 %v3535, %v3534
      %v3558 = vpack.c.b16 %v3537, %v3536
      %v3559 = vpack.c.b16 %v3539, %v3538
      %v3560 = vpack.c.b16 %v3541, %v3540
      %v3561 = vpack.c.b16 %v3543, %v3542
      %v3562 = vpack.c.b16 %v3545, %v3544
      %v3563 = vpack.c.b16 %v3547, %v3546
      %v3565 = vsel %vm709, %v3548, 0
      %v3568 = vsel %vm709, %v3549, 0
      %v3571 = vsel %vm709, %v3550, 0
      %v3574 = vsel %vm709, %v3551, 0
      %v3577 = vsel %vm709, %v3552, 0
      %v3580 = vsel %vm709, %v3553, 0
      %v3583 = vsel %vm709, %v3554, 0
      %v3586 = vsel %vm709, %v3555, 0
      %v3589 = vsel %vm709, %v3556, 0
      %v3592 = vsel %vm709, %v3557, 0
      %v3595 = vsel %vm709, %v3558, 0
      %v3598 = vsel %vm709, %v3559, 0
      %v3601 = vsel %vm709, %v3560, 0
      %v3604 = vsel %vm709, %v3561, 0
      %v3607 = vsel %vm709, %v3562, 0
      %v3610 = vsel %vm709, %v3563, 0
      %v3613 = vsel %vm758, %v3515, 0
      %3615 = vmatpush.bf16.msra.mxu0 0
      %3616 = vmatpush.bf16.msra.mxu0 0
      %3617 = vmatpush.bf16.msra.mxu0 0
      %3618 = vmatpush.bf16.msra.mxu0 0
      %3619 = vmatpush.bf16.msra.mxu0 0
      %3620 = vmatpush.bf16.msra.mxu0 0
      %3621 = vmatpush.bf16.msra.mxu0 0
      %3622 = vmatpush.bf16.msra.mxu0 %v3613
      %3623 = vmatmul.bf16.gmra.mxu0 %v3565
      %v3624 = vpop.f32.mrf.mxu0
      %v3625 = vadd.f32 0.0, %v3624
      %v3626 = vpop.f32.mrf.mxu0
      %v3627 = vadd.f32 0.0, %v3626
      %3628 = vmatmul.bf16.gmra.mxu0 %v3568
      %v3629 = vpop.f32.mrf.mxu0
      %v3630 = vadd.f32 0.0, %v3629
      %v3631 = vpop.f32.mrf.mxu0
      %v3632 = vadd.f32 0.0, %v3631
      %3633 = vmatmul.bf16.gmra.mxu0 %v3571
      %v3634 = vpop.f32.mrf.mxu0
      %v3635 = vadd.f32 0.0, %v3634
      %v3636 = vpop.f32.mrf.mxu0
      %v3637 = vadd.f32 0.0, %v3636
      %3638 = vmatmul.bf16.gmra.mxu0 %v3574
      %v3639 = vpop.f32.mrf.mxu0
      %v3640 = vadd.f32 0.0, %v3639
      %v3641 = vpop.f32.mrf.mxu0
      %v3642 = vadd.f32 0.0, %v3641
      %3643 = vmatmul.bf16.gmra.mxu0 %v3577
      %v3644 = vpop.f32.mrf.mxu0
      %v3645 = vadd.f32 0.0, %v3644
      %v3646 = vpop.f32.mrf.mxu0
      %v3647 = vadd.f32 0.0, %v3646
      %3648 = vmatmul.bf16.gmra.mxu0 %v3580
      %v3649 = vpop.f32.mrf.mxu0
      %v3650 = vadd.f32 0.0, %v3649
      %v3651 = vpop.f32.mrf.mxu0
      %v3652 = vadd.f32 0.0, %v3651
      %3653 = vmatmul.bf16.gmra.mxu0 %v3583
      %v3654 = vpop.f32.mrf.mxu0
      %v3655 = vadd.f32 0.0, %v3654
      %v3656 = vpop.f32.mrf.mxu0
      %v3657 = vadd.f32 0.0, %v3656
      %3658 = vmatmul.bf16.gmra.mxu0 %v3586
      %v3659 = vpop.f32.mrf.mxu0
      %v3660 = vadd.f32 0.0, %v3659
      %v3661 = vpop.f32.mrf.mxu0
      %v3662 = vadd.f32 0.0, %v3661
      %3663 = vmatmul.bf16.gmra.mxu0 %v3589
      %v3664 = vpop.f32.mrf.mxu0
      %v3665 = vadd.f32 0.0, %v3664
      %v3666 = vpop.f32.mrf.mxu0
      %v3667 = vadd.f32 0.0, %v3666
      %3668 = vmatmul.bf16.gmra.mxu0 %v3592
      %v3669 = vpop.f32.mrf.mxu0
      %v3670 = vadd.f32 0.0, %v3669
      %v3671 = vpop.f32.mrf.mxu0
      %v3672 = vadd.f32 0.0, %v3671
      %3673 = vmatmul.bf16.gmra.mxu0 %v3595
      %v3674 = vpop.f32.mrf.mxu0
      %v3675 = vadd.f32 0.0, %v3674
      %v3676 = vpop.f32.mrf.mxu0
      %v3677 = vadd.f32 0.0, %v3676
      %3678 = vmatmul.bf16.gmra.mxu0 %v3598
      %v3679 = vpop.f32.mrf.mxu0
      %v3680 = vadd.f32 0.0, %v3679
      %v3681 = vpop.f32.mrf.mxu0
      %v3682 = vadd.f32 0.0, %v3681
      %3683 = vmatmul.bf16.gmra.mxu0 %v3601
      %v3684 = vpop.f32.mrf.mxu0
      %v3685 = vadd.f32 0.0, %v3684
      %v3686 = vpop.f32.mrf.mxu0
      %v3687 = vadd.f32 0.0, %v3686
      %3688 = vmatmul.bf16.gmra.mxu0 %v3604
      %v3689 = vpop.f32.mrf.mxu0
      %v3690 = vadd.f32 0.0, %v3689
      %v3691 = vpop.f32.mrf.mxu0
      %v3692 = vadd.f32 0.0, %v3691
      %3693 = vmatmul.bf16.gmra.mxu0 %v3607
      %v3694 = vpop.f32.mrf.mxu0
      %v3695 = vadd.f32 0.0, %v3694
      %v3696 = vpop.f32.mrf.mxu0
      %v3697 = vadd.f32 0.0, %v3696
      %3698 = vmatmul.bf16.gmra.mxu0 %v3610
      %v3699 = vpop.f32.mrf.mxu0
      %v3700 = vadd.f32 0.0, %v3699
      %v3701 = vpop.f32.mrf.mxu0
      %v3702 = vadd.f32 0.0, %v3701
      %3703 = vdwg.mxu0
      %v3704 = vadd.f32 %v3050, %v3625
      %v3705 = vadd.f32 %v3051, %v3627
      %v3706 = vadd.f32 %v3052, %v3630
      %v3707 = vadd.f32 %v3053, %v3632
      %v3708 = vadd.f32 %v3054, %v3635
      %v3709 = vadd.f32 %v3055, %v3637
      %v3710 = vadd.f32 %v3056, %v3640
      %v3711 = vadd.f32 %v3057, %v3642
      %v3712 = vadd.f32 %v3058, %v3645
      %v3713 = vadd.f32 %v3059, %v3647
      %v3714 = vadd.f32 %v3060, %v3650
      %v3715 = vadd.f32 %v3061, %v3652
      %v3716 = vadd.f32 %v3062, %v3655
      %v3717 = vadd.f32 %v3063, %v3657
      %v3718 = vadd.f32 %v3064, %v3660
      %v3719 = vadd.f32 %v3065, %v3662
      %v3720 = vadd.f32 %v3066, %v3665
      %v3721 = vadd.f32 %v3067, %v3667
      %v3722 = vadd.f32 %v3068, %v3670
      %v3723 = vadd.f32 %v3069, %v3672
      %v3724 = vadd.f32 %v3070, %v3675
      %v3725 = vadd.f32 %v3071, %v3677
      %v3726 = vadd.f32 %v3072, %v3680
      %v3727 = vadd.f32 %v3073, %v3682
      %v3728 = vadd.f32 %v3074, %v3685
      %v3729 = vadd.f32 %v3075, %v3687
      %v3730 = vadd.f32 %v3076, %v3690
      %v3731 = vadd.f32 %v3077, %v3692
      %v3732 = vadd.f32 %v3078, %v3695
      %v3733 = vadd.f32 %v3079, %v3697
      %v3734 = vadd.f32 %v3080, %v3700
      %v3735 = vadd.f32 %v3081, %v3702
      %v3736 = vld [vmem:[%s2795] sm:$0xe]
      %v3737 = vld [vmem:[%s2795 + $0xc] sm:$0xe]
      %v3738 = vld [vmem:[%s2795 + $0x18] sm:$0xe]
      %v3739 = vld [vmem:[%s2795 + $0x24] sm:$0xe]
      %v3740 = vld [vmem:[%s2795 + $0x30] sm:$0xe]
      %v3741 = vld [vmem:[%s2795 + $0x3c] sm:$0xe]
      %v3742 = vld [vmem:[%s2795 + $0x48] sm:$0xe]
      %v3743 = vld [vmem:[%s2795 + $0x54] sm:$0xe]
      %v3744 = vld [vmem:[%s2795 + $0x60] sm:$0xe]
      %v3745 = vld [vmem:[%s2795 + $0x6c] sm:$0xe]
      %v3746 = vld [vmem:[%s2795 + $0x78] sm:$0xe]
      %v3747 = vld [vmem:[%s2795 + $0x84] sm:$0xe]
      %v3748 = vld [vmem:[%s2795 + $0x90] sm:$0xe]
      %v3749 = vld [vmem:[%s2795 + $0x9c] sm:$0xe]
      %v3750 = vld [vmem:[%s2795 + $0xa8] sm:$0xe]
      %v3751 = vld [vmem:[%s2795 + $0xb4] sm:$0xe]
      %v3800 = vrot.slane %v3736, 5
      %v3801 = vrot.slane %v3800, 4
      %v3802 = vrot.slane %v3083, 5
      %v3803 = vsel %vm1121, %v3801, %v3802
      %v3804 = vrot.slane %v3802, 4
      %v3805 = vrot.slane %v3084, 5
      %v3806 = vsel %vm1121, %v3804, %v3805
      %v3807 = vrot.slane %v3737, 5
      %v3808 = vrot.slane %v3807, 4
      %v3809 = vrot.slane %v3086, 5
      %v3810 = vsel %vm1121, %v3808, %v3809
      %v3811 = vrot.slane %v3809, 4
      %v3812 = vrot.slane %v3087, 5
      %v3813 = vsel %vm1121, %v3811, %v3812
      %v3814 = vrot.slane %v3738, 5
      %v3815 = vrot.slane %v3814, 4
      %v3816 = vrot.slane %v3089, 5
      %v3817 = vsel %vm1121, %v3815, %v3816
      %v3818 = vrot.slane %v3816, 4
      %v3819 = vrot.slane %v3090, 5
      %v3820 = vsel %vm1121, %v3818, %v3819
      %v3821 = vrot.slane %v3739, 5
      %v3822 = vrot.slane %v3821, 4
      %v3823 = vrot.slane %v3092, 5
      %v3824 = vsel %vm1121, %v3822, %v3823
      %v3825 = vrot.slane %v3823, 4
      %v3826 = vrot.slane %v3093, 5
      %v3827 = vsel %vm1121, %v3825, %v3826
      %v3828 = vrot.slane %v3740, 5
      %v3829 = vrot.slane %v3828, 4
      %v3830 = vrot.slane %v3095, 5
      %v3831 = vsel %vm1121, %v3829, %v3830
      %v3832 = vrot.slane %v3830, 4
      %v3833 = vrot.slane %v3096, 5
      %v3834 = vsel %vm1121, %v3832, %v3833
      %v3835 = vrot.slane %v3741, 5
      %v3836 = vrot.slane %v3835, 4
      %v3837 = vrot.slane %v3098, 5
      %v3838 = vsel %vm1121, %v3836, %v3837
      %v3839 = vrot.slane %v3837, 4
      %v3840 = vrot.slane %v3099, 5
      %v3841 = vsel %vm1121, %v3839, %v3840
      %v3842 = vrot.slane %v3742, 5
      %v3843 = vrot.slane %v3842, 4
      %v3844 = vrot.slane %v3101, 5
      %v3845 = vsel %vm1121, %v3843, %v3844
      %v3846 = vrot.slane %v3844, 4
      %v3847 = vrot.slane %v3102, 5
      %v3848 = vsel %vm1121, %v3846, %v3847
      %v3849 = vrot.slane %v3743, 5
      %v3850 = vrot.slane %v3849, 4
      %v3851 = vrot.slane %v3104, 5
      %v3852 = vsel %vm1121, %v3850, %v3851
      %v3853 = vrot.slane %v3851, 4
      %v3854 = vrot.slane %v3105, 5
      %v3855 = vsel %vm1121, %v3853, %v3854
      %v3856 = vrot.slane %v3744, 5
      %v3857 = vrot.slane %v3856, 4
      %v3858 = vrot.slane %v3107, 5
      %v3859 = vsel %vm1121, %v3857, %v3858
      %v3860 = vrot.slane %v3858, 4
      %v3861 = vrot.slane %v3108, 5
      %v3862 = vsel %vm1121, %v3860, %v3861
      %v3863 = vrot.slane %v3745, 5
      %v3864 = vrot.slane %v3863, 4
      %v3865 = vrot.slane %v3110, 5
      %v3866 = vsel %vm1121, %v3864, %v3865
      %v3867 = vrot.slane %v3865, 4
      %v3868 = vrot.slane %v3111, 5
      %v3869 = vsel %vm1121, %v3867, %v3868
      %v3870 = vrot.slane %v3746, 5
      %v3871 = vrot.slane %v3870, 4
      %v3872 = vrot.slane %v3113, 5
      %v3873 = vsel %vm1121, %v3871, %v3872
      %v3874 = vrot.slane %v3872, 4
      %v3875 = vrot.slane %v3114, 5
      %v3876 = vsel %vm1121, %v3874, %v3875
      %v3877 = vrot.slane %v3747, 5
      %v3878 = vrot.slane %v3877, 4
      %v3879 = vrot.slane %v3116, 5
      %v3880 = vsel %vm1121, %v3878, %v3879
      %v3881 = vrot.slane %v3879, 4
      %v3882 = vrot.slane %v3117, 5
      %v3883 = vsel %vm1121, %v3881, %v3882
      %v3884 = vrot.slane %v3748, 5
      %v3885 = vrot.slane %v3884, 4
      %v3886 = vrot.slane %v3119, 5
      %v3887 = vsel %vm1121, %v3885, %v3886
      %v3888 = vrot.slane %v3886, 4
      %v3889 = vrot.slane %v3120, 5
      %v3890 = vsel %vm1121, %v3888, %v3889
      %v3891 = vrot.slane %v3749, 5
      %v3892 = vrot.slane %v3891, 4
      %v3893 = vrot.slane %v3122, 5
      %v3894 = vsel %vm1121, %v3892, %v3893
      %v3895 = vrot.slane %v3893, 4
      %v3896 = vrot.slane %v3123, 5
      %v3897 = vsel %vm1121, %v3895, %v3896
      %v3898 = vrot.slane %v3750, 5
      %v3899 = vrot.slane %v3898, 4
      %v3900 = vrot.slane %v3125, 5
      %v3901 = vsel %vm1121, %v3899, %v3900
      %v3902 = vrot.slane %v3900, 4
      %v3903 = vrot.slane %v3126, 5
      %v3904 = vsel %vm1121, %v3902, %v3903
      %v3905 = vrot.slane %v3751, 5
      %v3906 = vrot.slane %v3905, 4
      %v3907 = vrot.slane %v3128, 5
      %v3908 = vsel %vm1121, %v3906, %v3907
      %v3909 = vrot.slane %v3907, 4
      %v3910 = vrot.slane %v3129, 5
      %v3911 = vsel %vm1121, %v3909, %v3910
      %s3912 = scalar_lea.vmem %s210, 16
      %v3913 = vld [vmem:[%s3912] sm:$0x3]
      %v3914 = vunpack.c.l.b16 %v3803
      %v3915 = vunpack.c.l.b16 %v3806
      %v3916 = vunpack.c.l.b16 %v3810
      %v3917 = vunpack.c.l.b16 %v3813
      %v3918 = vunpack.c.l.b16 %v3817
      %v3919 = vunpack.c.l.b16 %v3820
      %v3920 = vunpack.c.l.b16 %v3824
      %v3921 = vunpack.c.l.b16 %v3827
      %v3922 = vunpack.c.l.b16 %v3831
      %v3923 = vunpack.c.l.b16 %v3834
      %v3924 = vunpack.c.l.b16 %v3838
      %v3925 = vunpack.c.l.b16 %v3841
      %v3926 = vunpack.c.l.b16 %v3845
      %v3927 = vunpack.c.l.b16 %v3848
      %v3928 = vunpack.c.l.b16 %v3852
      %v3929 = vunpack.c.l.b16 %v3855
      %v3930 = vunpack.c.l.b16 %v3859
      %v3931 = vunpack.c.l.b16 %v3862
      %v3932 = vunpack.c.l.b16 %v3866
      %v3933 = vunpack.c.l.b16 %v3869
      %v3934 = vunpack.c.l.b16 %v3873
      %v3935 = vunpack.c.l.b16 %v3876
      %v3936 = vunpack.c.l.b16 %v3880
      %v3937 = vunpack.c.l.b16 %v3883
      %v3938 = vunpack.c.l.b16 %v3887
      %v3939 = vunpack.c.l.b16 %v3890
      %v3940 = vunpack.c.l.b16 %v3894
      %v3941 = vunpack.c.l.b16 %v3897
      %v3942 = vunpack.c.l.b16 %v3901
      %v3943 = vunpack.c.l.b16 %v3904
      %v3944 = vunpack.c.l.b16 %v3908
      %v3945 = vunpack.c.l.b16 %v3911
      %v3946 = vpack.c.b16 %v3915, %v3914
      %v3947 = vpack.c.b16 %v3917, %v3916
      %v3948 = vpack.c.b16 %v3919, %v3918
      %v3949 = vpack.c.b16 %v3921, %v3920
      %v3950 = vpack.c.b16 %v3923, %v3922
      %v3951 = vpack.c.b16 %v3925, %v3924
      %v3952 = vpack.c.b16 %v3927, %v3926
      %v3953 = vpack.c.b16 %v3929, %v3928
      %v3954 = vpack.c.b16 %v3931, %v3930
      %v3955 = vpack.c.b16 %v3933, %v3932
      %v3956 = vpack.c.b16 %v3935, %v3934
      %v3957 = vpack.c.b16 %v3937, %v3936
      %v3958 = vpack.c.b16 %v3939, %v3938
      %v3959 = vpack.c.b16 %v3941, %v3940
      %v3960 = vpack.c.b16 %v3943, %v3942
      %v3961 = vpack.c.b16 %v3945, %v3944
      %v3963 = vsel %vm709, %v3946, 0
      %v3966 = vsel %vm709, %v3947, 0
      %v3969 = vsel %vm709, %v3948, 0
      %v3972 = vsel %vm709, %v3949, 0
      %v3975 = vsel %vm709, %v3950, 0
      %v3978 = vsel %vm709, %v3951, 0
      %v3981 = vsel %vm709, %v3952, 0
      %v3984 = vsel %vm709, %v3953, 0
      %v3987 = vsel %vm709, %v3954, 0
      %v3990 = vsel %vm709, %v3955, 0
      %v3993 = vsel %vm709, %v3956, 0
      %v3996 = vsel %vm709, %v3957, 0
      %v3999 = vsel %vm709, %v3958, 0
      %v4002 = vsel %vm709, %v3959, 0
      %v4005 = vsel %vm709, %v3960, 0
      %v4008 = vsel %vm709, %v3961, 0
      %v4011 = vsel %vm758, %v3913, 0
      %4013 = vmatpush.bf16.msra.mxu0 0
      %4014 = vmatpush.bf16.msra.mxu0 0
      %4015 = vmatpush.bf16.msra.mxu0 0
      %4016 = vmatpush.bf16.msra.mxu0 0
      %4017 = vmatpush.bf16.msra.mxu0 0
      %4018 = vmatpush.bf16.msra.mxu0 0
      %4019 = vmatpush.bf16.msra.mxu0 0
      %4020 = vmatpush.bf16.msra.mxu0 %v4011
      %4021 = vmatmul.bf16.gmra.mxu0 %v3963
      %v4022 = vpop.f32.mrf.mxu0
      %v4023 = vadd.f32 0.0, %v4022
      %v4024 = vpop.f32.mrf.mxu0
      %v4025 = vadd.f32 0.0, %v4024
      %4026 = vmatmul.bf16.gmra.mxu0 %v3966
      %v4027 = vpop.f32.mrf.mxu0
      %v4028 = vadd.f32 0.0, %v4027
      %v4029 = vpop.f32.mrf.mxu0
      %v4030 = vadd.f32 0.0, %v4029
      %4031 = vmatmul.bf16.gmra.mxu0 %v3969
      %v4032 = vpop.f32.mrf.mxu0
      %v4033 = vadd.f32 0.0, %v4032
      %v4034 = vpop.f32.mrf.mxu0
      %v4035 = vadd.f32 0.0, %v4034
      %4036 = vmatmul.bf16.gmra.mxu0 %v3972
      %v4037 = vpop.f32.mrf.mxu0
      %v4038 = vadd.f32 0.0, %v4037
      %v4039 = vpop.f32.mrf.mxu0
      %v4040 = vadd.f32 0.0, %v4039
      %4041 = vmatmul.bf16.gmra.mxu0 %v3975
      %v4042 = vpop.f32.mrf.mxu0
      %v4043 = vadd.f32 0.0, %v4042
      %v4044 = vpop.f32.mrf.mxu0
      %v4045 = vadd.f32 0.0, %v4044
      %4046 = vmatmul.bf16.gmra.mxu0 %v3978
      %v4047 = vpop.f32.mrf.mxu0
      %v4048 = vadd.f32 0.0, %v4047
      %v4049 = vpop.f32.mrf.mxu0
      %v4050 = vadd.f32 0.0, %v4049
      %4051 = vmatmul.bf16.gmra.mxu0 %v3981
      %v4052 = vpop.f32.mrf.mxu0
      %v4053 = vadd.f32 0.0, %v4052
      %v4054 = vpop.f32.mrf.mxu0
      %v4055 = vadd.f32 0.0, %v4054
      %4056 = vmatmul.bf16.gmra.mxu0 %v3984
      %v4057 = vpop.f32.mrf.mxu0
      %v4058 = vadd.f32 0.0, %v4057
      %v4059 = vpop.f32.mrf.mxu0
      %v4060 = vadd.f32 0.0, %v4059
      %4061 = vmatmul.bf16.gmra.mxu0 %v3987
      %v4062 = vpop.f32.mrf.mxu0
      %v4063 = vadd.f32 0.0, %v4062
      %v4064 = vpop.f32.mrf.mxu0
      %v4065 = vadd.f32 0.0, %v4064
      %4066 = vmatmul.bf16.gmra.mxu0 %v3990
      %v4067 = vpop.f32.mrf.mxu0
      %v4068 = vadd.f32 0.0, %v4067
      %v4069 = vpop.f32.mrf.mxu0
      %v4070 = vadd.f32 0.0, %v4069
      %4071 = vmatmul.bf16.gmra.mxu0 %v3993
      %v4072 = vpop.f32.mrf.mxu0
      %v4073 = vadd.f32 0.0, %v4072
      %v4074 = vpop.f32.mrf.mxu0
      %v4075 = vadd.f32 0.0, %v4074
      %4076 = vmatmul.bf16.gmra.mxu0 %v3996
      %v4077 = vpop.f32.mrf.mxu0
      %v4078 = vadd.f32 0.0, %v4077
      %v4079 = vpop.f32.mrf.mxu0
      %v4080 = vadd.f32 0.0, %v4079
      %4081 = vmatmul.bf16.gmra.mxu0 %v3999
      %v4082 = vpop.f32.mrf.mxu0
      %v4083 = vadd.f32 0.0, %v4082
      %v4084 = vpop.f32.mrf.mxu0
      %v4085 = vadd.f32 0.0, %v4084
      %4086 = vmatmul.bf16.gmra.mxu0 %v4002
      %v4087 = vpop.f32.mrf.mxu0
      %v4088 = vadd.f32 0.0, %v4087
      %v4089 = vpop.f32.mrf.mxu0
      %v4090 = vadd.f32 0.0, %v4089
      %4091 = vmatmul.bf16.gmra.mxu0 %v4005
      %v4092 = vpop.f32.mrf.mxu0
      %v4093 = vadd.f32 0.0, %v4092
      %v4094 = vpop.f32.mrf.mxu0
      %v4095 = vadd.f32 0.0, %v4094
      %4096 = vmatmul.bf16.gmra.mxu0 %v4008
      %v4097 = vpop.f32.mrf.mxu0
      %v4098 = vadd.f32 0.0, %v4097
      %v4099 = vpop.f32.mrf.mxu0
      %v4100 = vadd.f32 0.0, %v4099
      %4101 = vdwg.mxu0
      %v4102 = vadd.f32 %v3704, %v4023
      %v4103 = vadd.f32 %v3705, %v4025
      %v4104 = vadd.f32 %v3706, %v4028
      %v4105 = vadd.f32 %v3707, %v4030
      %v4106 = vadd.f32 %v3708, %v4033
      %v4107 = vadd.f32 %v3709, %v4035
      %v4108 = vadd.f32 %v3710, %v4038
      %v4109 = vadd.f32 %v3711, %v4040
      %v4110 = vadd.f32 %v3712, %v4043
      %v4111 = vadd.f32 %v3713, %v4045
      %v4112 = vadd.f32 %v3714, %v4048
      %v4113 = vadd.f32 %v3715, %v4050
      %v4114 = vadd.f32 %v3716, %v4053
      %v4115 = vadd.f32 %v3717, %v4055
      %v4116 = vadd.f32 %v3718, %v4058
      %v4117 = vadd.f32 %v3719, %v4060
      %v4118 = vadd.f32 %v3720, %v4063
      %v4119 = vadd.f32 %v3721, %v4065
      %v4120 = vadd.f32 %v3722, %v4068
      %v4121 = vadd.f32 %v3723, %v4070
      %v4122 = vadd.f32 %v3724, %v4073
      %v4123 = vadd.f32 %v3725, %v4075
      %v4124 = vadd.f32 %v3726, %v4078
      %v4125 = vadd.f32 %v3727, %v4080
      %v4126 = vadd.f32 %v3728, %v4083
      %v4127 = vadd.f32 %v3729, %v4085
      %v4128 = vadd.f32 %v3730, %v4088
      %v4129 = vadd.f32 %v3731, %v4090
      %v4130 = vadd.f32 %v3732, %v4093
      %v4131 = vadd.f32 %v3733, %v4095
      %v4132 = vadd.f32 %v3734, %v4098
      %v4133 = vadd.f32 %v3735, %v4100
      %v4134 = vld [vmem:[%s213] sm:$0x1]
      %v4136 = vperm.slane %v4134, 0
      %v4138 = vadd.f32 %v4102, %v4136
      %v4139 = vadd.f32 %v4103, %v4136
      %v4140 = vadd.f32 %v4104, %v4136
      %v4141 = vadd.f32 %v4105, %v4136
      %v4142 = vadd.f32 %v4106, %v4136
      %v4143 = vadd.f32 %v4107, %v4136
      %v4144 = vadd.f32 %v4108, %v4136
      %v4145 = vadd.f32 %v4109, %v4136
      %v4146 = vadd.f32 %v4110, %v4136
      %v4147 = vadd.f32 %v4111, %v4136
      %v4148 = vadd.f32 %v4112, %v4136
      %v4149 = vadd.f32 %v4113, %v4136
      %v4150 = vadd.f32 %v4114, %v4136
      %v4151 = vadd.f32 %v4115, %v4136
      %v4152 = vadd.f32 %v4116, %v4136
      %v4153 = vadd.f32 %v4117, %v4136
      %v4154 = vadd.f32 %v4118, %v4136
      %v4155 = vadd.f32 %v4119, %v4136
      %v4156 = vadd.f32 %v4120, %v4136
      %v4157 = vadd.f32 %v4121, %v4136
      %v4158 = vadd.f32 %v4122, %v4136
      %v4159 = vadd.f32 %v4123, %v4136
      %v4160 = vadd.f32 %v4124, %v4136
      %v4161 = vadd.f32 %v4125, %v4136
      %v4162 = vadd.f32 %v4126, %v4136
      %v4163 = vadd.f32 %v4127, %v4136
      %v4164 = vadd.f32 %v4128, %v4136
      %v4165 = vadd.f32 %v4129, %v4136
      %v4166 = vadd.f32 %v4130, %v4136
      %v4167 = vadd.f32 %v4131, %v4136
      %v4168 = vadd.f32 %v4132, %v4136
      %v4169 = vadd.f32 %v4133, %v4136
      %v4170 = vmax.f32 %v4138, 0.0
      %v4171 = vmax.f32 %v4139, 0.0
      %v4172 = vmax.f32 %v4140, 0.0
      %v4173 = vmax.f32 %v4141, 0.0
      %v4174 = vmax.f32 %v4142, 0.0
      %v4175 = vmax.f32 %v4143, 0.0
      %v4176 = vmax.f32 %v4144, 0.0
      %v4177 = vmax.f32 %v4145, 0.0
      %v4178 = vmax.f32 %v4146, 0.0
      %v4179 = vmax.f32 %v4147, 0.0
      %v4180 = vmax.f32 %v4148, 0.0
      %v4181 = vmax.f32 %v4149, 0.0
      %v4182 = vmax.f32 %v4150, 0.0
      %v4183 = vmax.f32 %v4151, 0.0
      %v4184 = vmax.f32 %v4152, 0.0
      %v4185 = vmax.f32 %v4153, 0.0
      %v4186 = vmax.f32 %v4154, 0.0
      %v4187 = vmax.f32 %v4155, 0.0
      %v4188 = vmax.f32 %v4156, 0.0
      %v4189 = vmax.f32 %v4157, 0.0
      %v4190 = vmax.f32 %v4158, 0.0
      %v4191 = vmax.f32 %v4159, 0.0
      %v4192 = vmax.f32 %v4160, 0.0
      %v4193 = vmax.f32 %v4161, 0.0
      %v4194 = vmax.f32 %v4162, 0.0
      %v4195 = vmax.f32 %v4163, 0.0
      %v4196 = vmax.f32 %v4164, 0.0
      %v4197 = vmax.f32 %v4165, 0.0
      %v4198 = vmax.f32 %v4166, 0.0
      %v4199 = vmax.f32 %v4167, 0.0
      %v4200 = vmax.f32 %v4168, 0.0
      %v4201 = vmax.f32 %v4169, 0.0
      %4202 = vst [vmem:[%s221] sm:$0xff] %v4170
      %4203 = vst [vmem:[%s221 + $0x8] sm:$0xff] %v4171
      %4204 = vst [vmem:[%s221 + $0x10] sm:$0xff] %v4172
      %4205 = vst [vmem:[%s221 + $0x18] sm:$0xff] %v4173
      %4206 = vst [vmem:[%s221 + $0x20] sm:$0xff] %v4174
      %4207 = vst [vmem:[%s221 + $0x28] sm:$0xff] %v4175
      %4208 = vst [vmem:[%s221 + $0x30] sm:$0xff] %v4176
      %4209 = vst [vmem:[%s221 + $0x38] sm:$0xff] %v4177
      %4210 = vst [vmem:[%s221 + $0x40] sm:$0xff] %v4178
      %4211 = vst [vmem:[%s221 + $0x48] sm:$0xff] %v4179
      %4212 = vst [vmem:[%s221 + $0x50] sm:$0xff] %v4180
      %4213 = vst [vmem:[%s221 + $0x58] sm:$0xff] %v4181
      %4214 = vst [vmem:[%s221 + $0x60] sm:$0xff] %v4182
      %4215 = vst [vmem:[%s221 + $0x68] sm:$0xff] %v4183
      %4216 = vst [vmem:[%s221 + $0x70] sm:$0xff] %v4184
      %4217 = vst [vmem:[%s221 + $0x78] sm:$0xff] %v4185
      %4218 = vst [vmem:[%s221 + $0x80] sm:$0xff] %v4186
      %4219 = vst [vmem:[%s221 + $0x88] sm:$0xff] %v4187
      %4220 = vst [vmem:[%s221 + $0x90] sm:$0xff] %v4188
      %4221 = vst [vmem:[%s221 + $0x98] sm:$0xff] %v4189
      %4222 = vst [vmem:[%s221 + $0xa0] sm:$0xff] %v4190
      %4223 = vst [vmem:[%s221 + $0xa8] sm:$0xff] %v4191
      %4224 = vst [vmem:[%s221 + $0xb0] sm:$0xff] %v4192
      %4225 = vst [vmem:[%s221 + $0xb8] sm:$0xff] %v4193
      %4226 = vst [vmem:[%s221 + $0xc0] sm:$0xff] %v4194
      %4227 = vst [vmem:[%s221 + $0xc8] sm:$0xff] %v4195
      %4228 = vst [vmem:[%s221 + $0xd0] sm:$0xff] %v4196
      %4229 = vst [vmem:[%s221 + $0xd8] sm:$0xff] %v4197
      %4230 = vst [vmem:[%s221 + $0xe0] sm:$0xff] %v4198
      %4231 = vst [vmem:[%s221 + $0xe8] sm:$0xff] %v4199
      %4232 = vst [vmem:[%s221 + $0xf0] sm:$0xff] %v4200
      %4233 = vst [vmem:[%s221 + $0xf8] sm:$0xff] %v4201
      %p4234 = scmp.lt.s32.totalorder %s18, 1
      %s4235 = scalar_select %p4234, %s18, 1
      %p4236 = scmp.lt.s32.totalorder %s19, 0
      %s4237 = scalar_select %p4236, %s19, 0
      %s4238 = smul.addr %s4235, 32
      %s4239 = sadd.s32 %s4237, %s4238
      %s4240 = smul.addr %s4239, 8
      %s4241 = scalar_lea.vmem %s3, %s4240
      // Predicated region
      $region33: #{basic_conv2d.1} parent=31 // pred_check
        %p4242 = pneg %p124
      $region34: #{basic_conv2d.1} parent=31 // pred_check_branch
        %4244 = sbr.rel (%p4242) target = $region36
      $region35: #{basic_conv2d.1} parent=31 // pred_region
        _
      $region36: #{basic_conv2d.1} parent=31 // pred_fallthru
        _
    $region32: #{basic_conv2d.1} parent=5 // pred_fallthru
      _
    %p4245 = scmp.le.s32.totalorder 2, %s9
    // Predicated region
    $region37: #{basic_conv2d.1} parent=5 // pred_check
      %p4246 = pneg %p4245
    $region38: #{basic_conv2d.1} parent=5 // pred_check_branch
      %4248 = sbr.rel (%p4246) target = $region40
    $region39: #{basic_conv2d.1} parent=5 // pred_region
      %s4249 = ssub.s32 %s9, 2
      // Predicated region
      $region41: #{basic_conv2d.1} parent=39 // pred_check
        %p4250 = pneg %p130
      $region42: #{basic_conv2d.1} parent=39 // pred_check_branch
        %4252 = sbr.rel (%p4250) target = $region44
      $region43: #{basic_conv2d.1} parent=39 // pred_region
        %p4253 = scmp.lt.s32.totalorder %s20, 1
        %s4254 = scalar_select %p4253, %s20, 1
        %p4255 = scmp.lt.s32.totalorder %s21, 0
        %s4256 = scalar_select %p4255, %s21, 0
        %s4257 = smul.addr %s4254, 32
        %s4258 = sadd.s32 %s4256, %s4257
        %s4259 = smul.addr %s4258, 8
        %s4260 = scalar_lea.vmem %s3, %s4259
      $region44: #{basic_conv2d.1} parent=39 // pred_fallthru
        _
    $region40: #{basic_conv2d.1} parent=5 // pred_fallthru
      _
  $region6: #{basic_conv2d.1} parent=0 // loop_footer
    %s13 = sadd.s32 1, %s9
  $region7: #{basic_conv2d.1} parent=0 // loop_footer_branch
    %8 = sbr.rel target = $region3
  $region8: #{basic_conv2d.1} parent=0 // loop_exit
    _

</llo_original>
